<compile_context>
chip_gen: v7x
topology: tpu7x:2x2x1
jax: 0.10.0
libtpu: 0.0.40
codegen_flags: <defaults>
</compile_context>

<pallas_src>
import math

import numpy as np
import jax
import jax.numpy as jnp
from jax.experimental import pallas as pl
from jax.experimental.pallas import tpu as pltpu


# ----------------------------------------------------------------------------
# GELU (tanh approximation).
# TODO(synk): the reference's custom GELU() and initialize_weights() bodies are
# not given; tanh-approx GELU and synthetic deterministic init are used here.
# ----------------------------------------------------------------------------
def _gelu(x):
    c = math.sqrt(2.0 / math.pi)
    return 0.5 * x * (1.0 + jnp.tanh(c * (x + 0.044715 * x * x * x)))


# ----------------------------------------------------------------------------
# Static network configuration (kept OUT of the jitted params pytree)
# ----------------------------------------------------------------------------
class Params:
    channels = [4, 8, 16, 32]
    kernel_size = [3, 3, 3]
    stride = [2, 2, 2]
    hidden_dim = 32          # 32 channels * 1 * 1 after three stride-2 convs on 16x16
    latent_dim = 8


def _conv_out(size, k, s):
    return (size - k) // s + 1


# ----------------------------------------------------------------------------
# Host-side preprocessing: conv weight -> dense conv matrix, channel selectors
# ----------------------------------------------------------------------------
def conv_as_matrix(w, H, W, stride):
    """(Cout,Cin,k,k) conv weight -> (H*W*Cin, Ho*Wo*Cout) dense matrix acting
    on channel-last, row-flattened NHWC inputs."""
    w = np.asarray(w)
    cout, cin, k, _ = w.shape
    ho = _conv_out(H, k, stride)
    wo = _conv_out(W, k, stride)
    M = np.zeros((H * W * cin, ho * wo * cout), np.float32)
    for oh in range(ho):
        for ow in range(wo):
            col = (oh * wo + ow) * cout
            for i in range(k):
                for j in range(k):
                    h, w_ = oh * stride + i, ow * stride + j
                    row = (h * W + w_) * cin
                    M[row:row + cin, col:col + cout] = w[:, :, i, j].T
    return M


def channel_selector(positions, cout):
    """(positions*cout, cout) matrix: (y @ S)[n, c] = sum_p y[n, p*cout + c]."""
    return np.tile(np.eye(cout, dtype=np.float32), (positions, 1))


# ----------------------------------------------------------------------------
# Fused forward kernel builder
# ----------------------------------------------------------------------------
def build_forward(p, n, h_in, w_in):
    # Per-layer static geometry (never enters the jitted pytree).
    rows = []
    hh, ww = h_in, w_in
    for li in range(3):
        k, s = p.kernel_size[li], p.stride[li]
        ho, wo = _conv_out(hh, k, s), _conv_out(ww, k, s)
        rows.append(n * ho * wo)
        hh, ww = ho, wo
    hidden = p.channels[3] * hh * ww
    assert hidden == p.hidden_dim, "hidden_dim inconsistent with conv geometry"
    lat2 = 2 * p.latent_dim

    def kernel(x_ref,
               m1_ref, s1_ref, t1_ref, g1_ref, b1_ref,
               m2_ref, s2_ref, t2_ref, g2_ref, b2_ref,
               m3_ref, s3_ref, t3_ref, g3_ref, b3_ref,
               wh_ref, bh_ref, out_ref):

        def conv_bn_gelu(x, m_ref, s_ref, t_ref, g_ref, b_ref, n_rows):
            # Conv as one dense MXU matmul.  Conv bias is omitted: it cancels
            # exactly in training-mode (batch-stat) BatchNorm.
            y = jnp.dot(x, m_ref[...], preferred_element_type=jnp.float32)
            sel = s_ref[...]                          # (pos*cout, cout) selector
            inv = 1.0 / n_rows
            # One statistics pass: per-channel mean and mean-of-squares via a
            # tiny selection matmul (no layout-changing reshape needed).
            mean = jnp.sum(jnp.dot(y, sel, preferred_element_type=jnp.float32),
                           axis=0, keepdims=True) * inv          # (1, cout)
            msq = jnp.sum(jnp.dot(y * y, sel, preferred_element_type=jnp.float32),
                          axis=0, keepdims=True) * inv           # (1, cout)
            var = jnp.maximum(msq - mean * mean, 0.0)             # biased var
            a = g_ref[...] * jax.lax.rsqrt(var + 1e-5)
            b = b_ref[...] - mean * a
            # Broadcast the folded per-channel affine back to (1, pos*cout).
            a_full = jnp.dot(a, t_ref[...], preferred_element_type=jnp.float32)
            b_full = jnp.dot(b, t_ref[...], preferred_element_type=jnp.float32)
            return _gelu(y * a_full + b_full)

        h = x_ref[...]
        h = conv_bn_gelu(h, m1_ref, s1_ref, t1_ref, g1_ref, b1_ref, rows[0])
        h = conv_bn_gelu(h, m2_ref, s2_ref, t2_ref, g2_ref, b2_ref, rows[1])
        h = conv_bn_gelu(h, m3_ref, s3_ref, t3_ref, g3_ref, b3_ref, rows[2])
        # Fused mu/logvar heads.  The reference module applies GELU to both
        # head outputs (mu = GELU(fc_mu(h1)), logvar = GELU(fc_logvar(h1))).
        out_ref[...] = _gelu(
            jnp.dot(h, wh_ref[...], preferred_element_type=jnp.float32)
            + bh_ref[...])

    vmem = pltpu.MemorySpace.VMEM
    return pl.pallas_call(
        kernel,
        out_shape=jax.ShapeDtypeStruct((n, lat2), jnp.float32),
        in_specs=[pl.BlockSpec(memory_space=vmem)] * 18,
        out_specs=pl.BlockSpec(memory_space=vmem),
    )


def make_inference_forward(p, n, h_in, w_in):
    fused = build_forward(p, n, h_in, w_in)
    cin0 = p.channels[0]
    lat = p.latent_dim

    def forward(x, kp):
        # NCHW -> channel-last row-flattened (N, H*W*Cin); the only relayout,
        # done once at the XLA level.
        x_flat = jnp.transpose(x, (0, 2, 3, 1)).reshape(n, h_in * w_in * cin0)
        out = fused(x_flat,
                    kp["m1"], kp["s1"], kp["t1"], kp["g1"], kp["b1"],
                    kp["m2"], kp["s2"], kp["t2"], kp["g2"], kp["b2"],
                    kp["m3"], kp["s3"], kp["t3"], kp["g3"], kp["b3"],
                    kp["wh"], kp["bh"])
        return out[:, :lat], out[:, lat:]

    return forward


# ----------------------------------------------------------------------------
# Deterministic synthetic parameters (no checkpoint loading)
# ----------------------------------------------------------------------------
def init_params(key, p):
    keys = jax.random.split(key, 14)
    raw = {}
    ki = 0
    for li in range(1, 4):
        cin, cout = p.channels[li - 1], p.channels[li]
        k = p.kernel_size[li - 1]
        fan_in = cin * k * k
        raw[f"conv{li}_w"] = (jax.random.normal(keys[ki], (cout, cin, k, k), jnp.float32)
                              / math.sqrt(fan_in)); ki += 1
        raw[f"bn{li}_g"] = 1.0 + 0.1 * jax.random.normal(keys[ki], (cout,), jnp.float32); ki += 1
        raw[f"bn{li}_b"] = 0.1 * jax.random.normal(keys[ki], (cout,), jnp.float32); ki += 1
        # Conv2d bias intentionally omitted: it cancels exactly in (y - mean)
        # under training-mode BatchNorm.
        # TODO(synk): eval-mode BN (running stats) would need the conv bias
        # reinstated and running_mean/var passed in instead of batch stats.
    raw["fc_mu_w"] = (jax.random.normal(keys[ki], (p.latent_dim, p.hidden_dim), jnp.float32)
                      / math.sqrt(p.hidden_dim)); ki += 1
    raw["fc_mu_b"] = 0.01 * jax.random.normal(keys[ki], (p.latent_dim,), jnp.float32); ki += 1
    raw["fc_logvar_w"] = (jax.random.normal(keys[ki], (p.latent_dim, p.hidden_dim), jnp.float32)
                          / math.sqrt(p.hidden_dim)); ki += 1
    raw["fc_logvar_b"] = 0.01 * jax.random.normal(keys[ki], (p.latent_dim,), jnp.float32); ki += 1
    return raw


def prepare_kernel_params(p, raw, h_in, w_in):
    """Host-side: build dense conv matrices, channel selectors, fused head."""
    kp = {}
    hh, ww = h_in, w_in
    for li in range(1, 4):
        k, s = p.kernel_size[li - 1], p.stride[li - 1]
        cout = p.channels[li]
        ho, wo = _conv_out(hh, k, s), _conv_out(ww, k, s)
        M = conv_as_matrix(raw[f"conv{li}_w"], hh, ww, s)
        S = channel_selector(ho * wo, cout)
        kp[f"m{li}"] = jnp.asarray(M)
        kp[f"s{li}"] = jnp.asarray(S)
        kp[f"t{li}"] = jnp.asarray(np.ascontiguousarray(S.T))
        kp[f"g{li}"] = raw[f"bn{li}_g"].reshape(1, cout)
        kp[f"b{li}"] = raw[f"bn{li}_b"].reshape(1, cout)
        hh, ww = ho, wo
    kp["wh"] = jnp.concatenate([raw["fc_mu_w"].T, raw["fc_logvar_w"].T], axis=1)
    kp["bh"] = jnp.concatenate([raw["fc_mu_b"], raw["fc_logvar_b"]]).reshape(1, 2 * p.latent_dim)
    return kp


# ----------------------------------------------------------------------------
# Pure-JAX reference (same semantics) for a sanity cross-check
# ----------------------------------------------------------------------------
def reference_forward(x, raw, p):
    h = jnp.transpose(x, (0, 2, 3, 1))  # NHWC
    for li in range(1, 4):
        w = raw[f"conv{li}_w"]                      # (cout, cin, k, k)
        s = p.stride[li - 1]
        h = jax.lax.conv_general_dilated(
            h, jnp.transpose(w, (2, 3, 1, 0)),      # HWIO
            window_strides=(s, s), padding="VALID",
            dimension_numbers=("NHWC", "HWIO", "NHWC"),
            precision=jax.lax.Precision.HIGHEST)
        mean = jnp.mean(h, axis=(0, 1, 2))
        var = jnp.mean((h - mean) ** 2, axis=(0, 1, 2))
        h = raw[f"bn{li}_g"] * (h - mean) * jax.lax.rsqrt(var + 1e-5) + raw[f"bn{li}_b"]
        h = _gelu(h)
    h1 = h.reshape(x.shape[0], -1)                  # 1x1 spatial -> same as NCHW flatten
    mu = _gelu(h1 @ raw["fc_mu_w"].T + raw["fc_mu_b"])
    logvar = _gelu(h1 @ raw["fc_logvar_w"].T + raw["fc_logvar_b"])
    return mu, logvar


if __name__ == "__main__":
    key = jax.random.PRNGKey(0)
    pkey, xkey = jax.random.split(key)
    p = Params()
    raw = init_params(pkey, p)

    N, H, W = 2, 16, 16
    kp = prepare_kernel_params(p, raw, H, W)
    x = jax.random.normal(xkey, (N, p.channels[0], H, W), jnp.float32)

    forward = make_inference_forward(p, N, H, W)
    mu, logvar = jax.jit(forward)(x, kp)
    jax.block_until_ready((mu, logvar))

    assert mu.shape == (N, p.latent_dim) and logvar.shape == (N, p.latent_dim)
    assert mu.dtype == jnp.float32 and logvar.dtype == jnp.float32
    assert bool(jnp.all(jnp.isfinite(mu))) and bool(jnp.all(jnp.isfinite(logvar)))

    # Loose-tolerance structural sanity check against a pure-JAX reference
    # (loose because MXU matmul precision / reduction order may differ).
    mu_ref, lv_ref = jax.jit(lambda x: reference_forward(x, raw, p))(x)
    np.testing.assert_allclose(np.asarray(mu), np.asarray(mu_ref), rtol=0.0, atol=0.1)
    np.testing.assert_allclose(np.asarray(logvar), np.asarray(lv_ref), rtol=0.0, atol=0.1)

    print("KERNEL_OK")
</pallas_src>

<mosaic_0001>
module attributes {stable_mosaic.version = 11 : i64} {
  func.func @kernel(%arg0: memref<2x1024xf32, #tpu.memory_space<vmem>>, %arg1: memref<1024x392xf32, #tpu.memory_space<vmem>>, %arg2: memref<392x8xf32, #tpu.memory_space<vmem>>, %arg3: memref<8x392xf32, #tpu.memory_space<vmem>>, %arg4: memref<1x8xf32, #tpu.memory_space<vmem>>, %arg5: memref<1x8xf32, #tpu.memory_space<vmem>>, %arg6: memref<392x144xf32, #tpu.memory_space<vmem>>, %arg7: memref<144x16xf32, #tpu.memory_space<vmem>>, %arg8: memref<16x144xf32, #tpu.memory_space<vmem>>, %arg9: memref<1x16xf32, #tpu.memory_space<vmem>>, %arg10: memref<1x16xf32, #tpu.memory_space<vmem>>, %arg11: memref<144x32xf32, #tpu.memory_space<vmem>>, %arg12: memref<32x32xf32, #tpu.memory_space<vmem>>, %arg13: memref<32x32xf32, #tpu.memory_space<vmem>>, %arg14: memref<1x32xf32, #tpu.memory_space<vmem>>, %arg15: memref<1x32xf32, #tpu.memory_space<vmem>>, %arg16: memref<32x16xf32, #tpu.memory_space<vmem>>, %arg17: memref<1x16xf32, #tpu.memory_space<vmem>>, %arg18: memref<2x16xf32, #tpu.memory_space<vmem>>) attributes {dimension_semantics = [], scalar_prefetch = 0 : i64, scratch_operands = 0 : i64, tpu.core_type = #tpu.core_type<tc>} {
    %c0 = arith.constant 0 : index
    %c0_0 = arith.constant 0 : index
    %0 = vector.load %arg0[%c0, %c0_0] : memref<2x1024xf32, #tpu.memory_space<vmem>>, vector<2x1024xf32>
    %c0_1 = arith.constant 0 : index
    %c0_2 = arith.constant 0 : index
    %1 = vector.load %arg1[%c0_1, %c0_2] : memref<1024x392xf32, #tpu.memory_space<vmem>>, vector<1024x392xf32>
    %cst = arith.constant dense<0.000000e+00> : vector<2x392xf32>
    %2 = tpu.matmul %0, %1, %cst {dimension_numbers = #tpu.dot_dimension_numbers<[1], [0], [0], [1], [0, 0, 1, 1], [], []>} : vector<2x1024xf32>, vector<1024x392xf32>, vector<2x392xf32> -> vector<2x392xf32>
    %c0_3 = arith.constant 0 : index
    %c0_4 = arith.constant 0 : index
    %3 = vector.load %arg2[%c0_3, %c0_4] : memref<392x8xf32, #tpu.memory_space<vmem>>, vector<392x8xf32>
    %cst_5 = arith.constant dense<0.000000e+00> : vector<2x8xf32>
    %4 = tpu.matmul %2, %3, %cst_5 {dimension_numbers = #tpu.dot_dimension_numbers<[1], [0], [0], [1], [0, 0, 1, 1], [], []>} : vector<2x392xf32>, vector<392x8xf32>, vector<2x8xf32> -> vector<2x8xf32>
    %cst_6 = arith.constant dense<0.000000e+00> : vector<8xf32>
    %5 = vector.multi_reduction <add>, %4, %cst_6 [0] : vector<2x8xf32> to vector<8xf32>
    %6 = vector.shape_cast %5 : vector<8xf32> to vector<1x8xf32>
    %cst_7 = arith.constant 0.0102040814 : f32
    %7 = vector.broadcast %cst_7 : f32 to vector<1x8xf32>
    %8 = arith.mulf %6, %7 : vector<1x8xf32>
    %9 = arith.mulf %2, %2 : vector<2x392xf32>
    %cst_8 = arith.constant dense<0.000000e+00> : vector<2x8xf32>
    %10 = tpu.matmul %9, %3, %cst_8 {dimension_numbers = #tpu.dot_dimension_numbers<[1], [0], [0], [1], [0, 0, 1, 1], [], []>} : vector<2x392xf32>, vector<392x8xf32>, vector<2x8xf32> -> vector<2x8xf32>
    %cst_9 = arith.constant dense<0.000000e+00> : vector<8xf32>
    %11 = vector.multi_reduction <add>, %10, %cst_9 [0] : vector<2x8xf32> to vector<8xf32>
    %12 = vector.shape_cast %11 : vector<8xf32> to vector<1x8xf32>
    %cst_10 = arith.constant 0.0102040814 : f32
    %13 = vector.broadcast %cst_10 : f32 to vector<1x8xf32>
    %14 = arith.mulf %12, %13 : vector<1x8xf32>
    %15 = arith.mulf %8, %8 : vector<1x8xf32>
    %16 = arith.subf %14, %15 : vector<1x8xf32>
    %cst_11 = arith.constant 0.000000e+00 : f32
    %17 = vector.broadcast %cst_11 : f32 to vector<1x8xf32>
    %18 = arith.maximumf %16, %17 : vector<1x8xf32>
    %c0_12 = arith.constant 0 : index
    %c0_13 = arith.constant 0 : index
    %19 = vector.load %arg4[%c0_12, %c0_13] : memref<1x8xf32, #tpu.memory_space<vmem>>, vector<1x8xf32>
    %cst_14 = arith.constant 9.99999974E-6 : f32
    %20 = vector.broadcast %cst_14 : f32 to vector<1x8xf32>
    %21 = arith.addf %18, %20 : vector<1x8xf32>
    %22 = math.rsqrt %21 : vector<1x8xf32>
    %23 = arith.mulf %19, %22 : vector<1x8xf32>
    %c0_15 = arith.constant 0 : index
    %c0_16 = arith.constant 0 : index
    %24 = vector.load %arg5[%c0_15, %c0_16] : memref<1x8xf32, #tpu.memory_space<vmem>>, vector<1x8xf32>
    %25 = arith.mulf %8, %23 : vector<1x8xf32>
    %26 = arith.subf %24, %25 : vector<1x8xf32>
    %c0_17 = arith.constant 0 : index
    %c0_18 = arith.constant 0 : index
    %27 = vector.load %arg3[%c0_17, %c0_18] : memref<8x392xf32, #tpu.memory_space<vmem>>, vector<8x392xf32>
    %cst_19 = arith.constant dense<0.000000e+00> : vector<1x392xf32>
    %28 = tpu.matmul %23, %27, %cst_19 {dimension_numbers = #tpu.dot_dimension_numbers<[1], [0], [0], [1], [0, 0, 1, 1], [], []>} : vector<1x8xf32>, vector<8x392xf32>, vector<1x392xf32> -> vector<1x392xf32>
    %c0_20 = arith.constant 0 : index
    %c0_21 = arith.constant 0 : index
    %29 = vector.load %arg3[%c0_20, %c0_21] : memref<8x392xf32, #tpu.memory_space<vmem>>, vector<8x392xf32>
    %cst_22 = arith.constant dense<0.000000e+00> : vector<1x392xf32>
    %30 = tpu.matmul %26, %29, %cst_22 {dimension_numbers = #tpu.dot_dimension_numbers<[1], [0], [0], [1], [0, 0, 1, 1], [], []>} : vector<1x8xf32>, vector<8x392xf32>, vector<1x392xf32> -> vector<1x392xf32>
    %31 = vector.broadcast %28 : vector<1x392xf32> to vector<2x392xf32>
    %32 = arith.mulf %2, %31 : vector<2x392xf32>
    %33 = vector.broadcast %30 : vector<1x392xf32> to vector<2x392xf32>
    %34 = arith.addf %32, %33 : vector<2x392xf32>
    %cst_23 = arith.constant 5.000000e-01 : f32
    %35 = vector.broadcast %cst_23 : f32 to vector<2x392xf32>
    %36 = arith.mulf %35, %34 : vector<2x392xf32>
    %cst_24 = arith.constant 4.471500e-02 : f32
    %37 = vector.broadcast %cst_24 : f32 to vector<2x392xf32>
    %38 = arith.mulf %37, %34 : vector<2x392xf32>
    %39 = arith.mulf %38, %34 : vector<2x392xf32>
    %40 = arith.mulf %39, %34 : vector<2x392xf32>
    %41 = arith.addf %34, %40 : vector<2x392xf32>
    %cst_25 = arith.constant 0.797884583 : f32
    %42 = vector.broadcast %cst_25 : f32 to vector<2x392xf32>
    %43 = arith.mulf %42, %41 : vector<2x392xf32>
    %44 = math.tanh %43 : vector<2x392xf32>
    %cst_26 = arith.constant 1.000000e+00 : f32
    %45 = vector.broadcast %cst_26 : f32 to vector<2x392xf32>
    %46 = arith.addf %45, %44 : vector<2x392xf32>
    %47 = arith.mulf %36, %46 : vector<2x392xf32>
    %c0_27 = arith.constant 0 : index
    %c0_28 = arith.constant 0 : index
    %48 = vector.load %arg6[%c0_27, %c0_28] : memref<392x144xf32, #tpu.memory_space<vmem>>, vector<392x144xf32>
    %cst_29 = arith.constant dense<0.000000e+00> : vector<2x144xf32>
    %49 = tpu.matmul %47, %48, %cst_29 {dimension_numbers = #tpu.dot_dimension_numbers<[1], [0], [0], [1], [0, 0, 1, 1], [], []>} : vector<2x392xf32>, vector<392x144xf32>, vector<2x144xf32> -> vector<2x144xf32>
    %c0_30 = arith.constant 0 : index
    %c0_31 = arith.constant 0 : index
    %50 = vector.load %arg7[%c0_30, %c0_31] : memref<144x16xf32, #tpu.memory_space<vmem>>, vector<144x16xf32>
    %cst_32 = arith.constant dense<0.000000e+00> : vector<2x16xf32>
    %51 = tpu.matmul %49, %50, %cst_32 {dimension_numbers = #tpu.dot_dimension_numbers<[1], [0], [0], [1], [0, 0, 1, 1], [], []>} : vector<2x144xf32>, vector<144x16xf32>, vector<2x16xf32> -> vector<2x16xf32>
    %cst_33 = arith.constant dense<0.000000e+00> : vector<16xf32>
    %52 = vector.multi_reduction <add>, %51, %cst_33 [0] : vector<2x16xf32> to vector<16xf32>
    %53 = vector.shape_cast %52 : vector<16xf32> to vector<1x16xf32>
    %cst_34 = arith.constant 0.055555556 : f32
    %54 = vector.broadcast %cst_34 : f32 to vector<1x16xf32>
    %55 = arith.mulf %53, %54 : vector<1x16xf32>
    %56 = arith.mulf %49, %49 : vector<2x144xf32>
    %cst_35 = arith.constant dense<0.000000e+00> : vector<2x16xf32>
    %57 = tpu.matmul %56, %50, %cst_35 {dimension_numbers = #tpu.dot_dimension_numbers<[1], [0], [0], [1], [0, 0, 1, 1], [], []>} : vector<2x144xf32>, vector<144x16xf32>, vector<2x16xf32> -> vector<2x16xf32>
    %cst_36 = arith.constant dense<0.000000e+00> : vector<16xf32>
    %58 = vector.multi_reduction <add>, %57, %cst_36 [0] : vector<2x16xf32> to vector<16xf32>
    %59 = vector.shape_cast %58 : vector<16xf32> to vector<1x16xf32>
    %cst_37 = arith.constant 0.055555556 : f32
    %60 = vector.broadcast %cst_37 : f32 to vector<1x16xf32>
    %61 = arith.mulf %59, %60 : vector<1x16xf32>
    %62 = arith.mulf %55, %55 : vector<1x16xf32>
    %63 = arith.subf %61, %62 : vector<1x16xf32>
    %cst_38 = arith.constant 0.000000e+00 : f32
    %64 = vector.broadcast %cst_38 : f32 to vector<1x16xf32>
    %65 = arith.maximumf %63, %64 : vector<1x16xf32>
    %c0_39 = arith.constant 0 : index
    %c0_40 = arith.constant 0 : index
    %66 = vector.load %arg9[%c0_39, %c0_40] : memref<1x16xf32, #tpu.memory_space<vmem>>, vector<1x16xf32>
    %cst_41 = arith.constant 9.99999974E-6 : f32
    %67 = vector.broadcast %cst_41 : f32 to vector<1x16xf32>
    %68 = arith.addf %65, %67 : vector<1x16xf32>
    %69 = math.rsqrt %68 : vector<1x16xf32>
    %70 = arith.mulf %66, %69 : vector<1x16xf32>
    %c0_42 = arith.constant 0 : index
    %c0_43 = arith.constant 0 : index
    %71 = vector.load %arg10[%c0_42, %c0_43] : memref<1x16xf32, #tpu.memory_space<vmem>>, vector<1x16xf32>
    %72 = arith.mulf %55, %70 : vector<1x16xf32>
    %73 = arith.subf %71, %72 : vector<1x16xf32>
    %c0_44 = arith.constant 0 : index
    %c0_45 = arith.constant 0 : index
    %74 = vector.load %arg8[%c0_44, %c0_45] : memref<16x144xf32, #tpu.memory_space<vmem>>, vector<16x144xf32>
    %cst_46 = arith.constant dense<0.000000e+00> : vector<1x144xf32>
    %75 = tpu.matmul %70, %74, %cst_46 {dimension_numbers = #tpu.dot_dimension_numbers<[1], [0], [0], [1], [0, 0, 1, 1], [], []>} : vector<1x16xf32>, vector<16x144xf32>, vector<1x144xf32> -> vector<1x144xf32>
    %c0_47 = arith.constant 0 : index
    %c0_48 = arith.constant 0 : index
    %76 = vector.load %arg8[%c0_47, %c0_48] : memref<16x144xf32, #tpu.memory_space<vmem>>, vector<16x144xf32>
    %cst_49 = arith.constant dense<0.000000e+00> : vector<1x144xf32>
    %77 = tpu.matmul %73, %76, %cst_49 {dimension_numbers = #tpu.dot_dimension_numbers<[1], [0], [0], [1], [0, 0, 1, 1], [], []>} : vector<1x16xf32>, vector<16x144xf32>, vector<1x144xf32> -> vector<1x144xf32>
    %78 = vector.broadcast %75 : vector<1x144xf32> to vector<2x144xf32>
    %79 = arith.mulf %49, %78 : vector<2x144xf32>
    %80 = vector.broadcast %77 : vector<1x144xf32> to vector<2x144xf32>
    %81 = arith.addf %79, %80 : vector<2x144xf32>
    %cst_50 = arith.constant 5.000000e-01 : f32
    %82 = vector.broadcast %cst_50 : f32 to vector<2x144xf32>
    %83 = arith.mulf %82, %81 : vector<2x144xf32>
    %cst_51 = arith.constant 4.471500e-02 : f32
    %84 = vector.broadcast %cst_51 : f32 to vector<2x144xf32>
    %85 = arith.mulf %84, %81 : vector<2x144xf32>
    %86 = arith.mulf %85, %81 : vector<2x144xf32>
    %87 = arith.mulf %86, %81 : vector<2x144xf32>
    %88 = arith.addf %81, %87 : vector<2x144xf32>
    %cst_52 = arith.constant 0.797884583 : f32
    %89 = vector.broadcast %cst_52 : f32 to vector<2x144xf32>
    %90 = arith.mulf %89, %88 : vector<2x144xf32>
    %91 = math.tanh %90 : vector<2x144xf32>
    %cst_53 = arith.constant 1.000000e+00 : f32
    %92 = vector.broadcast %cst_53 : f32 to vector<2x144xf32>
    %93 = arith.addf %92, %91 : vector<2x144xf32>
    %94 = arith.mulf %83, %93 : vector<2x144xf32>
    %c0_54 = arith.constant 0 : index
    %c0_55 = arith.constant 0 : index
    %95 = vector.load %arg11[%c0_54, %c0_55] : memref<144x32xf32, #tpu.memory_space<vmem>>, vector<144x32xf32>
    %cst_56 = arith.constant dense<0.000000e+00> : vector<2x32xf32>
    %96 = tpu.matmul %94, %95, %cst_56 {dimension_numbers = #tpu.dot_dimension_numbers<[1], [0], [0], [1], [0, 0, 1, 1], [], []>} : vector<2x144xf32>, vector<144x32xf32>, vector<2x32xf32> -> vector<2x32xf32>
    %c0_57 = arith.constant 0 : index
    %c0_58 = arith.constant 0 : index
    %97 = vector.load %arg12[%c0_57, %c0_58] : memref<32x32xf32, #tpu.memory_space<vmem>>, vector<32x32xf32>
    %cst_59 = arith.constant dense<0.000000e+00> : vector<2x32xf32>
    %98 = tpu.matmul %96, %97, %cst_59 {dimension_numbers = #tpu.dot_dimension_numbers<[1], [0], [0], [1], [0, 0, 1, 1], [], []>} : vector<2x32xf32>, vector<32x32xf32>, vector<2x32xf32> -> vector<2x32xf32>
    %cst_60 = arith.constant dense<0.000000e+00> : vector<32xf32>
    %99 = vector.multi_reduction <add>, %98, %cst_60 [0] : vector<2x32xf32> to vector<32xf32>
    %100 = vector.shape_cast %99 : vector<32xf32> to vector<1x32xf32>
    %cst_61 = arith.constant 5.000000e-01 : f32
    %101 = vector.broadcast %cst_61 : f32 to vector<1x32xf32>
    %102 = arith.mulf %100, %101 : vector<1x32xf32>
    %103 = arith.mulf %96, %96 : vector<2x32xf32>
    %cst_62 = arith.constant dense<0.000000e+00> : vector<2x32xf32>
    %104 = tpu.matmul %103, %97, %cst_62 {dimension_numbers = #tpu.dot_dimension_numbers<[1], [0], [0], [1], [0, 0, 1, 1], [], []>} : vector<2x32xf32>, vector<32x32xf32>, vector<2x32xf32> -> vector<2x32xf32>
    %cst_63 = arith.constant dense<0.000000e+00> : vector<32xf32>
    %105 = vector.multi_reduction <add>, %104, %cst_63 [0] : vector<2x32xf32> to vector<32xf32>
    %106 = vector.shape_cast %105 : vector<32xf32> to vector<1x32xf32>
    %cst_64 = arith.constant 5.000000e-01 : f32
    %107 = vector.broadcast %cst_64 : f32 to vector<1x32xf32>
    %108 = arith.mulf %106, %107 : vector<1x32xf32>
    %109 = arith.mulf %102, %102 : vector<1x32xf32>
    %110 = arith.subf %108, %109 : vector<1x32xf32>
    %cst_65 = arith.constant 0.000000e+00 : f32
    %111 = vector.broadcast %cst_65 : f32 to vector<1x32xf32>
    %112 = arith.maximumf %110, %111 : vector<1x32xf32>
    %c0_66 = arith.constant 0 : index
    %c0_67 = arith.constant 0 : index
    %113 = vector.load %arg14[%c0_66, %c0_67] : memref<1x32xf32, #tpu.memory_space<vmem>>, vector<1x32xf32>
    %cst_68 = arith.constant 9.99999974E-6 : f32
    %114 = vector.broadcast %cst_68 : f32 to vector<1x32xf32>
    %115 = arith.addf %112, %114 : vector<1x32xf32>
    %116 = math.rsqrt %115 : vector<1x32xf32>
    %117 = arith.mulf %113, %116 : vector<1x32xf32>
    %c0_69 = arith.constant 0 : index
    %c0_70 = arith.constant 0 : index
    %118 = vector.load %arg15[%c0_69, %c0_70] : memref<1x32xf32, #tpu.memory_space<vmem>>, vector<1x32xf32>
    %119 = arith.mulf %102, %117 : vector<1x32xf32>
    %120 = arith.subf %118, %119 : vector<1x32xf32>
    %c0_71 = arith.constant 0 : index
    %c0_72 = arith.constant 0 : index
    %121 = vector.load %arg13[%c0_71, %c0_72] : memref<32x32xf32, #tpu.memory_space<vmem>>, vector<32x32xf32>
    %cst_73 = arith.constant dense<0.000000e+00> : vector<1x32xf32>
    %122 = tpu.matmul %117, %121, %cst_73 {dimension_numbers = #tpu.dot_dimension_numbers<[1], [0], [0], [1], [0, 0, 1, 1], [], []>} : vector<1x32xf32>, vector<32x32xf32>, vector<1x32xf32> -> vector<1x32xf32>
    %c0_74 = arith.constant 0 : index
    %c0_75 = arith.constant 0 : index
    %123 = vector.load %arg13[%c0_74, %c0_75] : memref<32x32xf32, #tpu.memory_space<vmem>>, vector<32x32xf32>
    %cst_76 = arith.constant dense<0.000000e+00> : vector<1x32xf32>
    %124 = tpu.matmul %120, %123, %cst_76 {dimension_numbers = #tpu.dot_dimension_numbers<[1], [0], [0], [1], [0, 0, 1, 1], [], []>} : vector<1x32xf32>, vector<32x32xf32>, vector<1x32xf32> -> vector<1x32xf32>
    %125 = vector.broadcast %122 : vector<1x32xf32> to vector<2x32xf32>
    %126 = arith.mulf %96, %125 : vector<2x32xf32>
    %127 = vector.broadcast %124 : vector<1x32xf32> to vector<2x32xf32>
    %128 = arith.addf %126, %127 : vector<2x32xf32>
    %cst_77 = arith.constant 5.000000e-01 : f32
    %129 = vector.broadcast %cst_77 : f32 to vector<2x32xf32>
    %130 = arith.mulf %129, %128 : vector<2x32xf32>
    %cst_78 = arith.constant 4.471500e-02 : f32
    %131 = vector.broadcast %cst_78 : f32 to vector<2x32xf32>
    %132 = arith.mulf %131, %128 : vector<2x32xf32>
    %133 = arith.mulf %132, %128 : vector<2x32xf32>
    %134 = arith.mulf %133, %128 : vector<2x32xf32>
    %135 = arith.addf %128, %134 : vector<2x32xf32>
    %cst_79 = arith.constant 0.797884583 : f32
    %136 = vector.broadcast %cst_79 : f32 to vector<2x32xf32>
    %137 = arith.mulf %136, %135 : vector<2x32xf32>
    %138 = math.tanh %137 : vector<2x32xf32>
    %cst_80 = arith.constant 1.000000e+00 : f32
    %139 = vector.broadcast %cst_80 : f32 to vector<2x32xf32>
    %140 = arith.addf %139, %138 : vector<2x32xf32>
    %141 = arith.mulf %130, %140 : vector<2x32xf32>
    %c0_81 = arith.constant 0 : index
    %c0_82 = arith.constant 0 : index
    %142 = vector.load %arg16[%c0_81, %c0_82] : memref<32x16xf32, #tpu.memory_space<vmem>>, vector<32x16xf32>
    %cst_83 = arith.constant dense<0.000000e+00> : vector<2x16xf32>
    %143 = tpu.matmul %141, %142, %cst_83 {dimension_numbers = #tpu.dot_dimension_numbers<[1], [0], [0], [1], [0, 0, 1, 1], [], []>} : vector<2x32xf32>, vector<32x16xf32>, vector<2x16xf32> -> vector<2x16xf32>
    %c0_84 = arith.constant 0 : index
    %c0_85 = arith.constant 0 : index
    %144 = vector.load %arg17[%c0_84, %c0_85] : memref<1x16xf32, #tpu.memory_space<vmem>>, vector<1x16xf32>
    %145 = vector.broadcast %144 : vector<1x16xf32> to vector<2x16xf32>
    %146 = arith.addf %143, %145 : vector<2x16xf32>
    %cst_86 = arith.constant 5.000000e-01 : f32
    %147 = vector.broadcast %cst_86 : f32 to vector<2x16xf32>
    %148 = arith.mulf %147, %146 : vector<2x16xf32>
    %cst_87 = arith.constant 4.471500e-02 : f32
    %149 = vector.broadcast %cst_87 : f32 to vector<2x16xf32>
    %150 = arith.mulf %149, %146 : vector<2x16xf32>
    %151 = arith.mulf %150, %146 : vector<2x16xf32>
    %152 = arith.mulf %151, %146 : vector<2x16xf32>
    %153 = arith.addf %146, %152 : vector<2x16xf32>
    %cst_88 = arith.constant 0.797884583 : f32
    %154 = vector.broadcast %cst_88 : f32 to vector<2x16xf32>
    %155 = arith.mulf %154, %153 : vector<2x16xf32>
    %156 = math.tanh %155 : vector<2x16xf32>
    %cst_89 = arith.constant 1.000000e+00 : f32
    %157 = vector.broadcast %cst_89 : f32 to vector<2x16xf32>
    %158 = arith.addf %157, %156 : vector<2x16xf32>
    %159 = arith.mulf %148, %158 : vector<2x16xf32>
    %c0_90 = arith.constant 0 : index
    %c0_91 = arith.constant 0 : index
    %160 = vector.load %arg18[%c0_90, %c0_91] : memref<2x16xf32, #tpu.memory_space<vmem>>, vector<2x16xf32>
    tpu.vector_store %arg18[%c0_90, %c0_91], %159 {strides = array<i32>} : memref<2x16xf32, #tpu.memory_space<vmem>>, vector<2x16xf32>,
    return
  }
}

</mosaic_0001>

<llo_original>
// kernel: forward.1
$region0: #{forward.1}
  #allocation0 [shape = 'u32[]', space=smem, size = 0x4, offset = 0x4, fixed_abs, tag = 'smem constant byte address 0x4 - core index']
  #allocation1 [shape = 'u32[144,128]{1,0:T(1,128)}', space=vmem, size = 0x12000, scoped, tag = 'internal scratch']
  %s0 = inlined_call_operand.vmem [shape: f32[2,1024], index: 0, kind: input, shape index: {}]
  %s1 = inlined_call_operand.vmem [shape: f32[1024,392], index: 1, kind: input, shape index: {}]
  %s2 = inlined_call_operand.vmem [shape: f32[392,8], index: 2, kind: input, shape index: {}]
  %s3 = inlined_call_operand.vmem [shape: f32[8,392], index: 3, kind: input, shape index: {}]
  %s4 = inlined_call_operand.vmem [shape: f32[1,8], index: 4, kind: input, shape index: {}]
  %s5 = inlined_call_operand.vmem [shape: f32[1,8], index: 5, kind: input, shape index: {}]
  %s6 = inlined_call_operand.vmem [shape: f32[392,144], index: 6, kind: input, shape index: {}]
  %s7 = inlined_call_operand.vmem [shape: f32[144,16], index: 7, kind: input, shape index: {}]
  %s8 = inlined_call_operand.vmem [shape: f32[16,144], index: 8, kind: input, shape index: {}]
  %s9 = inlined_call_operand.vmem [shape: f32[1,16], index: 9, kind: input, shape index: {}]
  %s10 = inlined_call_operand.vmem [shape: f32[1,16], index: 10, kind: input, shape index: {}]
  %s11 = inlined_call_operand.vmem [shape: f32[144,32], index: 11, kind: input, shape index: {}]
  %s12 = inlined_call_operand.vmem [shape: f32[32,32], index: 12, kind: input, shape index: {}]
  %s13 = inlined_call_operand.vmem [shape: f32[32,32], index: 13, kind: input, shape index: {}]
  %s14 = inlined_call_operand.vmem [shape: f32[1,32], index: 14, kind: input, shape index: {}]
  %s15 = inlined_call_operand.vmem [shape: f32[1,32], index: 15, kind: input, shape index: {}]
  %s16 = inlined_call_operand.vmem [shape: f32[32,16], index: 16, kind: input, shape index: {}]
  %s17 = inlined_call_operand.vmem [shape: f32[1,16], index: 17, kind: input, shape index: {}]
  %s18 = inlined_call_operand.vmem [shape: f32[2,16], index: 18, kind: output, shape index: {}]
  %s19 = sld [smem:[#allocation0]]
  $region82: #{forward.1} parent=0
    _
  %s21 = ssub.s32 1, %s19
  %s22 = scalar_select 0, %s21, %s19
  // Predicated region
  $region2: #{forward.1} parent=0 // pred_check
    _
  $region3: #{forward.1} parent=0 // pred_check_branch
    %24 = sbr.rel (0) target = $region5
  $region4: #{forward.1} parent=0 // pred_region
    _
  $region5: #{forward.1} parent=0 // pred_fallthru
    _
  // Predicated region
  $region6: #{forward.1} parent=0 // pred_check
    _
  $region7: #{forward.1} parent=0 // pred_check_branch
    %26 = sbr.rel (0) target = $region9
  $region8: #{forward.1} parent=0 // pred_region
    _
  $region9: #{forward.1} parent=0 // pred_fallthru
    _
  // Predicated region
  $region10: #{forward.1} parent=0 // pred_check
    _
  $region11: #{forward.1} parent=0 // pred_check_branch
    %28 = sbr.rel (0) target = $region13
  $region12: #{forward.1} parent=0 // pred_region
    _
  $region13: #{forward.1} parent=0 // pred_fallthru
    _
  // Predicated region
  $region14: #{forward.1} parent=0 // pred_check
    _
  $region15: #{forward.1} parent=0 // pred_check_branch
    %30 = sbr.rel (0) target = $region17
  $region16: #{forward.1} parent=0 // pred_region
    _
  $region17: #{forward.1} parent=0 // pred_fallthru
    _
  // Predicated region
  $region18: #{forward.1} parent=0 // pred_check
    _
  $region19: #{forward.1} parent=0 // pred_check_branch
    %32 = sbr.rel (0) target = $region21
  $region20: #{forward.1} parent=0 // pred_region
    _
  $region21: #{forward.1} parent=0 // pred_fallthru
    _
  // Predicated region
  $region22: #{forward.1} parent=0 // pred_check
    _
  $region23: #{forward.1} parent=0 // pred_check_branch
    %34 = sbr.rel (0) target = $region25
  $region24: #{forward.1} parent=0 // pred_region
    _
  $region25: #{forward.1} parent=0 // pred_fallthru
    _
  // Predicated region
  $region26: #{forward.1} parent=0 // pred_check
    _
  $region27: #{forward.1} parent=0 // pred_check_branch
    %36 = sbr.rel (0) target = $region29
  $region28: #{forward.1} parent=0 // pred_region
    _
  $region29: #{forward.1} parent=0 // pred_fallthru
    _
  // Predicated region
  $region30: #{forward.1} parent=0 // pred_check
    _
  $region31: #{forward.1} parent=0 // pred_check_branch
    %38 = sbr.rel (0) target = $region33
  $region32: #{forward.1} parent=0 // pred_region
    _
  $region33: #{forward.1} parent=0 // pred_fallthru
    _
  // Predicated region
  $region34: #{forward.1} parent=0 // pred_check
    _
  $region35: #{forward.1} parent=0 // pred_check_branch
    %40 = sbr.rel (0) target = $region37
  $region36: #{forward.1} parent=0 // pred_region
    _
  $region37: #{forward.1} parent=0 // pred_fallthru
    _
  // Predicated region
  $region38: #{forward.1} parent=0 // pred_check
    _
  $region39: #{forward.1} parent=0 // pred_check_branch
    %42 = sbr.rel (0) target = $region41
  $region40: #{forward.1} parent=0 // pred_region
    _
  $region41: #{forward.1} parent=0 // pred_fallthru
    _
  // Predicated region
  $region42: #{forward.1} parent=0 // pred_check
    _
  $region43: #{forward.1} parent=0 // pred_check_branch
    %44 = sbr.rel (0) target = $region45
  $region44: #{forward.1} parent=0 // pred_region
    _
  $region45: #{forward.1} parent=0 // pred_fallthru
    _
  // Predicated region
  $region46: #{forward.1} parent=0 // pred_check
    _
  $region47: #{forward.1} parent=0 // pred_check_branch
    %46 = sbr.rel (0) target = $region49
  $region48: #{forward.1} parent=0 // pred_region
    _
  $region49: #{forward.1} parent=0 // pred_fallthru
    _
  // Predicated region
  $region50: #{forward.1} parent=0 // pred_check
    _
  $region51: #{forward.1} parent=0 // pred_check_branch
    %48 = sbr.rel (0) target = $region53
  $region52: #{forward.1} parent=0 // pred_region
    _
  $region53: #{forward.1} parent=0 // pred_fallthru
    _
  // Predicated region
  $region54: #{forward.1} parent=0 // pred_check
    _
  $region55: #{forward.1} parent=0 // pred_check_branch
    %50 = sbr.rel (0) target = $region57
  $region56: #{forward.1} parent=0 // pred_region
    _
  $region57: #{forward.1} parent=0 // pred_fallthru
    _
  // Predicated region
  $region58: #{forward.1} parent=0 // pred_check
    _
  $region59: #{forward.1} parent=0 // pred_check_branch
    %52 = sbr.rel (0) target = $region61
  $region60: #{forward.1} parent=0 // pred_region
    _
  $region61: #{forward.1} parent=0 // pred_fallthru
    _
  // Predicated region
  $region62: #{forward.1} parent=0 // pred_check
    _
  $region63: #{forward.1} parent=0 // pred_check_branch
    %54 = sbr.rel (0) target = $region65
  $region64: #{forward.1} parent=0 // pred_region
    _
  $region65: #{forward.1} parent=0 // pred_fallthru
    _
  // Predicated region
  $region66: #{forward.1} parent=0 // pred_check
    _
  $region67: #{forward.1} parent=0 // pred_check_branch
    %56 = sbr.rel (0) target = $region69
  $region68: #{forward.1} parent=0 // pred_region
    _
  $region69: #{forward.1} parent=0 // pred_fallthru
    _
  // Predicated region
  $region70: #{forward.1} parent=0 // pred_check
    _
  $region71: #{forward.1} parent=0 // pred_check_branch
    %58 = sbr.rel (0) target = $region73
  $region72: #{forward.1} parent=0 // pred_region
    _
  $region73: #{forward.1} parent=0 // pred_fallthru
    _
  %v59 = vld [vmem:[%s0] sm:$0xff]
  %v60 = vld [vmem:[%s0 + $0x8] sm:$0xff]
  %v61 = vld [vmem:[%s1] sm:$0xff]
  %v62 = vld [vmem:[%s1 + $0x8] sm:$0xff]
  %v63 = vld [vmem:[%s1 + $0x10] sm:$0xff]
  %v64 = vld [vmem:[%s1 + $0x18] sm:$0xff]
  %v65 = vld [vmem:[%s1 + $0x20] sm:$0xff]
  %v66 = vld [vmem:[%s1 + $0x28] sm:$0xff]
  %v67 = vld [vmem:[%s1 + $0x30] sm:$0xff]
  %v68 = vld [vmem:[%s1 + $0x38] sm:$0xff]
  %v69 = vld [vmem:[%s1 + $0x40] sm:$0xff]
  %v70 = vld [vmem:[%s1 + $0x48] sm:$0xff]
  %v71 = vld [vmem:[%s1 + $0x50] sm:$0xff]
  %v72 = vld [vmem:[%s1 + $0x58] sm:$0xff]
  %v73 = vld [vmem:[%s1 + $0x60] sm:$0xff]
  %v74 = vld [vmem:[%s1 + $0x68] sm:$0xff]
  %v75 = vld [vmem:[%s1 + $0x70] sm:$0xff]
  %v76 = vld [vmem:[%s1 + $0x78] sm:$0xff]
  %v77 = vld [vmem:[%s1 + $0x80] sm:$0xff]
  %v78 = vld [vmem:[%s1 + $0x88] sm:$0xff]
  %v79 = vld [vmem:[%s1 + $0x90] sm:$0xff]
  %v80 = vld [vmem:[%s1 + $0x98] sm:$0xff]
  %v81 = vld [vmem:[%s1 + $0xa0] sm:$0xff]
  %v82 = vld [vmem:[%s1 + $0xa8] sm:$0xff]
  %v83 = vld [vmem:[%s1 + $0xb0] sm:$0xff]
  %v84 = vld [vmem:[%s1 + $0xb8] sm:$0xff]
  %v85 = vld [vmem:[%s1 + $0xc0] sm:$0xff]
  %v86 = vld [vmem:[%s1 + $0xc8] sm:$0xff]
  %v87 = vld [vmem:[%s1 + $0xd0] sm:$0xff]
  %v88 = vld [vmem:[%s1 + $0xd8] sm:$0xff]
  %v89 = vld [vmem:[%s1 + $0xe0] sm:$0xff]
  %v90 = vld [vmem:[%s1 + $0xe8] sm:$0xff]
  %v91 = vld [vmem:[%s1 + $0xf0] sm:$0xff]
  %v92 = vld [vmem:[%s1 + $0xf8] sm:$0xff]
  %v93 = vld [vmem:[%s1 + $0x100] sm:$0xff]
  %v94 = vld [vmem:[%s1 + $0x108] sm:$0xff]
  %v95 = vld [vmem:[%s1 + $0x110] sm:$0xff]
  %v96 = vld [vmem:[%s1 + $0x118] sm:$0xff]
  %v97 = vld [vmem:[%s1 + $0x120] sm:$0xff]
  %v98 = vld [vmem:[%s1 + $0x128] sm:$0xff]
  %v99 = vld [vmem:[%s1 + $0x130] sm:$0xff]
  %v100 = vld [vmem:[%s1 + $0x138] sm:$0xff]
  %v101 = vld [vmem:[%s1 + $0x140] sm:$0xff]
  %v102 = vld [vmem:[%s1 + $0x148] sm:$0xff]
  %v103 = vld [vmem:[%s1 + $0x150] sm:$0xff]
  %v104 = vld [vmem:[%s1 + $0x158] sm:$0xff]
  %v105 = vld [vmem:[%s1 + $0x160] sm:$0xff]
  %v106 = vld [vmem:[%s1 + $0x168] sm:$0xff]
  %v107 = vld [vmem:[%s1 + $0x170] sm:$0xff]
  %v108 = vld [vmem:[%s1 + $0x178] sm:$0xff]
  %v109 = vld [vmem:[%s1 + $0x180] sm:$0xff]
  %v110 = vld [vmem:[%s1 + $0x188] sm:$0xff]
  %v111 = vld [vmem:[%s1 + $0x190] sm:$0xff]
  %v112 = vld [vmem:[%s1 + $0x198] sm:$0xff]
  %v113 = vld [vmem:[%s1 + $0x1a0] sm:$0xff]
  %v114 = vld [vmem:[%s1 + $0x1a8] sm:$0xff]
  %v115 = vld [vmem:[%s1 + $0x1b0] sm:$0xff]
  %v116 = vld [vmem:[%s1 + $0x1b8] sm:$0xff]
  %v117 = vld [vmem:[%s1 + $0x1c0] sm:$0xff]
  %v118 = vld [vmem:[%s1 + $0x1c8] sm:$0xff]
  %v119 = vld [vmem:[%s1 + $0x1d0] sm:$0xff]
  %v120 = vld [vmem:[%s1 + $0x1d8] sm:$0xff]
  %v121 = vld [vmem:[%s1 + $0x1e0] sm:$0xff]
  %v122 = vld [vmem:[%s1 + $0x1e8] sm:$0xff]
  %v123 = vld [vmem:[%s1 + $0x1f0] sm:$0xff]
  %v124 = vld [vmem:[%s1 + $0x1f8] sm:$0xff]
  %v125 = vld [vmem:[%s1 + $0x200] sm:$0xff]
  %v126 = vld [vmem:[%s1 + $0x208] sm:$0xff]
  %v127 = vld [vmem:[%s1 + $0x210] sm:$0xff]
  %v128 = vld [vmem:[%s1 + $0x218] sm:$0xff]
  %v129 = vld [vmem:[%s1 + $0x220] sm:$0xff]
  %v130 = vld [vmem:[%s1 + $0x228] sm:$0xff]
  %v131 = vld [vmem:[%s1 + $0x230] sm:$0xff]
  %v132 = vld [vmem:[%s1 + $0x238] sm:$0xff]
  %v133 = vld [vmem:[%s1 + $0x240] sm:$0xff]
  %v134 = vld [vmem:[%s1 + $0x248] sm:$0xff]
  %v135 = vld [vmem:[%s1 + $0x250] sm:$0xff]
  %v136 = vld [vmem:[%s1 + $0x258] sm:$0xff]
  %v137 = vld [vmem:[%s1 + $0x260] sm:$0xff]
  %v138 = vld [vmem:[%s1 + $0x268] sm:$0xff]
  %v139 = vld [vmem:[%s1 + $0x270] sm:$0xff]
  %v140 = vld [vmem:[%s1 + $0x278] sm:$0xff]
  %v141 = vld [vmem:[%s1 + $0x280] sm:$0xff]
  %v142 = vld [vmem:[%s1 + $0x288] sm:$0xff]
  %v143 = vld [vmem:[%s1 + $0x290] sm:$0xff]
  %v144 = vld [vmem:[%s1 + $0x298] sm:$0xff]
  %v145 = vld [vmem:[%s1 + $0x2a0] sm:$0xff]
  %v146 = vld [vmem:[%s1 + $0x2a8] sm:$0xff]
  %v147 = vld [vmem:[%s1 + $0x2b0] sm:$0xff]
  %v148 = vld [vmem:[%s1 + $0x2b8] sm:$0xff]
  %v149 = vld [vmem:[%s1 + $0x2c0] sm:$0xff]
  %v150 = vld [vmem:[%s1 + $0x2c8] sm:$0xff]
  %v151 = vld [vmem:[%s1 + $0x2d0] sm:$0xff]
  %v152 = vld [vmem:[%s1 + $0x2d8] sm:$0xff]
  %v153 = vld [vmem:[%s1 + $0x2e0] sm:$0xff]
  %v154 = vld [vmem:[%s1 + $0x2e8] sm:$0xff]
  %v155 = vld [vmem:[%s1 + $0x2f0] sm:$0xff]
  %v156 = vld [vmem:[%s1 + $0x2f8] sm:$0xff]
  %v157 = vld [vmem:[%s1 + $0x300] sm:$0xff]
  %v158 = vld [vmem:[%s1 + $0x308] sm:$0xff]
  %v159 = vld [vmem:[%s1 + $0x310] sm:$0xff]
  %v160 = vld [vmem:[%s1 + $0x318] sm:$0xff]
  %v161 = vld [vmem:[%s1 + $0x320] sm:$0xff]
  %v162 = vld [vmem:[%s1 + $0x328] sm:$0xff]
  %v163 = vld [vmem:[%s1 + $0x330] sm:$0xff]
  %v164 = vld [vmem:[%s1 + $0x338] sm:$0xff]
  %v165 = vld [vmem:[%s1 + $0x340] sm:$0xff]
  %v166 = vld [vmem:[%s1 + $0x348] sm:$0xff]
  %v167 = vld [vmem:[%s1 + $0x350] sm:$0xff]
  %v168 = vld [vmem:[%s1 + $0x358] sm:$0xff]
  %v169 = vld [vmem:[%s1 + $0x360] sm:$0xff]
  %v170 = vld [vmem:[%s1 + $0x368] sm:$0xff]
  %v171 = vld [vmem:[%s1 + $0x370] sm:$0xff]
  %v172 = vld [vmem:[%s1 + $0x378] sm:$0xff]
  %v173 = vld [vmem:[%s1 + $0x380] sm:$0xff]
  %v174 = vld [vmem:[%s1 + $0x388] sm:$0xff]
  %v175 = vld [vmem:[%s1 + $0x390] sm:$0xff]
  %v176 = vld [vmem:[%s1 + $0x398] sm:$0xff]
  %v177 = vld [vmem:[%s1 + $0x3a0] sm:$0xff]
  %v178 = vld [vmem:[%s1 + $0x3a8] sm:$0xff]
  %v179 = vld [vmem:[%s1 + $0x3b0] sm:$0xff]
  %v180 = vld [vmem:[%s1 + $0x3b8] sm:$0xff]
  %v181 = vld [vmem:[%s1 + $0x3c0] sm:$0xff]
  %v182 = vld [vmem:[%s1 + $0x3c8] sm:$0xff]
  %v183 = vld [vmem:[%s1 + $0x3d0] sm:$0xff]
  %v184 = vld [vmem:[%s1 + $0x3d8] sm:$0xff]
  %v185 = vld [vmem:[%s1 + $0x3e0] sm:$0xff]
  %v186 = vld [vmem:[%s1 + $0x3e8] sm:$0xff]
  %v187 = vld [vmem:[%s1 + $0x3f0] sm:$0xff]
  %v188 = vld [vmem:[%s1 + $0x3f8] sm:$0xff]
  %v189 = vld [vmem:[%s1 + $0x400] sm:$0xff]
  %v190 = vld [vmem:[%s1 + $0x408] sm:$0xff]
  %v191 = vld [vmem:[%s1 + $0x410] sm:$0xff]
  %v192 = vld [vmem:[%s1 + $0x418] sm:$0xff]
  %v193 = vld [vmem:[%s1 + $0x420] sm:$0xff]
  %v194 = vld [vmem:[%s1 + $0x428] sm:$0xff]
  %v195 = vld [vmem:[%s1 + $0x430] sm:$0xff]
  %v196 = vld [vmem:[%s1 + $0x438] sm:$0xff]
  %v197 = vld [vmem:[%s1 + $0x440] sm:$0xff]
  %v198 = vld [vmem:[%s1 + $0x448] sm:$0xff]
  %v199 = vld [vmem:[%s1 + $0x450] sm:$0xff]
  %v200 = vld [vmem:[%s1 + $0x458] sm:$0xff]
  %v201 = vld [vmem:[%s1 + $0x460] sm:$0xff]
  %v202 = vld [vmem:[%s1 + $0x468] sm:$0xff]
  %v203 = vld [vmem:[%s1 + $0x470] sm:$0xff]
  %v204 = vld [vmem:[%s1 + $0x478] sm:$0xff]
  %v205 = vld [vmem:[%s1 + $0x480] sm:$0xff]
  %v206 = vld [vmem:[%s1 + $0x488] sm:$0xff]
  %v207 = vld [vmem:[%s1 + $0x490] sm:$0xff]
  %v208 = vld [vmem:[%s1 + $0x498] sm:$0xff]
  %v209 = vld [vmem:[%s1 + $0x4a0] sm:$0xff]
  %v210 = vld [vmem:[%s1 + $0x4a8] sm:$0xff]
  %v211 = vld [vmem:[%s1 + $0x4b0] sm:$0xff]
  %v212 = vld [vmem:[%s1 + $0x4b8] sm:$0xff]
  %v213 = vld [vmem:[%s1 + $0x4c0] sm:$0xff]
  %v214 = vld [vmem:[%s1 + $0x4c8] sm:$0xff]
  %v215 = vld [vmem:[%s1 + $0x4d0] sm:$0xff]
  %v216 = vld [vmem:[%s1 + $0x4d8] sm:$0xff]
  %v217 = vld [vmem:[%s1 + $0x4e0] sm:$0xff]
  %v218 = vld [vmem:[%s1 + $0x4e8] sm:$0xff]
  %v219 = vld [vmem:[%s1 + $0x4f0] sm:$0xff]
  %v220 = vld [vmem:[%s1 + $0x4f8] sm:$0xff]
  %v221 = vld [vmem:[%s1 + $0x500] sm:$0xff]
  %v222 = vld [vmem:[%s1 + $0x508] sm:$0xff]
  %v223 = vld [vmem:[%s1 + $0x510] sm:$0xff]
  %v224 = vld [vmem:[%s1 + $0x518] sm:$0xff]
  %v225 = vld [vmem:[%s1 + $0x520] sm:$0xff]
  %v226 = vld [vmem:[%s1 + $0x528] sm:$0xff]
  %v227 = vld [vmem:[%s1 + $0x530] sm:$0xff]
  %v228 = vld [vmem:[%s1 + $0x538] sm:$0xff]
  %v229 = vld [vmem:[%s1 + $0x540] sm:$0xff]
  %v230 = vld [vmem:[%s1 + $0x548] sm:$0xff]
  %v231 = vld [vmem:[%s1 + $0x550] sm:$0xff]
  %v232 = vld [vmem:[%s1 + $0x558] sm:$0xff]
  %v233 = vld [vmem:[%s1 + $0x560] sm:$0xff]
  %v234 = vld [vmem:[%s1 + $0x568] sm:$0xff]
  %v235 = vld [vmem:[%s1 + $0x570] sm:$0xff]
  %v236 = vld [vmem:[%s1 + $0x578] sm:$0xff]
  %v237 = vld [vmem:[%s1 + $0x580] sm:$0xff]
  %v238 = vld [vmem:[%s1 + $0x588] sm:$0xff]
  %v239 = vld [vmem:[%s1 + $0x590] sm:$0xff]
  %v240 = vld [vmem:[%s1 + $0x598] sm:$0xff]
  %v241 = vld [vmem:[%s1 + $0x5a0] sm:$0xff]
  %v242 = vld [vmem:[%s1 + $0x5a8] sm:$0xff]
  %v243 = vld [vmem:[%s1 + $0x5b0] sm:$0xff]
  %v244 = vld [vmem:[%s1 + $0x5b8] sm:$0xff]
  %v245 = vld [vmem:[%s1 + $0x5c0] sm:$0xff]
  %v246 = vld [vmem:[%s1 + $0x5c8] sm:$0xff]
  %v247 = vld [vmem:[%s1 + $0x5d0] sm:$0xff]
  %v248 = vld [vmem:[%s1 + $0x5d8] sm:$0xff]
  %v249 = vld [vmem:[%s1 + $0x5e0] sm:$0xff]
  %v250 = vld [vmem:[%s1 + $0x5e8] sm:$0xff]
  %v251 = vld [vmem:[%s1 + $0x5f0] sm:$0xff]
  %v252 = vld [vmem:[%s1 + $0x5f8] sm:$0xff]
  %v253 = vld [vmem:[%s1 + $0x600] sm:$0xff]
  %v254 = vld [vmem:[%s1 + $0x608] sm:$0xff]
  %v255 = vld [vmem:[%s1 + $0x610] sm:$0xff]
  %v256 = vld [vmem:[%s1 + $0x618] sm:$0xff]
  %v257 = vld [vmem:[%s1 + $0x620] sm:$0xff]
  %v258 = vld [vmem:[%s1 + $0x628] sm:$0xff]
  %v259 = vld [vmem:[%s1 + $0x630] sm:$0xff]
  %v260 = vld [vmem:[%s1 + $0x638] sm:$0xff]
  %v261 = vld [vmem:[%s1 + $0x640] sm:$0xff]
  %v262 = vld [vmem:[%s1 + $0x648] sm:$0xff]
  %v263 = vld [vmem:[%s1 + $0x650] sm:$0xff]
  %v264 = vld [vmem:[%s1 + $0x658] sm:$0xff]
  %v265 = vld [vmem:[%s1 + $0x660] sm:$0xff]
  %v266 = vld [vmem:[%s1 + $0x668] sm:$0xff]
  %v267 = vld [vmem:[%s1 + $0x670] sm:$0xff]
  %v268 = vld [vmem:[%s1 + $0x678] sm:$0xff]
  %v269 = vld [vmem:[%s1 + $0x680] sm:$0xff]
  %v270 = vld [vmem:[%s1 + $0x688] sm:$0xff]
  %v271 = vld [vmem:[%s1 + $0x690] sm:$0xff]
  %v272 = vld [vmem:[%s1 + $0x698] sm:$0xff]
  %v273 = vld [vmem:[%s1 + $0x6a0] sm:$0xff]
  %v274 = vld [vmem:[%s1 + $0x6a8] sm:$0xff]
  %v275 = vld [vmem:[%s1 + $0x6b0] sm:$0xff]
  %v276 = vld [vmem:[%s1 + $0x6b8] sm:$0xff]
  %v277 = vld [vmem:[%s1 + $0x6c0] sm:$0xff]
  %v278 = vld [vmem:[%s1 + $0x6c8] sm:$0xff]
  %v279 = vld [vmem:[%s1 + $0x6d0] sm:$0xff]
  %v280 = vld [vmem:[%s1 + $0x6d8] sm:$0xff]
  %v281 = vld [vmem:[%s1 + $0x6e0] sm:$0xff]
  %v282 = vld [vmem:[%s1 + $0x6e8] sm:$0xff]
  %v283 = vld [vmem:[%s1 + $0x6f0] sm:$0xff]
  %v284 = vld [vmem:[%s1 + $0x6f8] sm:$0xff]
  %v285 = vld [vmem:[%s1 + $0x700] sm:$0xff]
  %v286 = vld [vmem:[%s1 + $0x708] sm:$0xff]
  %v287 = vld [vmem:[%s1 + $0x710] sm:$0xff]
  %v288 = vld [vmem:[%s1 + $0x718] sm:$0xff]
  %v289 = vld [vmem:[%s1 + $0x720] sm:$0xff]
  %v290 = vld [vmem:[%s1 + $0x728] sm:$0xff]
  %v291 = vld [vmem:[%s1 + $0x730] sm:$0xff]
  %v292 = vld [vmem:[%s1 + $0x738] sm:$0xff]
  %v293 = vld [vmem:[%s1 + $0x740] sm:$0xff]
  %v294 = vld [vmem:[%s1 + $0x748] sm:$0xff]
  %v295 = vld [vmem:[%s1 + $0x750] sm:$0xff]
  %v296 = vld [vmem:[%s1 + $0x758] sm:$0xff]
  %v297 = vld [vmem:[%s1 + $0x760] sm:$0xff]
  %v298 = vld [vmem:[%s1 + $0x768] sm:$0xff]
  %v299 = vld [vmem:[%s1 + $0x770] sm:$0xff]
  %v300 = vld [vmem:[%s1 + $0x778] sm:$0xff]
  %v301 = vld [vmem:[%s1 + $0x780] sm:$0xff]
  %v302 = vld [vmem:[%s1 + $0x788] sm:$0xff]
  %v303 = vld [vmem:[%s1 + $0x790] sm:$0xff]
  %v304 = vld [vmem:[%s1 + $0x798] sm:$0xff]
  %v305 = vld [vmem:[%s1 + $0x7a0] sm:$0xff]
  %v306 = vld [vmem:[%s1 + $0x7a8] sm:$0xff]
  %v307 = vld [vmem:[%s1 + $0x7b0] sm:$0xff]
  %v308 = vld [vmem:[%s1 + $0x7b8] sm:$0xff]
  %v309 = vld [vmem:[%s1 + $0x7c0] sm:$0xff]
  %v310 = vld [vmem:[%s1 + $0x7c8] sm:$0xff]
  %v311 = vld [vmem:[%s1 + $0x7d0] sm:$0xff]
  %v312 = vld [vmem:[%s1 + $0x7d8] sm:$0xff]
  %v313 = vld [vmem:[%s1 + $0x7e0] sm:$0xff]
  %v314 = vld [vmem:[%s1 + $0x7e8] sm:$0xff]
  %v315 = vld [vmem:[%s1 + $0x7f0] sm:$0xff]
  %v316 = vld [vmem:[%s1 + $0x7f8] sm:$0xff]
  %v317 = vld [vmem:[%s1 + $0x800] sm:$0xff]
  %v318 = vld [vmem:[%s1 + $0x808] sm:$0xff]
  %v319 = vld [vmem:[%s1 + $0x810] sm:$0xff]
  %v320 = vld [vmem:[%s1 + $0x818] sm:$0xff]
  %v321 = vld [vmem:[%s1 + $0x820] sm:$0xff]
  %v322 = vld [vmem:[%s1 + $0x828] sm:$0xff]
  %v323 = vld [vmem:[%s1 + $0x830] sm:$0xff]
  %v324 = vld [vmem:[%s1 + $0x838] sm:$0xff]
  %v325 = vld [vmem:[%s1 + $0x840] sm:$0xff]
  %v326 = vld [vmem:[%s1 + $0x848] sm:$0xff]
  %v327 = vld [vmem:[%s1 + $0x850] sm:$0xff]
  %v328 = vld [vmem:[%s1 + $0x858] sm:$0xff]
  %v329 = vld [vmem:[%s1 + $0x860] sm:$0xff]
  %v330 = vld [vmem:[%s1 + $0x868] sm:$0xff]
  %v331 = vld [vmem:[%s1 + $0x870] sm:$0xff]
  %v332 = vld [vmem:[%s1 + $0x878] sm:$0xff]
  %v333 = vld [vmem:[%s1 + $0x880] sm:$0xff]
  %v334 = vld [vmem:[%s1 + $0x888] sm:$0xff]
  %v335 = vld [vmem:[%s1 + $0x890] sm:$0xff]
  %v336 = vld [vmem:[%s1 + $0x898] sm:$0xff]
  %v337 = vld [vmem:[%s1 + $0x8a0] sm:$0xff]
  %v338 = vld [vmem:[%s1 + $0x8a8] sm:$0xff]
  %v339 = vld [vmem:[%s1 + $0x8b0] sm:$0xff]
  %v340 = vld [vmem:[%s1 + $0x8b8] sm:$0xff]
  %v341 = vld [vmem:[%s1 + $0x8c0] sm:$0xff]
  %v342 = vld [vmem:[%s1 + $0x8c8] sm:$0xff]
  %v343 = vld [vmem:[%s1 + $0x8d0] sm:$0xff]
  %v344 = vld [vmem:[%s1 + $0x8d8] sm:$0xff]
  %v345 = vld [vmem:[%s1 + $0x8e0] sm:$0xff]
  %v346 = vld [vmem:[%s1 + $0x8e8] sm:$0xff]
  %v347 = vld [vmem:[%s1 + $0x8f0] sm:$0xff]
  %v348 = vld [vmem:[%s1 + $0x8f8] sm:$0xff]
  %v349 = vld [vmem:[%s1 + $0x900] sm:$0xff]
  %v350 = vld [vmem:[%s1 + $0x908] sm:$0xff]
  %v351 = vld [vmem:[%s1 + $0x910] sm:$0xff]
  %v352 = vld [vmem:[%s1 + $0x918] sm:$0xff]
  %v353 = vld [vmem:[%s1 + $0x920] sm:$0xff]
  %v354 = vld [vmem:[%s1 + $0x928] sm:$0xff]
  %v355 = vld [vmem:[%s1 + $0x930] sm:$0xff]
  %v356 = vld [vmem:[%s1 + $0x938] sm:$0xff]
  %v357 = vld [vmem:[%s1 + $0x940] sm:$0xff]
  %v358 = vld [vmem:[%s1 + $0x948] sm:$0xff]
  %v359 = vld [vmem:[%s1 + $0x950] sm:$0xff]
  %v360 = vld [vmem:[%s1 + $0x958] sm:$0xff]
  %v361 = vld [vmem:[%s1 + $0x960] sm:$0xff]
  %v362 = vld [vmem:[%s1 + $0x968] sm:$0xff]
  %v363 = vld [vmem:[%s1 + $0x970] sm:$0xff]
  %v364 = vld [vmem:[%s1 + $0x978] sm:$0xff]
  %v365 = vld [vmem:[%s1 + $0x980] sm:$0xff]
  %v366 = vld [vmem:[%s1 + $0x988] sm:$0xff]
  %v367 = vld [vmem:[%s1 + $0x990] sm:$0xff]
  %v368 = vld [vmem:[%s1 + $0x998] sm:$0xff]
  %v369 = vld [vmem:[%s1 + $0x9a0] sm:$0xff]
  %v370 = vld [vmem:[%s1 + $0x9a8] sm:$0xff]
  %v371 = vld [vmem:[%s1 + $0x9b0] sm:$0xff]
  %v372 = vld [vmem:[%s1 + $0x9b8] sm:$0xff]
  %v373 = vld [vmem:[%s1 + $0x9c0] sm:$0xff]
  %v374 = vld [vmem:[%s1 + $0x9c8] sm:$0xff]
  %v375 = vld [vmem:[%s1 + $0x9d0] sm:$0xff]
  %v376 = vld [vmem:[%s1 + $0x9d8] sm:$0xff]
  %v377 = vld [vmem:[%s1 + $0x9e0] sm:$0xff]
  %v378 = vld [vmem:[%s1 + $0x9e8] sm:$0xff]
  %v379 = vld [vmem:[%s1 + $0x9f0] sm:$0xff]
  %v380 = vld [vmem:[%s1 + $0x9f8] sm:$0xff]
  %v381 = vld [vmem:[%s1 + $0xa00] sm:$0xff]
  %v382 = vld [vmem:[%s1 + $0xa08] sm:$0xff]
  %v383 = vld [vmem:[%s1 + $0xa10] sm:$0xff]
  %v384 = vld [vmem:[%s1 + $0xa18] sm:$0xff]
  %v385 = vld [vmem:[%s1 + $0xa20] sm:$0xff]
  %v386 = vld [vmem:[%s1 + $0xa28] sm:$0xff]
  %v387 = vld [vmem:[%s1 + $0xa30] sm:$0xff]
  %v388 = vld [vmem:[%s1 + $0xa38] sm:$0xff]
  %v389 = vld [vmem:[%s1 + $0xa40] sm:$0xff]
  %v390 = vld [vmem:[%s1 + $0xa48] sm:$0xff]
  %v391 = vld [vmem:[%s1 + $0xa50] sm:$0xff]
  %v392 = vld [vmem:[%s1 + $0xa58] sm:$0xff]
  %v393 = vld [vmem:[%s1 + $0xa60] sm:$0xff]
  %v394 = vld [vmem:[%s1 + $0xa68] sm:$0xff]
  %v395 = vld [vmem:[%s1 + $0xa70] sm:$0xff]
  %v396 = vld [vmem:[%s1 + $0xa78] sm:$0xff]
  %v397 = vld [vmem:[%s1 + $0xa80] sm:$0xff]
  %v398 = vld [vmem:[%s1 + $0xa88] sm:$0xff]
  %v399 = vld [vmem:[%s1 + $0xa90] sm:$0xff]
  %v400 = vld [vmem:[%s1 + $0xa98] sm:$0xff]
  %v401 = vld [vmem:[%s1 + $0xaa0] sm:$0xff]
  %v402 = vld [vmem:[%s1 + $0xaa8] sm:$0xff]
  %v403 = vld [vmem:[%s1 + $0xab0] sm:$0xff]
  %v404 = vld [vmem:[%s1 + $0xab8] sm:$0xff]
  %v405 = vld [vmem:[%s1 + $0xac0] sm:$0xff]
  %v406 = vld [vmem:[%s1 + $0xac8] sm:$0xff]
  %v407 = vld [vmem:[%s1 + $0xad0] sm:$0xff]
  %v408 = vld [vmem:[%s1 + $0xad8] sm:$0xff]
  %v409 = vld [vmem:[%s1 + $0xae0] sm:$0xff]
  %v410 = vld [vmem:[%s1 + $0xae8] sm:$0xff]
  %v411 = vld [vmem:[%s1 + $0xaf0] sm:$0xff]
  %v412 = vld [vmem:[%s1 + $0xaf8] sm:$0xff]
  %v413 = vld [vmem:[%s1 + $0xb00] sm:$0xff]
  %v414 = vld [vmem:[%s1 + $0xb08] sm:$0xff]
  %v415 = vld [vmem:[%s1 + $0xb10] sm:$0xff]
  %v416 = vld [vmem:[%s1 + $0xb18] sm:$0xff]
  %v417 = vld [vmem:[%s1 + $0xb20] sm:$0xff]
  %v418 = vld [vmem:[%s1 + $0xb28] sm:$0xff]
  %v419 = vld [vmem:[%s1 + $0xb30] sm:$0xff]
  %v420 = vld [vmem:[%s1 + $0xb38] sm:$0xff]
  %v421 = vld [vmem:[%s1 + $0xb40] sm:$0xff]
  %v422 = vld [vmem:[%s1 + $0xb48] sm:$0xff]
  %v423 = vld [vmem:[%s1 + $0xb50] sm:$0xff]
  %v424 = vld [vmem:[%s1 + $0xb58] sm:$0xff]
  %v425 = vld [vmem:[%s1 + $0xb60] sm:$0xff]
  %v426 = vld [vmem:[%s1 + $0xb68] sm:$0xff]
  %v427 = vld [vmem:[%s1 + $0xb70] sm:$0xff]
  %v428 = vld [vmem:[%s1 + $0xb78] sm:$0xff]
  %v429 = vld [vmem:[%s1 + $0xb80] sm:$0xff]
  %v430 = vld [vmem:[%s1 + $0xb88] sm:$0xff]
  %v431 = vld [vmem:[%s1 + $0xb90] sm:$0xff]
  %v432 = vld [vmem:[%s1 + $0xb98] sm:$0xff]
  %v433 = vld [vmem:[%s1 + $0xba0] sm:$0xff]
  %v434 = vld [vmem:[%s1 + $0xba8] sm:$0xff]
  %v435 = vld [vmem:[%s1 + $0xbb0] sm:$0xff]
  %v436 = vld [vmem:[%s1 + $0xbb8] sm:$0xff]
  %v437 = vld [vmem:[%s1 + $0xbc0] sm:$0xff]
  %v438 = vld [vmem:[%s1 + $0xbc8] sm:$0xff]
  %v439 = vld [vmem:[%s1 + $0xbd0] sm:$0xff]
  %v440 = vld [vmem:[%s1 + $0xbd8] sm:$0xff]
  %v441 = vld [vmem:[%s1 + $0xbe0] sm:$0xff]
  %v442 = vld [vmem:[%s1 + $0xbe8] sm:$0xff]
  %v443 = vld [vmem:[%s1 + $0xbf0] sm:$0xff]
  %v444 = vld [vmem:[%s1 + $0xbf8] sm:$0xff]
  %v445 = vld [vmem:[%s1 + $0xc00] sm:$0xff]
  %v446 = vld [vmem:[%s1 + $0xc08] sm:$0xff]
  %v447 = vld [vmem:[%s1 + $0xc10] sm:$0xff]
  %v448 = vld [vmem:[%s1 + $0xc18] sm:$0xff]
  %v449 = vld [vmem:[%s1 + $0xc20] sm:$0xff]
  %v450 = vld [vmem:[%s1 + $0xc28] sm:$0xff]
  %v451 = vld [vmem:[%s1 + $0xc30] sm:$0xff]
  %v452 = vld [vmem:[%s1 + $0xc38] sm:$0xff]
  %v453 = vld [vmem:[%s1 + $0xc40] sm:$0xff]
  %v454 = vld [vmem:[%s1 + $0xc48] sm:$0xff]
  %v455 = vld [vmem:[%s1 + $0xc50] sm:$0xff]
  %v456 = vld [vmem:[%s1 + $0xc58] sm:$0xff]
  %v457 = vld [vmem:[%s1 + $0xc60] sm:$0xff]
  %v458 = vld [vmem:[%s1 + $0xc68] sm:$0xff]
  %v459 = vld [vmem:[%s1 + $0xc70] sm:$0xff]
  %v460 = vld [vmem:[%s1 + $0xc78] sm:$0xff]
  %v461 = vld [vmem:[%s1 + $0xc80] sm:$0xff]
  %v462 = vld [vmem:[%s1 + $0xc88] sm:$0xff]
  %v463 = vld [vmem:[%s1 + $0xc90] sm:$0xff]
  %v464 = vld [vmem:[%s1 + $0xc98] sm:$0xff]
  %v465 = vld [vmem:[%s1 + $0xca0] sm:$0xff]
  %v466 = vld [vmem:[%s1 + $0xca8] sm:$0xff]
  %v467 = vld [vmem:[%s1 + $0xcb0] sm:$0xff]
  %v468 = vld [vmem:[%s1 + $0xcb8] sm:$0xff]
  %v469 = vld [vmem:[%s1 + $0xcc0] sm:$0xff]
  %v470 = vld [vmem:[%s1 + $0xcc8] sm:$0xff]
  %v471 = vld [vmem:[%s1 + $0xcd0] sm:$0xff]
  %v472 = vld [vmem:[%s1 + $0xcd8] sm:$0xff]
  %v473 = vld [vmem:[%s1 + $0xce0] sm:$0xff]
  %v474 = vld [vmem:[%s1 + $0xce8] sm:$0xff]
  %v475 = vld [vmem:[%s1 + $0xcf0] sm:$0xff]
  %v476 = vld [vmem:[%s1 + $0xcf8] sm:$0xff]
  %v477 = vld [vmem:[%s1 + $0xd00] sm:$0xff]
  %v478 = vld [vmem:[%s1 + $0xd08] sm:$0xff]
  %v479 = vld [vmem:[%s1 + $0xd10] sm:$0xff]
  %v480 = vld [vmem:[%s1 + $0xd18] sm:$0xff]
  %v481 = vld [vmem:[%s1 + $0xd20] sm:$0xff]
  %v482 = vld [vmem:[%s1 + $0xd28] sm:$0xff]
  %v483 = vld [vmem:[%s1 + $0xd30] sm:$0xff]
  %v484 = vld [vmem:[%s1 + $0xd38] sm:$0xff]
  %v485 = vld [vmem:[%s1 + $0xd40] sm:$0xff]
  %v486 = vld [vmem:[%s1 + $0xd48] sm:$0xff]
  %v487 = vld [vmem:[%s1 + $0xd50] sm:$0xff]
  %v488 = vld [vmem:[%s1 + $0xd58] sm:$0xff]
  %v489 = vld [vmem:[%s1 + $0xd60] sm:$0xff]
  %v490 = vld [vmem:[%s1 + $0xd68] sm:$0xff]
  %v491 = vld [vmem:[%s1 + $0xd70] sm:$0xff]
  %v492 = vld [vmem:[%s1 + $0xd78] sm:$0xff]
  %v493 = vld [vmem:[%s1 + $0xd80] sm:$0xff]
  %v494 = vld [vmem:[%s1 + $0xd88] sm:$0xff]
  %v495 = vld [vmem:[%s1 + $0xd90] sm:$0xff]
  %v496 = vld [vmem:[%s1 + $0xd98] sm:$0xff]
  %v497 = vld [vmem:[%s1 + $0xda0] sm:$0xff]
  %v498 = vld [vmem:[%s1 + $0xda8] sm:$0xff]
  %v499 = vld [vmem:[%s1 + $0xdb0] sm:$0xff]
  %v500 = vld [vmem:[%s1 + $0xdb8] sm:$0xff]
  %v501 = vld [vmem:[%s1 + $0xdc0] sm:$0xff]
  %v502 = vld [vmem:[%s1 + $0xdc8] sm:$0xff]
  %v503 = vld [vmem:[%s1 + $0xdd0] sm:$0xff]
  %v504 = vld [vmem:[%s1 + $0xdd8] sm:$0xff]
  %v505 = vld [vmem:[%s1 + $0xde0] sm:$0xff]
  %v506 = vld [vmem:[%s1 + $0xde8] sm:$0xff]
  %v507 = vld [vmem:[%s1 + $0xdf0] sm:$0xff]
  %v508 = vld [vmem:[%s1 + $0xdf8] sm:$0xff]
  %v509 = vld [vmem:[%s1 + $0xe00] sm:$0xff]
  %v510 = vld [vmem:[%s1 + $0xe08] sm:$0xff]
  %v511 = vld [vmem:[%s1 + $0xe10] sm:$0xff]
  %v512 = vld [vmem:[%s1 + $0xe18] sm:$0xff]
  %v513 = vld [vmem:[%s1 + $0xe20] sm:$0xff]
  %v514 = vld [vmem:[%s1 + $0xe28] sm:$0xff]
  %v515 = vld [vmem:[%s1 + $0xe30] sm:$0xff]
  %v516 = vld [vmem:[%s1 + $0xe38] sm:$0xff]
  %v517 = vld [vmem:[%s1 + $0xe40] sm:$0xff]
  %v518 = vld [vmem:[%s1 + $0xe48] sm:$0xff]
  %v519 = vld [vmem:[%s1 + $0xe50] sm:$0xff]
  %v520 = vld [vmem:[%s1 + $0xe58] sm:$0xff]
  %v521 = vld [vmem:[%s1 + $0xe60] sm:$0xff]
  %v522 = vld [vmem:[%s1 + $0xe68] sm:$0xff]
  %v523 = vld [vmem:[%s1 + $0xe70] sm:$0xff]
  %v524 = vld [vmem:[%s1 + $0xe78] sm:$0xff]
  %v525 = vld [vmem:[%s1 + $0xe80] sm:$0xff]
  %v526 = vld [vmem:[%s1 + $0xe88] sm:$0xff]
  %v527 = vld [vmem:[%s1 + $0xe90] sm:$0xff]
  %v528 = vld [vmem:[%s1 + $0xe98] sm:$0xff]
  %v529 = vld [vmem:[%s1 + $0xea0] sm:$0xff]
  %v530 = vld [vmem:[%s1 + $0xea8] sm:$0xff]
  %v531 = vld [vmem:[%s1 + $0xeb0] sm:$0xff]
  %v532 = vld [vmem:[%s1 + $0xeb8] sm:$0xff]
  %v533 = vld [vmem:[%s1 + $0xec0] sm:$0xff]
  %v534 = vld [vmem:[%s1 + $0xec8] sm:$0xff]
  %v535 = vld [vmem:[%s1 + $0xed0] sm:$0xff]
  %v536 = vld [vmem:[%s1 + $0xed8] sm:$0xff]
  %v537 = vld [vmem:[%s1 + $0xee0] sm:$0xff]
  %v538 = vld [vmem:[%s1 + $0xee8] sm:$0xff]
  %v539 = vld [vmem:[%s1 + $0xef0] sm:$0xff]
  %v540 = vld [vmem:[%s1 + $0xef8] sm:$0xff]
  %v541 = vld [vmem:[%s1 + $0xf00] sm:$0xff]
  %v542 = vld [vmem:[%s1 + $0xf08] sm:$0xff]
  %v543 = vld [vmem:[%s1 + $0xf10] sm:$0xff]
  %v544 = vld [vmem:[%s1 + $0xf18] sm:$0xff]
  %v545 = vld [vmem:[%s1 + $0xf20] sm:$0xff]
  %v546 = vld [vmem:[%s1 + $0xf28] sm:$0xff]
  %v547 = vld [vmem:[%s1 + $0xf30] sm:$0xff]
  %v548 = vld [vmem:[%s1 + $0xf38] sm:$0xff]
  %v549 = vld [vmem:[%s1 + $0xf40] sm:$0xff]
  %v550 = vld [vmem:[%s1 + $0xf48] sm:$0xff]
  %v551 = vld [vmem:[%s1 + $0xf50] sm:$0xff]
  %v552 = vld [vmem:[%s1 + $0xf58] sm:$0xff]
  %v553 = vld [vmem:[%s1 + $0xf60] sm:$0xff]
  %v554 = vld [vmem:[%s1 + $0xf68] sm:$0xff]
  %v555 = vld [vmem:[%s1 + $0xf70] sm:$0xff]
  %v556 = vld [vmem:[%s1 + $0xf78] sm:$0xff]
  %v557 = vld [vmem:[%s1 + $0xf80] sm:$0xff]
  %v558 = vld [vmem:[%s1 + $0xf88] sm:$0xff]
  %v559 = vld [vmem:[%s1 + $0xf90] sm:$0xff]
  %v560 = vld [vmem:[%s1 + $0xf98] sm:$0xff]
  %v561 = vld [vmem:[%s1 + $0xfa0] sm:$0xff]
  %v562 = vld [vmem:[%s1 + $0xfa8] sm:$0xff]
  %v563 = vld [vmem:[%s1 + $0xfb0] sm:$0xff]
  %v564 = vld [vmem:[%s1 + $0xfb8] sm:$0xff]
  %v565 = vld [vmem:[%s1 + $0xfc0] sm:$0xff]
  %v566 = vld [vmem:[%s1 + $0xfc8] sm:$0xff]
  %v567 = vld [vmem:[%s1 + $0xfd0] sm:$0xff]
  %v568 = vld [vmem:[%s1 + $0xfd8] sm:$0xff]
  %v569 = vld [vmem:[%s1 + $0xfe0] sm:$0xff]
  %v570 = vld [vmem:[%s1 + $0xfe8] sm:$0xff]
  %v571 = vld [vmem:[%s1 + $0xff0] sm:$0xff]
  %v572 = vld [vmem:[%s1 + $0xff8] sm:$0xff]
  %v575 = vcombine.high %v59, %v59
  %v577 = vunpack.c.l.s4 1983009808
  %v578 = vunpack.c.0.s8 %v577
  %v579 = vlaneseq
  %v580 = vshrl.u32 %v579, 7
  %v581 = vsub.s32 %v578, %v580
  %v582 = vrot.slane %v59, %v581
  %v584 = vunpack.c.l.s4 1983009808
  %v585 = vunpack.c.0.s8 %v584
  %v586 = vlaneseq
  %v587 = vshrl.u32 %v586, 7
  %v588 = vsub.s32 %v585, %v587
  %v589 = vrot.slane %v575, %v588
  %v590 = vcombine.high %v582, %v582
  %v591 = vcombine.high %v589, %v589
  %v592 = vcombine.high %v60, %v60
  %v594 = vunpack.c.l.s4 1983009808
  %v595 = vunpack.c.0.s8 %v594
  %v596 = vlaneseq
  %v597 = vshrl.u32 %v596, 7
  %v598 = vsub.s32 %v595, %v597
  %v599 = vrot.slane %v60, %v598
  %v601 = vunpack.c.l.s4 1983009808
  %v602 = vunpack.c.0.s8 %v601
  %v603 = vlaneseq
  %v604 = vshrl.u32 %v603, 7
  %v605 = vsub.s32 %v602, %v604
  %v606 = vrot.slane %v592, %v605
  %v607 = vcombine.high %v599, %v599
  %v608 = vcombine.high %v606, %v606
  %617 = vmatprep.subr.mxu0 %v62
  %618 = vmatpush1.msra.mxu0 %v61
  %619 = vmatprep.subr.mxu0 %v66
  %620 = vmatpush1.msra.mxu0 %v65
  %621 = vmatprep.subr.mxu0 %v70
  %622 = vmatpush1.msra.mxu0 %v69
  %623 = vmatprep.subr.mxu0 %v74
  %624 = vmatpush1.msra.mxu0 %v73
  %625 = vmatprep.subr.mxu0 %v78
  %626 = vmatpush1.msra.mxu0 %v77
  %627 = vmatprep.subr.mxu0 %v82
  %628 = vmatpush1.msra.mxu0 %v81
  %629 = vmatprep.subr.mxu0 %v86
  %630 = vmatpush1.msra.mxu0 %v85
  %631 = vmatprep.subr.mxu0 %v90
  %632 = vmatpush1.msra.mxu0 %v89
  %633 = vmatprep.subr.mxu0 %v94
  %634 = vmatpush1.msra.mxu0 %v93
  %635 = vmatprep.subr.mxu0 %v98
  %636 = vmatpush1.msra.mxu0 %v97
  %637 = vmatprep.subr.mxu0 %v102
  %638 = vmatpush1.msra.mxu0 %v101
  %639 = vmatprep.subr.mxu0 %v106
  %640 = vmatpush1.msra.mxu0 %v105
  %641 = vmatprep.subr.mxu0 %v110
  %642 = vmatpush1.msra.mxu0 %v109
  %643 = vmatprep.subr.mxu0 %v114
  %644 = vmatpush1.msra.mxu0 %v113
  %645 = vmatprep.subr.mxu0 %v118
  %646 = vmatpush1.msra.mxu0 %v117
  %647 = vmatprep.subr.mxu0 %v122
  %648 = vmatpush1.msra.mxu0 %v121
  %649 = vmatprep.subr.mxu0 %v126
  %650 = vmatpush1.msra.mxu0 %v125
  %651 = vmatprep.subr.mxu0 %v130
  %652 = vmatpush1.msra.mxu0 %v129
  %653 = vmatprep.subr.mxu0 %v134
  %654 = vmatpush1.msra.mxu0 %v133
  %655 = vmatprep.subr.mxu0 %v138
  %656 = vmatpush1.msra.mxu0 %v137
  %657 = vmatprep.subr.mxu0 %v142
  %658 = vmatpush1.msra.mxu0 %v141
  %659 = vmatprep.subr.mxu0 %v146
  %660 = vmatpush1.msra.mxu0 %v145
  %661 = vmatprep.subr.mxu0 %v150
  %662 = vmatpush1.msra.mxu0 %v149
  %663 = vmatprep.subr.mxu0 %v154
  %664 = vmatpush1.msra.mxu0 %v153
  %665 = vmatprep.subr.mxu0 %v158
  %666 = vmatpush1.msra.mxu0 %v157
  %667 = vmatprep.subr.mxu0 %v162
  %668 = vmatpush1.msra.mxu0 %v161
  %669 = vmatprep.subr.mxu0 %v166
  %670 = vmatpush1.msra.mxu0 %v165
  %671 = vmatprep.subr.mxu0 %v170
  %672 = vmatpush1.msra.mxu0 %v169
  %673 = vmatprep.subr.mxu0 %v174
  %674 = vmatpush1.msra.mxu0 %v173
  %675 = vmatprep.subr.mxu0 %v178
  %676 = vmatpush1.msra.mxu0 %v177
  %677 = vmatprep.subr.mxu0 %v182
  %678 = vmatpush1.msra.mxu0 %v181
  %679 = vmatprep.subr.mxu0 %v186
  %680 = vmatpush1.msra.mxu0 %v185
  %681 = vmatprep.mubr.f32.mxu0 %v590
  %682 = vmatmul.mubr.f32.gmra.mrb[0].mxu0 %v582
  %v683 = vpop.f32.mrb[0].mxu0
  %v684 = vadd.f32 0.0, %v683
  %v685 = vpop.f32.mrb[0].mxu0
  %v686 = vadd.f32 0.0, %v685
  %687 = vdwg.mxu0
  %688 = vmatprep.subr.mxu0 %v190
  %689 = vmatpush1.msra.mxu0 %v189
  %690 = vmatprep.subr.mxu0 %v194
  %691 = vmatpush1.msra.mxu0 %v193
  %692 = vmatprep.subr.mxu0 %v198
  %693 = vmatpush1.msra.mxu0 %v197
  %694 = vmatprep.subr.mxu0 %v202
  %695 = vmatpush1.msra.mxu0 %v201
  %696 = vmatprep.subr.mxu0 %v206
  %697 = vmatpush1.msra.mxu0 %v205
  %698 = vmatprep.subr.mxu0 %v210
  %699 = vmatpush1.msra.mxu0 %v209
  %700 = vmatprep.subr.mxu0 %v214
  %701 = vmatpush1.msra.mxu0 %v213
  %702 = vmatprep.subr.mxu0 %v218
  %703 = vmatpush1.msra.mxu0 %v217
  %704 = vmatprep.subr.mxu0 %v222
  %705 = vmatpush1.msra.mxu0 %v221
  %706 = vmatprep.subr.mxu0 %v226
  %707 = vmatpush1.msra.mxu0 %v225
  %708 = vmatprep.subr.mxu0 %v230
  %709 = vmatpush1.msra.mxu0 %v229
  %710 = vmatprep.subr.mxu0 %v234
  %711 = vmatpush1.msra.mxu0 %v233
  %712 = vmatprep.subr.mxu0 %v238
  %713 = vmatpush1.msra.mxu0 %v237
  %714 = vmatprep.subr.mxu0 %v242
  %715 = vmatpush1.msra.mxu0 %v241
  %716 = vmatprep.subr.mxu0 %v246
  %717 = vmatpush1.msra.mxu0 %v245
  %718 = vmatprep.subr.mxu0 %v250
  %719 = vmatpush1.msra.mxu0 %v249
  %720 = vmatprep.subr.mxu0 %v254
  %721 = vmatpush1.msra.mxu0 %v253
  %722 = vmatprep.subr.mxu0 %v258
  %723 = vmatpush1.msra.mxu0 %v257
  %724 = vmatprep.subr.mxu0 %v262
  %725 = vmatpush1.msra.mxu0 %v261
  %726 = vmatprep.subr.mxu0 %v266
  %727 = vmatpush1.msra.mxu0 %v265
  %728 = vmatprep.subr.mxu0 %v270
  %729 = vmatpush1.msra.mxu0 %v269
  %730 = vmatprep.subr.mxu0 %v274
  %731 = vmatpush1.msra.mxu0 %v273
  %732 = vmatprep.subr.mxu0 %v278
  %733 = vmatpush1.msra.mxu0 %v277
  %734 = vmatprep.subr.mxu0 %v282
  %735 = vmatpush1.msra.mxu0 %v281
  %736 = vmatprep.subr.mxu0 %v286
  %737 = vmatpush1.msra.mxu0 %v285
  %738 = vmatprep.subr.mxu0 %v290
  %739 = vmatpush1.msra.mxu0 %v289
  %740 = vmatprep.subr.mxu0 %v294
  %741 = vmatpush1.msra.mxu0 %v293
  %742 = vmatprep.subr.mxu0 %v298
  %743 = vmatpush1.msra.mxu0 %v297
  %744 = vmatprep.subr.mxu0 %v302
  %745 = vmatpush1.msra.mxu0 %v301
  %746 = vmatprep.subr.mxu0 %v306
  %747 = vmatpush1.msra.mxu0 %v305
  %748 = vmatprep.subr.mxu0 %v310
  %749 = vmatpush1.msra.mxu0 %v309
  %750 = vmatprep.subr.mxu0 %v314
  %751 = vmatpush1.msra.mxu0 %v313
  %752 = vmatprep.mubr.f32.mxu0 %v591
  %753 = vmatmul.mubr.f32.gmra.mrb[0].mxu0 %v589
  %v754 = vpop.f32.mrb[0].mxu0
  %v755 = vadd.f32 %v684, %v754
  %v756 = vpop.f32.mrb[0].mxu0
  %v757 = vadd.f32 %v686, %v756
  %758 = vdwg.mxu0
  %759 = vmatprep.subr.mxu0 %v318
  %760 = vmatpush1.msra.mxu0 %v317
  %761 = vmatprep.subr.mxu0 %v322
  %762 = vmatpush1.msra.mxu0 %v321
  %763 = vmatprep.subr.mxu0 %v326
  %764 = vmatpush1.msra.mxu0 %v325
  %765 = vmatprep.subr.mxu0 %v330
  %766 = vmatpush1.msra.mxu0 %v329
  %767 = vmatprep.subr.mxu0 %v334
  %768 = vmatpush1.msra.mxu0 %v333
  %769 = vmatprep.subr.mxu0 %v338
  %770 = vmatpush1.msra.mxu0 %v337
  %771 = vmatprep.subr.mxu0 %v342
  %772 = vmatpush1.msra.mxu0 %v341
  %773 = vmatprep.subr.mxu0 %v346
  %774 = vmatpush1.msra.mxu0 %v345
  %775 = vmatprep.subr.mxu0 %v350
  %776 = vmatpush1.msra.mxu0 %v349
  %777 = vmatprep.subr.mxu0 %v354
  %778 = vmatpush1.msra.mxu0 %v353
  %779 = vmatprep.subr.mxu0 %v358
  %780 = vmatpush1.msra.mxu0 %v357
  %781 = vmatprep.subr.mxu0 %v362
  %782 = vmatpush1.msra.mxu0 %v361
  %783 = vmatprep.subr.mxu0 %v366
  %784 = vmatpush1.msra.mxu0 %v365
  %785 = vmatprep.subr.mxu0 %v370
  %786 = vmatpush1.msra.mxu0 %v369
  %787 = vmatprep.subr.mxu0 %v374
  %788 = vmatpush1.msra.mxu0 %v373
  %789 = vmatprep.subr.mxu0 %v378
  %790 = vmatpush1.msra.mxu0 %v377
  %791 = vmatprep.subr.mxu0 %v382
  %792 = vmatpush1.msra.mxu0 %v381
  %793 = vmatprep.subr.mxu0 %v386
  %794 = vmatpush1.msra.mxu0 %v385
  %795 = vmatprep.subr.mxu0 %v390
  %796 = vmatpush1.msra.mxu0 %v389
  %797 = vmatprep.subr.mxu0 %v394
  %798 = vmatpush1.msra.mxu0 %v393
  %799 = vmatprep.subr.mxu0 %v398
  %800 = vmatpush1.msra.mxu0 %v397
  %801 = vmatprep.subr.mxu0 %v402
  %802 = vmatpush1.msra.mxu0 %v401
  %803 = vmatprep.subr.mxu0 %v406
  %804 = vmatpush1.msra.mxu0 %v405
  %805 = vmatprep.subr.mxu0 %v410
  %806 = vmatpush1.msra.mxu0 %v409
  %807 = vmatprep.subr.mxu0 %v414
  %808 = vmatpush1.msra.mxu0 %v413
  %809 = vmatprep.subr.mxu0 %v418
  %810 = vmatpush1.msra.mxu0 %v417
  %811 = vmatprep.subr.mxu0 %v422
  %812 = vmatpush1.msra.mxu0 %v421
  %813 = vmatprep.subr.mxu0 %v426
  %814 = vmatpush1.msra.mxu0 %v425
  %815 = vmatprep.subr.mxu0 %v430
  %816 = vmatpush1.msra.mxu0 %v429
  %817 = vmatprep.subr.mxu0 %v434
  %818 = vmatpush1.msra.mxu0 %v433
  %819 = vmatprep.subr.mxu0 %v438
  %820 = vmatpush1.msra.mxu0 %v437
  %821 = vmatprep.subr.mxu0 %v442
  %822 = vmatpush1.msra.mxu0 %v441
  %823 = vmatprep.mubr.f32.mxu0 %v607
  %824 = vmatmul.mubr.f32.gmra.mrb[0].mxu0 %v599
  %v825 = vpop.f32.mrb[0].mxu0
  %v826 = vadd.f32 %v755, %v825
  %v827 = vpop.f32.mrb[0].mxu0
  %v828 = vadd.f32 %v757, %v827
  %829 = vdwg.mxu0
  %830 = vmatprep.subr.mxu0 %v446
  %831 = vmatpush1.msra.mxu0 %v445
  %832 = vmatprep.subr.mxu0 %v450
  %833 = vmatpush1.msra.mxu0 %v449
  %834 = vmatprep.subr.mxu0 %v454
  %835 = vmatpush1.msra.mxu0 %v453
  %836 = vmatprep.subr.mxu0 %v458
  %837 = vmatpush1.msra.mxu0 %v457
  %838 = vmatprep.subr.mxu0 %v462
  %839 = vmatpush1.msra.mxu0 %v461
  %840 = vmatprep.subr.mxu0 %v466
  %841 = vmatpush1.msra.mxu0 %v465
  %842 = vmatprep.subr.mxu0 %v470
  %843 = vmatpush1.msra.mxu0 %v469
  %844 = vmatprep.subr.mxu0 %v474
  %845 = vmatpush1.msra.mxu0 %v473
  %846 = vmatprep.subr.mxu0 %v478
  %847 = vmatpush1.msra.mxu0 %v477
  %848 = vmatprep.subr.mxu0 %v482
  %849 = vmatpush1.msra.mxu0 %v481
  %850 = vmatprep.subr.mxu0 %v486
  %851 = vmatpush1.msra.mxu0 %v485
  %852 = vmatprep.subr.mxu0 %v490
  %853 = vmatpush1.msra.mxu0 %v489
  %854 = vmatprep.subr.mxu0 %v494
  %855 = vmatpush1.msra.mxu0 %v493
  %856 = vmatprep.subr.mxu0 %v498
  %857 = vmatpush1.msra.mxu0 %v497
  %858 = vmatprep.subr.mxu0 %v502
  %859 = vmatpush1.msra.mxu0 %v501
  %860 = vmatprep.subr.mxu0 %v506
  %861 = vmatpush1.msra.mxu0 %v505
  %862 = vmatprep.subr.mxu0 %v510
  %863 = vmatpush1.msra.mxu0 %v509
  %864 = vmatprep.subr.mxu0 %v514
  %865 = vmatpush1.msra.mxu0 %v513
  %866 = vmatprep.subr.mxu0 %v518
  %867 = vmatpush1.msra.mxu0 %v517
  %868 = vmatprep.subr.mxu0 %v522
  %869 = vmatpush1.msra.mxu0 %v521
  %870 = vmatprep.subr.mxu0 %v526
  %871 = vmatpush1.msra.mxu0 %v525
  %872 = vmatprep.subr.mxu0 %v530
  %873 = vmatpush1.msra.mxu0 %v529
  %874 = vmatprep.subr.mxu0 %v534
  %875 = vmatpush1.msra.mxu0 %v533
  %876 = vmatprep.subr.mxu0 %v538
  %877 = vmatpush1.msra.mxu0 %v537
  %878 = vmatprep.subr.mxu0 %v542
  %879 = vmatpush1.msra.mxu0 %v541
  %880 = vmatprep.subr.mxu0 %v546
  %881 = vmatpush1.msra.mxu0 %v545
  %882 = vmatprep.subr.mxu0 %v550
  %883 = vmatpush1.msra.mxu0 %v549
  %884 = vmatprep.subr.mxu0 %v554
  %885 = vmatpush1.msra.mxu0 %v553
  %886 = vmatprep.subr.mxu0 %v558
  %887 = vmatpush1.msra.mxu0 %v557
  %888 = vmatprep.subr.mxu0 %v562
  %889 = vmatpush1.msra.mxu0 %v561
  %890 = vmatprep.subr.mxu0 %v566
  %891 = vmatpush1.msra.mxu0 %v565
  %892 = vmatprep.subr.mxu0 %v570
  %893 = vmatpush1.msra.mxu0 %v569
  %894 = vmatprep.mubr.f32.mxu0 %v608
  %895 = vmatmul.mubr.f32.gmra.mrb[0].mxu0 %v606
  %v896 = vpop.f32.mrb[0].mxu0
  %v897 = vadd.f32 %v826, %v896
  %v898 = vpop.f32.mrb[0].mxu0
  %v899 = vadd.f32 %v828, %v898
  %900 = vdwg.mxu0
  %901 = vmatprep.subr.mxu0 %v64
  %902 = vmatpush1.msra.mxu0 %v63
  %903 = vmatprep.subr.mxu0 %v68
  %904 = vmatpush1.msra.mxu0 %v67
  %905 = vmatprep.subr.mxu0 %v72
  %906 = vmatpush1.msra.mxu0 %v71
  %907 = vmatprep.subr.mxu0 %v76
  %908 = vmatpush1.msra.mxu0 %v75
  %909 = vmatprep.subr.mxu0 %v80
  %910 = vmatpush1.msra.mxu0 %v79
  %911 = vmatprep.subr.mxu0 %v84
  %912 = vmatpush1.msra.mxu0 %v83
  %913 = vmatprep.subr.mxu0 %v88
  %914 = vmatpush1.msra.mxu0 %v87
  %915 = vmatprep.subr.mxu0 %v92
  %916 = vmatpush1.msra.mxu0 %v91
  %917 = vmatprep.subr.mxu0 %v96
  %918 = vmatpush1.msra.mxu0 %v95
  %919 = vmatprep.subr.mxu0 %v100
  %920 = vmatpush1.msra.mxu0 %v99
  %921 = vmatprep.subr.mxu0 %v104
  %922 = vmatpush1.msra.mxu0 %v103
  %923 = vmatprep.subr.mxu0 %v108
  %924 = vmatpush1.msra.mxu0 %v107
  %925 = vmatprep.subr.mxu0 %v112
  %926 = vmatpush1.msra.mxu0 %v111
  %927 = vmatprep.subr.mxu0 %v116
  %928 = vmatpush1.msra.mxu0 %v115
  %929 = vmatprep.subr.mxu0 %v120
  %930 = vmatpush1.msra.mxu0 %v119
  %931 = vmatprep.subr.mxu0 %v124
  %932 = vmatpush1.msra.mxu0 %v123
  %933 = vmatprep.subr.mxu0 %v128
  %934 = vmatpush1.msra.mxu0 %v127
  %935 = vmatprep.subr.mxu0 %v132
  %936 = vmatpush1.msra.mxu0 %v131
  %937 = vmatprep.subr.mxu0 %v136
  %938 = vmatpush1.msra.mxu0 %v135
  %939 = vmatprep.subr.mxu0 %v140
  %940 = vmatpush1.msra.mxu0 %v139
  %941 = vmatprep.subr.mxu0 %v144
  %942 = vmatpush1.msra.mxu0 %v143
  %943 = vmatprep.subr.mxu0 %v148
  %944 = vmatpush1.msra.mxu0 %v147
  %945 = vmatprep.subr.mxu0 %v152
  %946 = vmatpush1.msra.mxu0 %v151
  %947 = vmatprep.subr.mxu0 %v156
  %948 = vmatpush1.msra.mxu0 %v155
  %949 = vmatprep.subr.mxu0 %v160
  %950 = vmatpush1.msra.mxu0 %v159
  %951 = vmatprep.subr.mxu0 %v164
  %952 = vmatpush1.msra.mxu0 %v163
  %953 = vmatprep.subr.mxu0 %v168
  %954 = vmatpush1.msra.mxu0 %v167
  %955 = vmatprep.subr.mxu0 %v172
  %956 = vmatpush1.msra.mxu0 %v171
  %957 = vmatprep.subr.mxu0 %v176
  %958 = vmatpush1.msra.mxu0 %v175
  %959 = vmatprep.subr.mxu0 %v180
  %960 = vmatpush1.msra.mxu0 %v179
  %961 = vmatprep.subr.mxu0 %v184
  %962 = vmatpush1.msra.mxu0 %v183
  %963 = vmatprep.subr.mxu0 %v188
  %964 = vmatpush1.msra.mxu0 %v187
  %965 = vmatprep.mubr.f32.mxu0 %v590
  %966 = vmatmul.mubr.f32.gmra.mrb[0].mxu0 %v582
  %v967 = vpop.f32.mrb[0].mxu0
  %v968 = vadd.f32 0.0, %v967
  %v969 = vpop.f32.mrb[0].mxu0
  %v970 = vadd.f32 0.0, %v969
  %971 = vdwg.mxu0
  %972 = vmatprep.subr.mxu0 %v192
  %973 = vmatpush1.msra.mxu0 %v191
  %974 = vmatprep.subr.mxu0 %v196
  %975 = vmatpush1.msra.mxu0 %v195
  %976 = vmatprep.subr.mxu0 %v200
  %977 = vmatpush1.msra.mxu0 %v199
  %978 = vmatprep.subr.mxu0 %v204
  %979 = vmatpush1.msra.mxu0 %v203
  %980 = vmatprep.subr.mxu0 %v208
  %981 = vmatpush1.msra.mxu0 %v207
  %982 = vmatprep.subr.mxu0 %v212
  %983 = vmatpush1.msra.mxu0 %v211
  %984 = vmatprep.subr.mxu0 %v216
  %985 = vmatpush1.msra.mxu0 %v215
  %986 = vmatprep.subr.mxu0 %v220
  %987 = vmatpush1.msra.mxu0 %v219
  %988 = vmatprep.subr.mxu0 %v224
  %989 = vmatpush1.msra.mxu0 %v223
  %990 = vmatprep.subr.mxu0 %v228
  %991 = vmatpush1.msra.mxu0 %v227
  %992 = vmatprep.subr.mxu0 %v232
  %993 = vmatpush1.msra.mxu0 %v231
  %994 = vmatprep.subr.mxu0 %v236
  %995 = vmatpush1.msra.mxu0 %v235
  %996 = vmatprep.subr.mxu0 %v240
  %997 = vmatpush1.msra.mxu0 %v239
  %998 = vmatprep.subr.mxu0 %v244
  %999 = vmatpush1.msra.mxu0 %v243
  %1000 = vmatprep.subr.mxu0 %v248
  %1001 = vmatpush1.msra.mxu0 %v247
  %1002 = vmatprep.subr.mxu0 %v252
  %1003 = vmatpush1.msra.mxu0 %v251
  %1004 = vmatprep.subr.mxu0 %v256
  %1005 = vmatpush1.msra.mxu0 %v255
  %1006 = vmatprep.subr.mxu0 %v260
  %1007 = vmatpush1.msra.mxu0 %v259
  %1008 = vmatprep.subr.mxu0 %v264
  %1009 = vmatpush1.msra.mxu0 %v263
  %1010 = vmatprep.subr.mxu0 %v268
  %1011 = vmatpush1.msra.mxu0 %v267
  %1012 = vmatprep.subr.mxu0 %v272
  %1013 = vmatpush1.msra.mxu0 %v271
  %1014 = vmatprep.subr.mxu0 %v276
  %1015 = vmatpush1.msra.mxu0 %v275
  %1016 = vmatprep.subr.mxu0 %v280
  %1017 = vmatpush1.msra.mxu0 %v279
  %1018 = vmatprep.subr.mxu0 %v284
  %1019 = vmatpush1.msra.mxu0 %v283
  %1020 = vmatprep.subr.mxu0 %v288
  %1021 = vmatpush1.msra.mxu0 %v287
  %1022 = vmatprep.subr.mxu0 %v292
  %1023 = vmatpush1.msra.mxu0 %v291
  %1024 = vmatprep.subr.mxu0 %v296
  %1025 = vmatpush1.msra.mxu0 %v295
  %1026 = vmatprep.subr.mxu0 %v300
  %1027 = vmatpush1.msra.mxu0 %v299
  %1028 = vmatprep.subr.mxu0 %v304
  %1029 = vmatpush1.msra.mxu0 %v303
  %1030 = vmatprep.subr.mxu0 %v308
  %1031 = vmatpush1.msra.mxu0 %v307
  %1032 = vmatprep.subr.mxu0 %v312
  %1033 = vmatpush1.msra.mxu0 %v311
  %1034 = vmatprep.subr.mxu0 %v316
  %1035 = vmatpush1.msra.mxu0 %v315
  %1036 = vmatprep.mubr.f32.mxu0 %v591
  %1037 = vmatmul.mubr.f32.gmra.mrb[0].mxu0 %v589
  %v1038 = vpop.f32.mrb[0].mxu0
  %v1039 = vadd.f32 %v968, %v1038
  %v1040 = vpop.f32.mrb[0].mxu0
  %v1041 = vadd.f32 %v970, %v1040
  %1042 = vdwg.mxu0
  %1043 = vmatprep.subr.mxu0 %v320
  %1044 = vmatpush1.msra.mxu0 %v319
  %1045 = vmatprep.subr.mxu0 %v324
  %1046 = vmatpush1.msra.mxu0 %v323
  %1047 = vmatprep.subr.mxu0 %v328
  %1048 = vmatpush1.msra.mxu0 %v327
  %1049 = vmatprep.subr.mxu0 %v332
  %1050 = vmatpush1.msra.mxu0 %v331
  %1051 = vmatprep.subr.mxu0 %v336
  %1052 = vmatpush1.msra.mxu0 %v335
  %1053 = vmatprep.subr.mxu0 %v340
  %1054 = vmatpush1.msra.mxu0 %v339
  %1055 = vmatprep.subr.mxu0 %v344
  %1056 = vmatpush1.msra.mxu0 %v343
  %1057 = vmatprep.subr.mxu0 %v348
  %1058 = vmatpush1.msra.mxu0 %v347
  %1059 = vmatprep.subr.mxu0 %v352
  %1060 = vmatpush1.msra.mxu0 %v351
  %1061 = vmatprep.subr.mxu0 %v356
  %1062 = vmatpush1.msra.mxu0 %v355
  %1063 = vmatprep.subr.mxu0 %v360
  %1064 = vmatpush1.msra.mxu0 %v359
  %1065 = vmatprep.subr.mxu0 %v364
  %1066 = vmatpush1.msra.mxu0 %v363
  %1067 = vmatprep.subr.mxu0 %v368
  %1068 = vmatpush1.msra.mxu0 %v367
  %1069 = vmatprep.subr.mxu0 %v372
  %1070 = vmatpush1.msra.mxu0 %v371
  %1071 = vmatprep.subr.mxu0 %v376
  %1072 = vmatpush1.msra.mxu0 %v375
  %1073 = vmatprep.subr.mxu0 %v380
  %1074 = vmatpush1.msra.mxu0 %v379
  %1075 = vmatprep.subr.mxu0 %v384
  %1076 = vmatpush1.msra.mxu0 %v383
  %1077 = vmatprep.subr.mxu0 %v388
  %1078 = vmatpush1.msra.mxu0 %v387
  %1079 = vmatprep.subr.mxu0 %v392
  %1080 = vmatpush1.msra.mxu0 %v391
  %1081 = vmatprep.subr.mxu0 %v396
  %1082 = vmatpush1.msra.mxu0 %v395
  %1083 = vmatprep.subr.mxu0 %v400
  %1084 = vmatpush1.msra.mxu0 %v399
  %1085 = vmatprep.subr.mxu0 %v404
  %1086 = vmatpush1.msra.mxu0 %v403
  %1087 = vmatprep.subr.mxu0 %v408
  %1088 = vmatpush1.msra.mxu0 %v407
  %1089 = vmatprep.subr.mxu0 %v412
  %1090 = vmatpush1.msra.mxu0 %v411
  %1091 = vmatprep.subr.mxu0 %v416
  %1092 = vmatpush1.msra.mxu0 %v415
  %1093 = vmatprep.subr.mxu0 %v420
  %1094 = vmatpush1.msra.mxu0 %v419
  %1095 = vmatprep.subr.mxu0 %v424
  %1096 = vmatpush1.msra.mxu0 %v423
  %1097 = vmatprep.subr.mxu0 %v428
  %1098 = vmatpush1.msra.mxu0 %v427
  %1099 = vmatprep.subr.mxu0 %v432
  %1100 = vmatpush1.msra.mxu0 %v431
  %1101 = vmatprep.subr.mxu0 %v436
  %1102 = vmatpush1.msra.mxu0 %v435
  %1103 = vmatprep.subr.mxu0 %v440
  %1104 = vmatpush1.msra.mxu0 %v439
  %1105 = vmatprep.subr.mxu0 %v444
  %1106 = vmatpush1.msra.mxu0 %v443
  %1107 = vmatprep.mubr.f32.mxu0 %v607
  %1108 = vmatmul.mubr.f32.gmra.mrb[0].mxu0 %v599
  %v1109 = vpop.f32.mrb[0].mxu0
  %v1110 = vadd.f32 %v1039, %v1109
  %v1111 = vpop.f32.mrb[0].mxu0
  %v1112 = vadd.f32 %v1041, %v1111
  %1113 = vdwg.mxu0
  %1114 = vmatprep.subr.mxu0 %v448
  %1115 = vmatpush1.msra.mxu0 %v447
  %1116 = vmatprep.subr.mxu0 %v452
  %1117 = vmatpush1.msra.mxu0 %v451
  %1118 = vmatprep.subr.mxu0 %v456
  %1119 = vmatpush1.msra.mxu0 %v455
  %1120 = vmatprep.subr.mxu0 %v460
  %1121 = vmatpush1.msra.mxu0 %v459
  %1122 = vmatprep.subr.mxu0 %v464
  %1123 = vmatpush1.msra.mxu0 %v463
  %1124 = vmatprep.subr.mxu0 %v468
  %1125 = vmatpush1.msra.mxu0 %v467
  %1126 = vmatprep.subr.mxu0 %v472
  %1127 = vmatpush1.msra.mxu0 %v471
  %1128 = vmatprep.subr.mxu0 %v476
  %1129 = vmatpush1.msra.mxu0 %v475
  %1130 = vmatprep.subr.mxu0 %v480
  %1131 = vmatpush1.msra.mxu0 %v479
  %1132 = vmatprep.subr.mxu0 %v484
  %1133 = vmatpush1.msra.mxu0 %v483
  %1134 = vmatprep.subr.mxu0 %v488
  %1135 = vmatpush1.msra.mxu0 %v487
  %1136 = vmatprep.subr.mxu0 %v492
  %1137 = vmatpush1.msra.mxu0 %v491
  %1138 = vmatprep.subr.mxu0 %v496
  %1139 = vmatpush1.msra.mxu0 %v495
  %1140 = vmatprep.subr.mxu0 %v500
  %1141 = vmatpush1.msra.mxu0 %v499
  %1142 = vmatprep.subr.mxu0 %v504
  %1143 = vmatpush1.msra.mxu0 %v503
  %1144 = vmatprep.subr.mxu0 %v508
  %1145 = vmatpush1.msra.mxu0 %v507
  %1146 = vmatprep.subr.mxu0 %v512
  %1147 = vmatpush1.msra.mxu0 %v511
  %1148 = vmatprep.subr.mxu0 %v516
  %1149 = vmatpush1.msra.mxu0 %v515
  %1150 = vmatprep.subr.mxu0 %v520
  %1151 = vmatpush1.msra.mxu0 %v519
  %1152 = vmatprep.subr.mxu0 %v524
  %1153 = vmatpush1.msra.mxu0 %v523
  %1154 = vmatprep.subr.mxu0 %v528
  %1155 = vmatpush1.msra.mxu0 %v527
  %1156 = vmatprep.subr.mxu0 %v532
  %1157 = vmatpush1.msra.mxu0 %v531
  %1158 = vmatprep.subr.mxu0 %v536
  %1159 = vmatpush1.msra.mxu0 %v535
  %1160 = vmatprep.subr.mxu0 %v540
  %1161 = vmatpush1.msra.mxu0 %v539
  %1162 = vmatprep.subr.mxu0 %v544
  %1163 = vmatpush1.msra.mxu0 %v543
  %1164 = vmatprep.subr.mxu0 %v548
  %1165 = vmatpush1.msra.mxu0 %v547
  %1166 = vmatprep.subr.mxu0 %v552
  %1167 = vmatpush1.msra.mxu0 %v551
  %1168 = vmatprep.subr.mxu0 %v556
  %1169 = vmatpush1.msra.mxu0 %v555
  %1170 = vmatprep.subr.mxu0 %v560
  %1171 = vmatpush1.msra.mxu0 %v559
  %1172 = vmatprep.subr.mxu0 %v564
  %1173 = vmatpush1.msra.mxu0 %v563
  %1174 = vmatprep.subr.mxu0 %v568
  %1175 = vmatpush1.msra.mxu0 %v567
  %1176 = vmatprep.subr.mxu0 %v572
  %1177 = vmatpush1.msra.mxu0 %v571
  %1178 = vmatprep.mubr.f32.mxu0 %v608
  %1179 = vmatmul.mubr.f32.gmra.mrb[0].mxu0 %v606
  %v1180 = vpop.f32.mrb[0].mxu0
  %v1181 = vadd.f32 %v1110, %v1180
  %v1182 = vpop.f32.mrb[0].mxu0
  %v1183 = vadd.f32 %v1112, %v1182
  %1184 = vdwg.mxu0
  %v1185 = vld [vmem:[%s2] sm:$0xff]
  %v1186 = vld [vmem:[%s2 + $0x8] sm:$0xff]
  %v1187 = vld [vmem:[%s2 + $0x10] sm:$0xff]
  %v1188 = vld [vmem:[%s2 + $0x18] sm:$0xff]
  %v1189 = vld [vmem:[%s2 + $0x20] sm:$0xff]
  %v1190 = vld [vmem:[%s2 + $0x28] sm:$0xff]
  %v1191 = vld [vmem:[%s2 + $0x30] sm:$0xff]
  %v1192 = vld [vmem:[%s2 + $0x38] sm:$0xff]
  %v1193 = vld [vmem:[%s2 + $0x40] sm:$0xff]
  %v1194 = vld [vmem:[%s2 + $0x48] sm:$0xff]
  %v1195 = vld [vmem:[%s2 + $0x50] sm:$0xff]
  %v1196 = vld [vmem:[%s2 + $0x58] sm:$0xff]
  %v1197 = vld [vmem:[%s2 + $0x60] sm:$0xff]
  %v1198 = vld [vmem:[%s2 + $0x68] sm:$0xff]
  %v1199 = vld [vmem:[%s2 + $0x70] sm:$0xff]
  %v1200 = vld [vmem:[%s2 + $0x78] sm:$0xff]
  %v1201 = vld [vmem:[%s2 + $0x80] sm:$0xff]
  %v1202 = vld [vmem:[%s2 + $0x88] sm:$0xff]
  %v1203 = vld [vmem:[%s2 + $0x90] sm:$0xff]
  %v1204 = vld [vmem:[%s2 + $0x98] sm:$0xff]
  %v1205 = vld [vmem:[%s2 + $0xa0] sm:$0xff]
  %v1206 = vld [vmem:[%s2 + $0xa8] sm:$0xff]
  %v1207 = vld [vmem:[%s2 + $0xb0] sm:$0xff]
  %v1208 = vld [vmem:[%s2 + $0xb8] sm:$0xff]
  %v1209 = vld [vmem:[%s2 + $0xc0] sm:$0xff]
  %v1210 = vld [vmem:[%s2 + $0xc8] sm:$0xff]
  %v1211 = vld [vmem:[%s2 + $0xd0] sm:$0xff]
  %v1212 = vld [vmem:[%s2 + $0xd8] sm:$0xff]
  %v1213 = vld [vmem:[%s2 + $0xe0] sm:$0xff]
  %v1214 = vld [vmem:[%s2 + $0xe8] sm:$0xff]
  %v1215 = vld [vmem:[%s2 + $0xf0] sm:$0xff]
  %v1216 = vld [vmem:[%s2 + $0xf8] sm:$0xff]
  %v1217 = vld [vmem:[%s2 + $0x100] sm:$0xff]
  %v1218 = vld [vmem:[%s2 + $0x108] sm:$0xff]
  %v1219 = vld [vmem:[%s2 + $0x110] sm:$0xff]
  %v1220 = vld [vmem:[%s2 + $0x118] sm:$0xff]
  %v1221 = vld [vmem:[%s2 + $0x120] sm:$0xff]
  %v1222 = vld [vmem:[%s2 + $0x128] sm:$0xff]
  %v1223 = vld [vmem:[%s2 + $0x130] sm:$0xff]
  %v1224 = vld [vmem:[%s2 + $0x138] sm:$0xff]
  %v1225 = vld [vmem:[%s2 + $0x140] sm:$0xff]
  %v1226 = vld [vmem:[%s2 + $0x148] sm:$0xff]
  %v1227 = vld [vmem:[%s2 + $0x150] sm:$0xff]
  %v1228 = vld [vmem:[%s2 + $0x158] sm:$0xff]
  %v1229 = vld [vmem:[%s2 + $0x160] sm:$0xff]
  %v1230 = vld [vmem:[%s2 + $0x168] sm:$0xff]
  %v1231 = vld [vmem:[%s2 + $0x170] sm:$0xff]
  %v1232 = vld [vmem:[%s2 + $0x178] sm:$0xff]
  %v1233 = vld [vmem:[%s2 + $0x180] sm:$0xff]
  %vm1234 = vcmask 64512
  %v1236 = vsel %vm1234, %v1183, 0
  %1238 = vmatprep.subr.mxu0 0.0
  %1239 = vmatpush1.msra.mxu0 %v1185
  %1240 = vmatprep.subr.mxu0 0.0
  %1241 = vmatpush1.msra.mxu0 %v1186
  %1242 = vmatprep.subr.mxu0 0.0
  %1243 = vmatpush1.msra.mxu0 %v1187
  %1244 = vmatprep.subr.mxu0 0.0
  %1245 = vmatpush1.msra.mxu0 %v1188
  %1246 = vmatprep.subr.mxu0 0.0
  %1247 = vmatpush1.msra.mxu0 %v1189
  %1248 = vmatprep.subr.mxu0 0.0
  %1249 = vmatpush1.msra.mxu0 %v1190
  %1250 = vmatprep.subr.mxu0 0.0
  %1251 = vmatpush1.msra.mxu0 %v1191
  %1252 = vmatprep.subr.mxu0 0.0
  %1253 = vmatpush1.msra.mxu0 %v1192
  %1254 = vmatprep.subr.mxu0 0.0
  %1255 = vmatpush1.msra.mxu0 %v1193
  %1256 = vmatprep.subr.mxu0 0.0
  %1257 = vmatpush1.msra.mxu0 %v1194
  %1258 = vmatprep.subr.mxu0 0.0
  %1259 = vmatpush1.msra.mxu0 %v1195
  %1260 = vmatprep.subr.mxu0 0.0
  %1261 = vmatpush1.msra.mxu0 %v1196
  %1262 = vmatprep.subr.mxu0 0.0
  %1263 = vmatpush1.msra.mxu0 %v1197
  %1264 = vmatprep.subr.mxu0 0.0
  %1265 = vmatpush1.msra.mxu0 %v1198
  %1266 = vmatprep.subr.mxu0 0.0
  %1267 = vmatpush1.msra.mxu0 %v1199
  %1268 = vmatprep.subr.mxu0 0.0
  %1269 = vmatpush1.msra.mxu0 %v1200
  %1270 = vmatprep.subr.mxu0 0.0
  %1271 = vmatpush1.msra.mxu0 %v1201
  %1272 = vmatprep.subr.mxu0 0.0
  %1273 = vmatpush1.msra.mxu0 %v1202
  %1274 = vmatprep.subr.mxu0 0.0
  %1275 = vmatpush1.msra.mxu0 %v1203
  %1276 = vmatprep.subr.mxu0 0.0
  %1277 = vmatpush1.msra.mxu0 %v1204
  %1278 = vmatprep.subr.mxu0 0.0
  %1279 = vmatpush1.msra.mxu0 %v1205
  %1280 = vmatprep.subr.mxu0 0.0
  %1281 = vmatpush1.msra.mxu0 %v1206
  %1282 = vmatprep.subr.mxu0 0.0
  %1283 = vmatpush1.msra.mxu0 %v1207
  %1284 = vmatprep.subr.mxu0 0.0
  %1285 = vmatpush1.msra.mxu0 %v1208
  %1286 = vmatprep.subr.mxu0 0.0
  %1287 = vmatpush1.msra.mxu0 %v1209
  %1288 = vmatprep.subr.mxu0 0.0
  %1289 = vmatpush1.msra.mxu0 %v1210
  %1290 = vmatprep.subr.mxu0 0.0
  %1291 = vmatpush1.msra.mxu0 %v1211
  %1292 = vmatprep.subr.mxu0 0.0
  %1293 = vmatpush1.msra.mxu0 %v1212
  %1294 = vmatprep.subr.mxu0 0.0
  %1295 = vmatpush1.msra.mxu0 %v1213
  %1296 = vmatprep.subr.mxu0 0.0
  %1297 = vmatpush1.msra.mxu0 %v1214
  %1298 = vmatprep.subr.mxu0 0.0
  %1299 = vmatpush1.msra.mxu0 %v1215
  %1300 = vmatprep.subr.mxu0 0.0
  %1301 = vmatpush1.msra.mxu0 %v1216
  %1302 = vmatprep.mubr.f32.mxu0 %v899
  %1303 = vmatmul.mubr.f32.gmra.mrb[0].mxu0 %v897
  %v1304 = vpop.f32.mrb[0].mxu0
  %v1305 = vadd.f32 0.0, %v1304
  %v1306 = vpop.f32.mrb[0].mxu0
  %1307 = vdwg.mxu0
  %1308 = vmatprep.subr.mxu0 0.0
  %1309 = vmatpush1.msra.mxu0 %v1217
  %1310 = vmatprep.subr.mxu0 0.0
  %1311 = vmatpush1.msra.mxu0 %v1218
  %1312 = vmatprep.subr.mxu0 0.0
  %1313 = vmatpush1.msra.mxu0 %v1219
  %1314 = vmatprep.subr.mxu0 0.0
  %1315 = vmatpush1.msra.mxu0 %v1220
  %1316 = vmatprep.subr.mxu0 0.0
  %1317 = vmatpush1.msra.mxu0 %v1221
  %1318 = vmatprep.subr.mxu0 0.0
  %1319 = vmatpush1.msra.mxu0 %v1222
  %1320 = vmatprep.subr.mxu0 0.0
  %1321 = vmatpush1.msra.mxu0 %v1223
  %1322 = vmatprep.subr.mxu0 0.0
  %1323 = vmatpush1.msra.mxu0 %v1224
  %1324 = vmatprep.subr.mxu0 0.0
  %1325 = vmatpush1.msra.mxu0 %v1225
  %1326 = vmatprep.subr.mxu0 0.0
  %1327 = vmatpush1.msra.mxu0 %v1226
  %1328 = vmatprep.subr.mxu0 0.0
  %1329 = vmatpush1.msra.mxu0 %v1227
  %1330 = vmatprep.subr.mxu0 0.0
  %1331 = vmatpush1.msra.mxu0 %v1228
  %1332 = vmatprep.subr.mxu0 0.0
  %1333 = vmatpush1.msra.mxu0 %v1229
  %1334 = vmatprep.subr.mxu0 0.0
  %1335 = vmatpush1.msra.mxu0 %v1230
  %1336 = vmatprep.subr.mxu0 0.0
  %1337 = vmatpush1.msra.mxu0 %v1231
  %1338 = vmatprep.subr.mxu0 0.0
  %1339 = vmatpush1.msra.mxu0 %v1232
  %1340 = vmatprep.subr.mxu0 0.0
  %1341 = vmatpush1.msra.mxu0 %v1233
  %1342 = vmatprep.subr.mxu0 0.0
  %1343 = vmatpush1.msra.mxu0 0.0
  %1344 = vmatprep.subr.mxu0 0.0
  %1345 = vmatpush1.msra.mxu0 0.0
  %1346 = vmatprep.subr.mxu0 0.0
  %1347 = vmatpush1.msra.mxu0 0.0
  %1348 = vmatprep.subr.mxu0 0.0
  %1349 = vmatpush1.msra.mxu0 0.0
  %1350 = vmatprep.subr.mxu0 0.0
  %1351 = vmatpush1.msra.mxu0 0.0
  %1352 = vmatprep.subr.mxu0 0.0
  %1353 = vmatpush1.msra.mxu0 0.0
  %1354 = vmatprep.subr.mxu0 0.0
  %1355 = vmatpush1.msra.mxu0 0.0
  %1356 = vmatprep.subr.mxu0 0.0
  %1357 = vmatpush1.msra.mxu0 0.0
  %1358 = vmatprep.subr.mxu0 0.0
  %1359 = vmatpush1.msra.mxu0 0.0
  %1360 = vmatprep.subr.mxu0 0.0
  %1361 = vmatpush1.msra.mxu0 0.0
  %1362 = vmatprep.subr.mxu0 0.0
  %1363 = vmatpush1.msra.mxu0 0.0
  %1364 = vmatprep.subr.mxu0 0.0
  %1365 = vmatpush1.msra.mxu0 0.0
  %1366 = vmatprep.subr.mxu0 0.0
  %1367 = vmatpush1.msra.mxu0 0.0
  %1368 = vmatprep.subr.mxu0 0.0
  %1369 = vmatpush1.msra.mxu0 0.0
  %1370 = vmatprep.subr.mxu0 0.0
  %1371 = vmatpush1.msra.mxu0 0.0
  %1372 = vmatprep.mubr.f32.mxu0 %v1236
  %1373 = vmatmul.mubr.f32.gmra.mrb[0].mxu0 %v1181
  %v1374 = vpop.f32.mrb[0].mxu0
  %v1375 = vadd.f32 %v1305, %v1374
  %v1376 = vpop.f32.mrb[0].mxu0
  %1377 = vdwg.mxu0
  %vm1378 = vcmask 58368
  %v1379 = vsel %vm1378, %v1375, 0.0
  %v1380 = vrot.slane %v1379, 4
  %v1381 = vadd.f32 %v1379, %v1380
  %v1382 = vrot.slane %v1381, 2
  %v1383 = vadd.f32 %v1381, %v1382
  %v1384 = vrot.slane %v1383, 1
  %v1385 = vadd.f32 %v1383, %v1384
  %v1386 = vmul.f32 %v1385, 0.010204081
  %v1387 = vmul.f32 %v897, %v897
  %v1388 = vmul.f32 %v899, %v899
  %v1389 = vmul.f32 %v1181, %v1181
  %v1390 = vmul.f32 %v1183, %v1183
  %v1392 = vsel %vm1234, %v1390, 0
  %1394 = vmatprep.subr.mxu0 0.0
  %1395 = vmatpush1.msra.mxu0 %v1185
  %1396 = vmatprep.subr.mxu0 0.0
  %1397 = vmatpush1.msra.mxu0 %v1186
  %1398 = vmatprep.subr.mxu0 0.0
  %1399 = vmatpush1.msra.mxu0 %v1187
  %1400 = vmatprep.subr.mxu0 0.0
  %1401 = vmatpush1.msra.mxu0 %v1188
  %1402 = vmatprep.subr.mxu0 0.0
  %1403 = vmatpush1.msra.mxu0 %v1189
  %1404 = vmatprep.subr.mxu0 0.0
  %1405 = vmatpush1.msra.mxu0 %v1190
  %1406 = vmatprep.subr.mxu0 0.0
  %1407 = vmatpush1.msra.mxu0 %v1191
  %1408 = vmatprep.subr.mxu0 0.0
  %1409 = vmatpush1.msra.mxu0 %v1192
  %1410 = vmatprep.subr.mxu0 0.0
  %1411 = vmatpush1.msra.mxu0 %v1193
  %1412 = vmatprep.subr.mxu0 0.0
  %1413 = vmatpush1.msra.mxu0 %v1194
  %1414 = vmatprep.subr.mxu0 0.0
  %1415 = vmatpush1.msra.mxu0 %v1195
  %1416 = vmatprep.subr.mxu0 0.0
  %1417 = vmatpush1.msra.mxu0 %v1196
  %1418 = vmatprep.subr.mxu0 0.0
  %1419 = vmatpush1.msra.mxu0 %v1197
  %1420 = vmatprep.subr.mxu0 0.0
  %1421 = vmatpush1.msra.mxu0 %v1198
  %1422 = vmatprep.subr.mxu0 0.0
  %1423 = vmatpush1.msra.mxu0 %v1199
  %1424 = vmatprep.subr.mxu0 0.0
  %1425 = vmatpush1.msra.mxu0 %v1200
  %1426 = vmatprep.subr.mxu0 0.0
  %1427 = vmatpush1.msra.mxu0 %v1201
  %1428 = vmatprep.subr.mxu0 0.0
  %1429 = vmatpush1.msra.mxu0 %v1202
  %1430 = vmatprep.subr.mxu0 0.0
  %1431 = vmatpush1.msra.mxu0 %v1203
  %1432 = vmatprep.subr.mxu0 0.0
  %1433 = vmatpush1.msra.mxu0 %v1204
  %1434 = vmatprep.subr.mxu0 0.0
  %1435 = vmatpush1.msra.mxu0 %v1205
  %1436 = vmatprep.subr.mxu0 0.0
  %1437 = vmatpush1.msra.mxu0 %v1206
  %1438 = vmatprep.subr.mxu0 0.0
  %1439 = vmatpush1.msra.mxu0 %v1207
  %1440 = vmatprep.subr.mxu0 0.0
  %1441 = vmatpush1.msra.mxu0 %v1208
  %1442 = vmatprep.subr.mxu0 0.0
  %1443 = vmatpush1.msra.mxu0 %v1209
  %1444 = vmatprep.subr.mxu0 0.0
  %1445 = vmatpush1.msra.mxu0 %v1210
  %1446 = vmatprep.subr.mxu0 0.0
  %1447 = vmatpush1.msra.mxu0 %v1211
  %1448 = vmatprep.subr.mxu0 0.0
  %1449 = vmatpush1.msra.mxu0 %v1212
  %1450 = vmatprep.subr.mxu0 0.0
  %1451 = vmatpush1.msra.mxu0 %v1213
  %1452 = vmatprep.subr.mxu0 0.0
  %1453 = vmatpush1.msra.mxu0 %v1214
  %1454 = vmatprep.subr.mxu0 0.0
  %1455 = vmatpush1.msra.mxu0 %v1215
  %1456 = vmatprep.subr.mxu0 0.0
  %1457 = vmatpush1.msra.mxu0 %v1216
  %1458 = vmatprep.mubr.f32.mxu0 %v1388
  %1459 = vmatmul.mubr.f32.gmra.mrb[0].mxu0 %v1387
  %v1460 = vpop.f32.mrb[0].mxu0
  %v1461 = vadd.f32 0.0, %v1460
  %v1462 = vpop.f32.mrb[0].mxu0
  %1463 = vdwg.mxu0
  %1464 = vmatprep.subr.mxu0 0.0
  %1465 = vmatpush1.msra.mxu0 %v1217
  %1466 = vmatprep.subr.mxu0 0.0
  %1467 = vmatpush1.msra.mxu0 %v1218
  %1468 = vmatprep.subr.mxu0 0.0
  %1469 = vmatpush1.msra.mxu0 %v1219
  %1470 = vmatprep.subr.mxu0 0.0
  %1471 = vmatpush1.msra.mxu0 %v1220
  %1472 = vmatprep.subr.mxu0 0.0
  %1473 = vmatpush1.msra.mxu0 %v1221
  %1474 = vmatprep.subr.mxu0 0.0
  %1475 = vmatpush1.msra.mxu0 %v1222
  %1476 = vmatprep.subr.mxu0 0.0
  %1477 = vmatpush1.msra.mxu0 %v1223
  %1478 = vmatprep.subr.mxu0 0.0
  %1479 = vmatpush1.msra.mxu0 %v1224
  %1480 = vmatprep.subr.mxu0 0.0
  %1481 = vmatpush1.msra.mxu0 %v1225
  %1482 = vmatprep.subr.mxu0 0.0
  %1483 = vmatpush1.msra.mxu0 %v1226
  %1484 = vmatprep.subr.mxu0 0.0
  %1485 = vmatpush1.msra.mxu0 %v1227
  %1486 = vmatprep.subr.mxu0 0.0
  %1487 = vmatpush1.msra.mxu0 %v1228
  %1488 = vmatprep.subr.mxu0 0.0
  %1489 = vmatpush1.msra.mxu0 %v1229
  %1490 = vmatprep.subr.mxu0 0.0
  %1491 = vmatpush1.msra.mxu0 %v1230
  %1492 = vmatprep.subr.mxu0 0.0
  %1493 = vmatpush1.msra.mxu0 %v1231
  %1494 = vmatprep.subr.mxu0 0.0
  %1495 = vmatpush1.msra.mxu0 %v1232
  %1496 = vmatprep.subr.mxu0 0.0
  %1497 = vmatpush1.msra.mxu0 %v1233
  %1498 = vmatprep.subr.mxu0 0.0
  %1499 = vmatpush1.msra.mxu0 0.0
  %1500 = vmatprep.subr.mxu0 0.0
  %1501 = vmatpush1.msra.mxu0 0.0
  %1502 = vmatprep.subr.mxu0 0.0
  %1503 = vmatpush1.msra.mxu0 0.0
  %1504 = vmatprep.subr.mxu0 0.0
  %1505 = vmatpush1.msra.mxu0 0.0
  %1506 = vmatprep.subr.mxu0 0.0
  %1507 = vmatpush1.msra.mxu0 0.0
  %1508 = vmatprep.subr.mxu0 0.0
  %1509 = vmatpush1.msra.mxu0 0.0
  %1510 = vmatprep.subr.mxu0 0.0
  %1511 = vmatpush1.msra.mxu0 0.0
  %1512 = vmatprep.subr.mxu0 0.0
  %1513 = vmatpush1.msra.mxu0 0.0
  %1514 = vmatprep.subr.mxu0 0.0
  %1515 = vmatpush1.msra.mxu0 0.0
  %1516 = vmatprep.subr.mxu0 0.0
  %1517 = vmatpush1.msra.mxu0 0.0
  %1518 = vmatprep.subr.mxu0 0.0
  %1519 = vmatpush1.msra.mxu0 0.0
  %1520 = vmatprep.subr.mxu0 0.0
  %1521 = vmatpush1.msra.mxu0 0.0
  %1522 = vmatprep.subr.mxu0 0.0
  %1523 = vmatpush1.msra.mxu0 0.0
  %1524 = vmatprep.subr.mxu0 0.0
  %1525 = vmatpush1.msra.mxu0 0.0
  %1526 = vmatprep.subr.mxu0 0.0
  %1527 = vmatpush1.msra.mxu0 0.0
  %1528 = vmatprep.mubr.f32.mxu0 %v1392
  %1529 = vmatmul.mubr.f32.gmra.mrb[0].mxu0 %v1389
  %v1530 = vpop.f32.mrb[0].mxu0
  %v1531 = vadd.f32 %v1461, %v1530
  %v1532 = vpop.f32.mrb[0].mxu0
  %1533 = vdwg.mxu0
  %v1534 = vsel %vm1378, %v1531, 0.0
  %v1535 = vrot.slane %v1534, 4
  %v1536 = vadd.f32 %v1534, %v1535
  %v1537 = vrot.slane %v1536, 2
  %v1538 = vadd.f32 %v1536, %v1537
  %v1539 = vrot.slane %v1538, 1
  %v1540 = vadd.f32 %v1538, %v1539
  %v1541 = vmul.f32 %v1540, 0.010204081
  %v1542 = vmul.f32 %v1386, %v1386
  %v1543 = vsub.f32 %v1541, %v1542
  %v1544 = vmax.f32 %v1543, 0.0
  %v1545 = vld [vmem:[%s4] sm:$0x1]
  %v1546 = vadd.f32 %v1544, 1e-05
  %v1547 = vrsqrt.pop %v1546
  %v1548 = vmul.f32 %v1545, %v1547
  %v1549 = vld [vmem:[%s5] sm:$0x1]
  %v1550 = vmul.f32 %v1386, %v1548
  %v1551 = vsub.f32 %v1549, %v1550
  %v1552 = vld [vmem:[%s3] sm:$0xff]
  %v1553 = vld [vmem:[%s3 + $0x8] sm:$0xff]
  %v1554 = vld [vmem:[%s3 + $0x10] sm:$0xff]
  %v1555 = vld [vmem:[%s3 + $0x18] sm:$0xff]
  %v1557 = vsel %vm1234, %v1548, 0
  %1559 = vmatprep.subr.mxu0 %v1553
  %1560 = vmatpush1.msra.mxu0 %v1552
  %1561 = vmatprep.subr.mxu0 0.0
  %1562 = vmatpush1.msra.mxu0 0.0
  %1563 = vmatprep.subr.mxu0 0.0
  %1564 = vmatpush1.msra.mxu0 0.0
  %1565 = vmatprep.subr.mxu0 0.0
  %1566 = vmatpush1.msra.mxu0 0.0
  %1567 = vmatprep.subr.mxu0 0.0
  %1568 = vmatpush1.msra.mxu0 0.0
  %1569 = vmatprep.subr.mxu0 0.0
  %1570 = vmatpush1.msra.mxu0 0.0
  %1571 = vmatprep.subr.mxu0 0.0
  %1572 = vmatpush1.msra.mxu0 0.0
  %1573 = vmatprep.subr.mxu0 0.0
  %1574 = vmatpush1.msra.mxu0 0.0
  %1575 = vmatprep.subr.mxu0 0.0
  %1576 = vmatpush1.msra.mxu0 0.0
  %1577 = vmatprep.subr.mxu0 0.0
  %1578 = vmatpush1.msra.mxu0 0.0
  %1579 = vmatprep.subr.mxu0 0.0
  %1580 = vmatpush1.msra.mxu0 0.0
  %1581 = vmatprep.subr.mxu0 0.0
  %1582 = vmatpush1.msra.mxu0 0.0
  %1583 = vmatprep.subr.mxu0 0.0
  %1584 = vmatpush1.msra.mxu0 0.0
  %1585 = vmatprep.subr.mxu0 0.0
  %1586 = vmatpush1.msra.mxu0 0.0
  %1587 = vmatprep.subr.mxu0 0.0
  %1588 = vmatpush1.msra.mxu0 0.0
  %1589 = vmatprep.subr.mxu0 0.0
  %1590 = vmatpush1.msra.mxu0 0.0
  %1591 = vmatprep.subr.mxu0 0.0
  %1592 = vmatpush1.msra.mxu0 0.0
  %1593 = vmatprep.subr.mxu0 0.0
  %1594 = vmatpush1.msra.mxu0 0.0
  %1595 = vmatprep.subr.mxu0 0.0
  %1596 = vmatpush1.msra.mxu0 0.0
  %1597 = vmatprep.subr.mxu0 0.0
  %1598 = vmatpush1.msra.mxu0 0.0
  %1599 = vmatprep.subr.mxu0 0.0
  %1600 = vmatpush1.msra.mxu0 0.0
  %1601 = vmatprep.subr.mxu0 0.0
  %1602 = vmatpush1.msra.mxu0 0.0
  %1603 = vmatprep.subr.mxu0 0.0
  %1604 = vmatpush1.msra.mxu0 0.0
  %1605 = vmatprep.subr.mxu0 0.0
  %1606 = vmatpush1.msra.mxu0 0.0
  %1607 = vmatprep.subr.mxu0 0.0
  %1608 = vmatpush1.msra.mxu0 0.0
  %1609 = vmatprep.subr.mxu0 0.0
  %1610 = vmatpush1.msra.mxu0 0.0
  %1611 = vmatprep.subr.mxu0 0.0
  %1612 = vmatpush1.msra.mxu0 0.0
  %1613 = vmatprep.subr.mxu0 0.0
  %1614 = vmatpush1.msra.mxu0 0.0
  %1615 = vmatprep.subr.mxu0 0.0
  %1616 = vmatpush1.msra.mxu0 0.0
  %1617 = vmatprep.subr.mxu0 0.0
  %1618 = vmatpush1.msra.mxu0 0.0
  %1619 = vmatprep.subr.mxu0 0.0
  %1620 = vmatpush1.msra.mxu0 0.0
  %1621 = vmatprep.subr.mxu0 0.0
  %1622 = vmatpush1.msra.mxu0 0.0
  %1623 = vmatprep.mubr.f32.mxu0 0.0
  %1624 = vmatmul.mubr.f32.gmra.mrb[0].mxu0 %v1557
  %v1625 = vpop.f32.mrb[0].mxu0
  %v1626 = vadd.f32 0.0, %v1625
  %v1627 = vpop.f32.mrb[0].mxu0
  %v1628 = vadd.f32 0.0, %v1627
  %1629 = vdwg.mxu0
  %1630 = vmatprep.subr.mxu0 %v1555
  %1631 = vmatpush1.msra.mxu0 %v1554
  %1632 = vmatprep.subr.mxu0 0.0
  %1633 = vmatpush1.msra.mxu0 0.0
  %1634 = vmatprep.subr.mxu0 0.0
  %1635 = vmatpush1.msra.mxu0 0.0
  %1636 = vmatprep.subr.mxu0 0.0
  %1637 = vmatpush1.msra.mxu0 0.0
  %1638 = vmatprep.subr.mxu0 0.0
  %1639 = vmatpush1.msra.mxu0 0.0
  %1640 = vmatprep.subr.mxu0 0.0
  %1641 = vmatpush1.msra.mxu0 0.0
  %1642 = vmatprep.subr.mxu0 0.0
  %1643 = vmatpush1.msra.mxu0 0.0
  %1644 = vmatprep.subr.mxu0 0.0
  %1645 = vmatpush1.msra.mxu0 0.0
  %1646 = vmatprep.subr.mxu0 0.0
  %1647 = vmatpush1.msra.mxu0 0.0
  %1648 = vmatprep.subr.mxu0 0.0
  %1649 = vmatpush1.msra.mxu0 0.0
  %1650 = vmatprep.subr.mxu0 0.0
  %1651 = vmatpush1.msra.mxu0 0.0
  %1652 = vmatprep.subr.mxu0 0.0
  %1653 = vmatpush1.msra.mxu0 0.0
  %1654 = vmatprep.subr.mxu0 0.0
  %1655 = vmatpush1.msra.mxu0 0.0
  %1656 = vmatprep.subr.mxu0 0.0
  %1657 = vmatpush1.msra.mxu0 0.0
  %1658 = vmatprep.subr.mxu0 0.0
  %1659 = vmatpush1.msra.mxu0 0.0
  %1660 = vmatprep.subr.mxu0 0.0
  %1661 = vmatpush1.msra.mxu0 0.0
  %1662 = vmatprep.subr.mxu0 0.0
  %1663 = vmatpush1.msra.mxu0 0.0
  %1664 = vmatprep.subr.mxu0 0.0
  %1665 = vmatpush1.msra.mxu0 0.0
  %1666 = vmatprep.subr.mxu0 0.0
  %1667 = vmatpush1.msra.mxu0 0.0
  %1668 = vmatprep.subr.mxu0 0.0
  %1669 = vmatpush1.msra.mxu0 0.0
  %1670 = vmatprep.subr.mxu0 0.0
  %1671 = vmatpush1.msra.mxu0 0.0
  %1672 = vmatprep.subr.mxu0 0.0
  %1673 = vmatpush1.msra.mxu0 0.0
  %1674 = vmatprep.subr.mxu0 0.0
  %1675 = vmatpush1.msra.mxu0 0.0
  %1676 = vmatprep.subr.mxu0 0.0
  %1677 = vmatpush1.msra.mxu0 0.0
  %1678 = vmatprep.subr.mxu0 0.0
  %1679 = vmatpush1.msra.mxu0 0.0
  %1680 = vmatprep.subr.mxu0 0.0
  %1681 = vmatpush1.msra.mxu0 0.0
  %1682 = vmatprep.subr.mxu0 0.0
  %1683 = vmatpush1.msra.mxu0 0.0
  %1684 = vmatprep.subr.mxu0 0.0
  %1685 = vmatpush1.msra.mxu0 0.0
  %1686 = vmatprep.subr.mxu0 0.0
  %1687 = vmatpush1.msra.mxu0 0.0
  %1688 = vmatprep.subr.mxu0 0.0
  %1689 = vmatpush1.msra.mxu0 0.0
  %1690 = vmatprep.subr.mxu0 0.0
  %1691 = vmatpush1.msra.mxu0 0.0
  %1692 = vmatprep.subr.mxu0 0.0
  %1693 = vmatpush1.msra.mxu0 0.0
  %1694 = vmatprep.mubr.f32.mxu0 0.0
  %1695 = vmatmul.mubr.f32.gmra.mrb[0].mxu0 %v1557
  %v1696 = vpop.f32.mrb[0].mxu0
  %v1697 = vadd.f32 0.0, %v1696
  %v1698 = vpop.f32.mrb[0].mxu0
  %v1699 = vadd.f32 0.0, %v1698
  %1700 = vdwg.mxu0
  %v1702 = vsel %vm1234, %v1551, 0
  %1704 = vmatprep.subr.mxu0 %v1553
  %1705 = vmatpush1.msra.mxu0 %v1552
  %1706 = vmatprep.subr.mxu0 0.0
  %1707 = vmatpush1.msra.mxu0 0.0
  %1708 = vmatprep.subr.mxu0 0.0
  %1709 = vmatpush1.msra.mxu0 0.0
  %1710 = vmatprep.subr.mxu0 0.0
  %1711 = vmatpush1.msra.mxu0 0.0
  %1712 = vmatprep.subr.mxu0 0.0
  %1713 = vmatpush1.msra.mxu0 0.0
  %1714 = vmatprep.subr.mxu0 0.0
  %1715 = vmatpush1.msra.mxu0 0.0
  %1716 = vmatprep.subr.mxu0 0.0
  %1717 = vmatpush1.msra.mxu0 0.0
  %1718 = vmatprep.subr.mxu0 0.0
  %1719 = vmatpush1.msra.mxu0 0.0
  %1720 = vmatprep.subr.mxu0 0.0
  %1721 = vmatpush1.msra.mxu0 0.0
  %1722 = vmatprep.subr.mxu0 0.0
  %1723 = vmatpush1.msra.mxu0 0.0
  %1724 = vmatprep.subr.mxu0 0.0
  %1725 = vmatpush1.msra.mxu0 0.0
  %1726 = vmatprep.subr.mxu0 0.0
  %1727 = vmatpush1.msra.mxu0 0.0
  %1728 = vmatprep.subr.mxu0 0.0
  %1729 = vmatpush1.msra.mxu0 0.0
  %1730 = vmatprep.subr.mxu0 0.0
  %1731 = vmatpush1.msra.mxu0 0.0
  %1732 = vmatprep.subr.mxu0 0.0
  %1733 = vmatpush1.msra.mxu0 0.0
  %1734 = vmatprep.subr.mxu0 0.0
  %1735 = vmatpush1.msra.mxu0 0.0
  %1736 = vmatprep.subr.mxu0 0.0
  %1737 = vmatpush1.msra.mxu0 0.0
  %1738 = vmatprep.subr.mxu0 0.0
  %1739 = vmatpush1.msra.mxu0 0.0
  %1740 = vmatprep.subr.mxu0 0.0
  %1741 = vmatpush1.msra.mxu0 0.0
  %1742 = vmatprep.subr.mxu0 0.0
  %1743 = vmatpush1.msra.mxu0 0.0
  %1744 = vmatprep.subr.mxu0 0.0
  %1745 = vmatpush1.msra.mxu0 0.0
  %1746 = vmatprep.subr.mxu0 0.0
  %1747 = vmatpush1.msra.mxu0 0.0
  %1748 = vmatprep.subr.mxu0 0.0
  %1749 = vmatpush1.msra.mxu0 0.0
  %1750 = vmatprep.subr.mxu0 0.0
  %1751 = vmatpush1.msra.mxu0 0.0
  %1752 = vmatprep.subr.mxu0 0.0
  %1753 = vmatpush1.msra.mxu0 0.0
  %1754 = vmatprep.subr.mxu0 0.0
  %1755 = vmatpush1.msra.mxu0 0.0
  %1756 = vmatprep.subr.mxu0 0.0
  %1757 = vmatpush1.msra.mxu0 0.0
  %1758 = vmatprep.subr.mxu0 0.0
  %1759 = vmatpush1.msra.mxu0 0.0
  %1760 = vmatprep.subr.mxu0 0.0
  %1761 = vmatpush1.msra.mxu0 0.0
  %1762 = vmatprep.subr.mxu0 0.0
  %1763 = vmatpush1.msra.mxu0 0.0
  %1764 = vmatprep.subr.mxu0 0.0
  %1765 = vmatpush1.msra.mxu0 0.0
  %1766 = vmatprep.subr.mxu0 0.0
  %1767 = vmatpush1.msra.mxu0 0.0
  %1768 = vmatprep.mubr.f32.mxu0 0.0
  %1769 = vmatmul.mubr.f32.gmra.mrb[0].mxu0 %v1702
  %v1770 = vpop.f32.mrb[0].mxu0
  %v1771 = vadd.f32 0.0, %v1770
  %v1772 = vpop.f32.mrb[0].mxu0
  %v1773 = vadd.f32 0.0, %v1772
  %1774 = vdwg.mxu0
  %1775 = vmatprep.subr.mxu0 %v1555
  %1776 = vmatpush1.msra.mxu0 %v1554
  %1777 = vmatprep.subr.mxu0 0.0
  %1778 = vmatpush1.msra.mxu0 0.0
  %1779 = vmatprep.subr.mxu0 0.0
  %1780 = vmatpush1.msra.mxu0 0.0
  %1781 = vmatprep.subr.mxu0 0.0
  %1782 = vmatpush1.msra.mxu0 0.0
  %1783 = vmatprep.subr.mxu0 0.0
  %1784 = vmatpush1.msra.mxu0 0.0
  %1785 = vmatprep.subr.mxu0 0.0
  %1786 = vmatpush1.msra.mxu0 0.0
  %1787 = vmatprep.subr.mxu0 0.0
  %1788 = vmatpush1.msra.mxu0 0.0
  %1789 = vmatprep.subr.mxu0 0.0
  %1790 = vmatpush1.msra.mxu0 0.0
  %1791 = vmatprep.subr.mxu0 0.0
  %1792 = vmatpush1.msra.mxu0 0.0
  %1793 = vmatprep.subr.mxu0 0.0
  %1794 = vmatpush1.msra.mxu0 0.0
  %1795 = vmatprep.subr.mxu0 0.0
  %1796 = vmatpush1.msra.mxu0 0.0
  %1797 = vmatprep.subr.mxu0 0.0
  %1798 = vmatpush1.msra.mxu0 0.0
  %1799 = vmatprep.subr.mxu0 0.0
  %1800 = vmatpush1.msra.mxu0 0.0
  %1801 = vmatprep.subr.mxu0 0.0
  %1802 = vmatpush1.msra.mxu0 0.0
  %1803 = vmatprep.subr.mxu0 0.0
  %1804 = vmatpush1.msra.mxu0 0.0
  %1805 = vmatprep.subr.mxu0 0.0
  %1806 = vmatpush1.msra.mxu0 0.0
  %1807 = vmatprep.subr.mxu0 0.0
  %1808 = vmatpush1.msra.mxu0 0.0
  %1809 = vmatprep.subr.mxu0 0.0
  %1810 = vmatpush1.msra.mxu0 0.0
  %1811 = vmatprep.subr.mxu0 0.0
  %1812 = vmatpush1.msra.mxu0 0.0
  %1813 = vmatprep.subr.mxu0 0.0
  %1814 = vmatpush1.msra.mxu0 0.0
  %1815 = vmatprep.subr.mxu0 0.0
  %1816 = vmatpush1.msra.mxu0 0.0
  %1817 = vmatprep.subr.mxu0 0.0
  %1818 = vmatpush1.msra.mxu0 0.0
  %1819 = vmatprep.subr.mxu0 0.0
  %1820 = vmatpush1.msra.mxu0 0.0
  %1821 = vmatprep.subr.mxu0 0.0
  %1822 = vmatpush1.msra.mxu0 0.0
  %1823 = vmatprep.subr.mxu0 0.0
  %1824 = vmatpush1.msra.mxu0 0.0
  %1825 = vmatprep.subr.mxu0 0.0
  %1826 = vmatpush1.msra.mxu0 0.0
  %1827 = vmatprep.subr.mxu0 0.0
  %1828 = vmatpush1.msra.mxu0 0.0
  %1829 = vmatprep.subr.mxu0 0.0
  %1830 = vmatpush1.msra.mxu0 0.0
  %1831 = vmatprep.subr.mxu0 0.0
  %1832 = vmatpush1.msra.mxu0 0.0
  %1833 = vmatprep.subr.mxu0 0.0
  %1834 = vmatpush1.msra.mxu0 0.0
  %1835 = vmatprep.subr.mxu0 0.0
  %1836 = vmatpush1.msra.mxu0 0.0
  %1837 = vmatprep.subr.mxu0 0.0
  %1838 = vmatpush1.msra.mxu0 0.0
  %1839 = vmatprep.mubr.f32.mxu0 0.0
  %1840 = vmatmul.mubr.f32.gmra.mrb[0].mxu0 %v1702
  %v1841 = vpop.f32.mrb[0].mxu0
  %v1842 = vadd.f32 0.0, %v1841
  %v1843 = vpop.f32.mrb[0].mxu0
  %v1844 = vadd.f32 0.0, %v1843
  %1845 = vdwg.mxu0
  %v1846 = vlaneseq
  %v1847 = vshrl.u32 %v1846, 7
  %v1848 = vsub.s32 0, %v1847
  %v1849 = vrot.slane %v1626, %v1848
  %v1850 = vlaneseq
  %v1851 = vshrl.u32 %v1850, 7
  %v1852 = vsub.s32 0, %v1851
  %v1853 = vrot.slane %v1628, %v1852
  %v1854 = vlaneseq
  %v1855 = vshrl.u32 %v1854, 7
  %v1856 = vsub.s32 0, %v1855
  %v1857 = vrot.slane %v1697, %v1856
  %v1858 = vlaneseq
  %v1859 = vshrl.u32 %v1858, 7
  %v1860 = vsub.s32 0, %v1859
  %v1861 = vrot.slane %v1699, %v1860
  %v1862 = vmul.f32 %v897, %v1849
  %v1863 = vmul.f32 %v899, %v1853
  %v1864 = vmul.f32 %v1181, %v1857
  %v1865 = vmul.f32 %v1183, %v1861
  %v1866 = vlaneseq
  %v1867 = vshrl.u32 %v1866, 7
  %v1868 = vsub.s32 0, %v1867
  %v1869 = vrot.slane %v1771, %v1868
  %v1870 = vlaneseq
  %v1871 = vshrl.u32 %v1870, 7
  %v1872 = vsub.s32 0, %v1871
  %v1873 = vrot.slane %v1773, %v1872
  %v1874 = vlaneseq
  %v1875 = vshrl.u32 %v1874, 7
  %v1876 = vsub.s32 0, %v1875
  %v1877 = vrot.slane %v1842, %v1876
  %v1878 = vlaneseq
  %v1879 = vshrl.u32 %v1878, 7
  %v1880 = vsub.s32 0, %v1879
  %v1881 = vrot.slane %v1844, %v1880
  %v1882 = vadd.f32 %v1862, %v1869
  %v1883 = vadd.f32 %v1863, %v1873
  %v1884 = vadd.f32 %v1864, %v1877
  %v1885 = vadd.f32 %v1865, %v1881
  %v1886 = vmul.f32 %v1882, 0.5
  %v1887 = vmul.f32 %v1883, 0.5
  %v1888 = vmul.f32 %v1884, 0.5
  %v1889 = vmul.f32 %v1885, 0.5
  %v1890 = vmul.f32 %v1882, 0.044715
  %v1891 = vmul.f32 %v1883, 0.044715
  %v1892 = vmul.f32 %v1884, 0.044715
  %v1893 = vmul.f32 %v1885, 0.044715
  %v1894 = vmul.f32 %v1890, %v1882
  %v1895 = vmul.f32 %v1891, %v1883
  %v1896 = vmul.f32 %v1892, %v1884
  %v1897 = vmul.f32 %v1893, %v1885
  %v1898 = vmul.f32 %v1894, %v1882
  %v1899 = vmul.f32 %v1895, %v1883
  %v1900 = vmul.f32 %v1896, %v1884
  %v1901 = vmul.f32 %v1897, %v1885
  %v1902 = vadd.f32 %v1882, %v1898
  %v1903 = vadd.f32 %v1883, %v1899
  %v1904 = vadd.f32 %v1884, %v1900
  %v1905 = vadd.f32 %v1885, %v1901
  %v1906 = vmul.f32 %v1902, 0.7978846
  %v1907 = vmul.f32 %v1903, 0.7978846
  %v1908 = vmul.f32 %v1904, 0.7978846
  %v1909 = vmul.f32 %v1905, 0.7978846
  %v1910 = vtanh.pop %v1906
  %v1911 = vtanh.pop %v1907
  %v1912 = vtanh.pop %v1908
  %v1913 = vtanh.pop %v1909
  %v1914 = vadd.f32 %v1910, 1.0
  %v1915 = vadd.f32 %v1911, 1.0
  %v1916 = vadd.f32 %v1912, 1.0
  %v1917 = vadd.f32 %v1913, 1.0
  %v1918 = vmul.f32 %v1886, %v1914
  %v1919 = vmul.f32 %v1887, %v1915
  %v1920 = vmul.f32 %v1888, %v1916
  %v1921 = vmul.f32 %v1889, %v1917
  %v1922 = vld [vmem:[%s6] sm:$0xff]
  %v1923 = vld [vmem:[%s6 + $0x8] sm:$0xff]
  %v1924 = vld [vmem:[%s6 + $0x10] sm:$0xff]
  %v1925 = vld [vmem:[%s6 + $0x18] sm:$0xff]
  %v1926 = vld [vmem:[%s6 + $0x20] sm:$0xff]
  %v1927 = vld [vmem:[%s6 + $0x28] sm:$0xff]
  %v1928 = vld [vmem:[%s6 + $0x30] sm:$0xff]
  %v1929 = vld [vmem:[%s6 + $0x38] sm:$0xff]
  %v1930 = vld [vmem:[%s6 + $0x40] sm:$0xff]
  %v1931 = vld [vmem:[%s6 + $0x48] sm:$0xff]
  %v1932 = vld [vmem:[%s6 + $0x50] sm:$0xff]
  %v1933 = vld [vmem:[%s6 + $0x58] sm:$0xff]
  %v1934 = vld [vmem:[%s6 + $0x60] sm:$0xff]
  %v1935 = vld [vmem:[%s6 + $0x68] sm:$0xff]
  %v1936 = vld [vmem:[%s6 + $0x70] sm:$0xff]
  %v1937 = vld [vmem:[%s6 + $0x78] sm:$0xff]
  %v1938 = vld [vmem:[%s6 + $0x80] sm:$0xff]
  %v1939 = vld [vmem:[%s6 + $0x88] sm:$0xff]
  %v1940 = vld [vmem:[%s6 + $0x90] sm:$0xff]
  %v1941 = vld [vmem:[%s6 + $0x98] sm:$0xff]
  %v1942 = vld [vmem:[%s6 + $0xa0] sm:$0xff]
  %v1943 = vld [vmem:[%s6 + $0xa8] sm:$0xff]
  %v1944 = vld [vmem:[%s6 + $0xb0] sm:$0xff]
  %v1945 = vld [vmem:[%s6 + $0xb8] sm:$0xff]
  %v1946 = vld [vmem:[%s6 + $0xc0] sm:$0xff]
  %v1947 = vld [vmem:[%s6 + $0xc8] sm:$0xff]
  %v1948 = vld [vmem:[%s6 + $0xd0] sm:$0xff]
  %v1949 = vld [vmem:[%s6 + $0xd8] sm:$0xff]
  %v1950 = vld [vmem:[%s6 + $0xe0] sm:$0xff]
  %v1951 = vld [vmem:[%s6 + $0xe8] sm:$0xff]
  %v1952 = vld [vmem:[%s6 + $0xf0] sm:$0xff]
  %v1953 = vld [vmem:[%s6 + $0xf8] sm:$0xff]
  %v1954 = vld [vmem:[%s6 + $0x100] sm:$0xff]
  %v1955 = vld [vmem:[%s6 + $0x108] sm:$0xff]
  %v1956 = vld [vmem:[%s6 + $0x110] sm:$0xff]
  %v1957 = vld [vmem:[%s6 + $0x118] sm:$0xff]
  %v1958 = vld [vmem:[%s6 + $0x120] sm:$0xff]
  %v1959 = vld [vmem:[%s6 + $0x128] sm:$0xff]
  %v1960 = vld [vmem:[%s6 + $0x130] sm:$0xff]
  %v1961 = vld [vmem:[%s6 + $0x138] sm:$0xff]
  %v1962 = vld [vmem:[%s6 + $0x140] sm:$0xff]
  %v1963 = vld [vmem:[%s6 + $0x148] sm:$0xff]
  %v1964 = vld [vmem:[%s6 + $0x150] sm:$0xff]
  %v1965 = vld [vmem:[%s6 + $0x158] sm:$0xff]
  %v1966 = vld [vmem:[%s6 + $0x160] sm:$0xff]
  %v1967 = vld [vmem:[%s6 + $0x168] sm:$0xff]
  %v1968 = vld [vmem:[%s6 + $0x170] sm:$0xff]
  %v1969 = vld [vmem:[%s6 + $0x178] sm:$0xff]
  %v1970 = vld [vmem:[%s6 + $0x180] sm:$0xff]
  %v1971 = vld [vmem:[%s6 + $0x188] sm:$0xff]
  %v1972 = vld [vmem:[%s6 + $0x190] sm:$0xff]
  %v1973 = vld [vmem:[%s6 + $0x198] sm:$0xff]
  %v1974 = vld [vmem:[%s6 + $0x1a0] sm:$0xff]
  %v1975 = vld [vmem:[%s6 + $0x1a8] sm:$0xff]
  %v1976 = vld [vmem:[%s6 + $0x1b0] sm:$0xff]
  %v1977 = vld [vmem:[%s6 + $0x1b8] sm:$0xff]
  %v1978 = vld [vmem:[%s6 + $0x1c0] sm:$0xff]
  %v1979 = vld [vmem:[%s6 + $0x1c8] sm:$0xff]
  %v1980 = vld [vmem:[%s6 + $0x1d0] sm:$0xff]
  %v1981 = vld [vmem:[%s6 + $0x1d8] sm:$0xff]
  %v1982 = vld [vmem:[%s6 + $0x1e0] sm:$0xff]
  %v1983 = vld [vmem:[%s6 + $0x1e8] sm:$0xff]
  %v1984 = vld [vmem:[%s6 + $0x1f0] sm:$0xff]
  %v1985 = vld [vmem:[%s6 + $0x1f8] sm:$0xff]
  %v1986 = vld [vmem:[%s6 + $0x200] sm:$0xff]
  %v1987 = vld [vmem:[%s6 + $0x208] sm:$0xff]
  %v1988 = vld [vmem:[%s6 + $0x210] sm:$0xff]
  %v1989 = vld [vmem:[%s6 + $0x218] sm:$0xff]
  %v1990 = vld [vmem:[%s6 + $0x220] sm:$0xff]
  %v1991 = vld [vmem:[%s6 + $0x228] sm:$0xff]
  %v1992 = vld [vmem:[%s6 + $0x230] sm:$0xff]
  %v1993 = vld [vmem:[%s6 + $0x238] sm:$0xff]
  %v1994 = vld [vmem:[%s6 + $0x240] sm:$0xff]
  %v1995 = vld [vmem:[%s6 + $0x248] sm:$0xff]
  %v1996 = vld [vmem:[%s6 + $0x250] sm:$0xff]
  %v1997 = vld [vmem:[%s6 + $0x258] sm:$0xff]
  %v1998 = vld [vmem:[%s6 + $0x260] sm:$0xff]
  %v1999 = vld [vmem:[%s6 + $0x268] sm:$0xff]
  %v2000 = vld [vmem:[%s6 + $0x270] sm:$0xff]
  %v2001 = vld [vmem:[%s6 + $0x278] sm:$0xff]
  %v2002 = vld [vmem:[%s6 + $0x280] sm:$0xff]
  %v2003 = vld [vmem:[%s6 + $0x288] sm:$0xff]
  %v2004 = vld [vmem:[%s6 + $0x290] sm:$0xff]
  %v2005 = vld [vmem:[%s6 + $0x298] sm:$0xff]
  %v2006 = vld [vmem:[%s6 + $0x2a0] sm:$0xff]
  %v2007 = vld [vmem:[%s6 + $0x2a8] sm:$0xff]
  %v2008 = vld [vmem:[%s6 + $0x2b0] sm:$0xff]
  %v2009 = vld [vmem:[%s6 + $0x2b8] sm:$0xff]
  %v2010 = vld [vmem:[%s6 + $0x2c0] sm:$0xff]
  %v2011 = vld [vmem:[%s6 + $0x2c8] sm:$0xff]
  %v2012 = vld [vmem:[%s6 + $0x2d0] sm:$0xff]
  %v2013 = vld [vmem:[%s6 + $0x2d8] sm:$0xff]
  %v2014 = vld [vmem:[%s6 + $0x2e0] sm:$0xff]
  %v2015 = vld [vmem:[%s6 + $0x2e8] sm:$0xff]
  %v2016 = vld [vmem:[%s6 + $0x2f0] sm:$0xff]
  %v2017 = vld [vmem:[%s6 + $0x2f8] sm:$0xff]
  %v2018 = vld [vmem:[%s6 + $0x300] sm:$0xff]
  %v2019 = vld [vmem:[%s6 + $0x308] sm:$0xff]
  %v2021 = vsel %vm1234, %v1921, 0
  %2023 = vmatprep.subr.mxu0 %v1923
  %2024 = vmatpush1.msra.mxu0 %v1922
  %2025 = vmatprep.subr.mxu0 %v1925
  %2026 = vmatpush1.msra.mxu0 %v1924
  %2027 = vmatprep.subr.mxu0 %v1927
  %2028 = vmatpush1.msra.mxu0 %v1926
  %2029 = vmatprep.subr.mxu0 %v1929
  %2030 = vmatpush1.msra.mxu0 %v1928
  %2031 = vmatprep.subr.mxu0 %v1931
  %2032 = vmatpush1.msra.mxu0 %v1930
  %2033 = vmatprep.subr.mxu0 %v1933
  %2034 = vmatpush1.msra.mxu0 %v1932
  %2035 = vmatprep.subr.mxu0 %v1935
  %2036 = vmatpush1.msra.mxu0 %v1934
  %2037 = vmatprep.subr.mxu0 %v1937
  %2038 = vmatpush1.msra.mxu0 %v1936
  %2039 = vmatprep.subr.mxu0 %v1939
  %2040 = vmatpush1.msra.mxu0 %v1938
  %2041 = vmatprep.subr.mxu0 %v1941
  %2042 = vmatpush1.msra.mxu0 %v1940
  %2043 = vmatprep.subr.mxu0 %v1943
  %2044 = vmatpush1.msra.mxu0 %v1942
  %2045 = vmatprep.subr.mxu0 %v1945
  %2046 = vmatpush1.msra.mxu0 %v1944
  %2047 = vmatprep.subr.mxu0 %v1947
  %2048 = vmatpush1.msra.mxu0 %v1946
  %2049 = vmatprep.subr.mxu0 %v1949
  %2050 = vmatpush1.msra.mxu0 %v1948
  %2051 = vmatprep.subr.mxu0 %v1951
  %2052 = vmatpush1.msra.mxu0 %v1950
  %2053 = vmatprep.subr.mxu0 %v1953
  %2054 = vmatpush1.msra.mxu0 %v1952
  %2055 = vmatprep.subr.mxu0 %v1955
  %2056 = vmatpush1.msra.mxu0 %v1954
  %2057 = vmatprep.subr.mxu0 %v1957
  %2058 = vmatpush1.msra.mxu0 %v1956
  %2059 = vmatprep.subr.mxu0 %v1959
  %2060 = vmatpush1.msra.mxu0 %v1958
  %2061 = vmatprep.subr.mxu0 %v1961
  %2062 = vmatpush1.msra.mxu0 %v1960
  %2063 = vmatprep.subr.mxu0 %v1963
  %2064 = vmatpush1.msra.mxu0 %v1962
  %2065 = vmatprep.subr.mxu0 %v1965
  %2066 = vmatpush1.msra.mxu0 %v1964
  %2067 = vmatprep.subr.mxu0 %v1967
  %2068 = vmatpush1.msra.mxu0 %v1966
  %2069 = vmatprep.subr.mxu0 %v1969
  %2070 = vmatpush1.msra.mxu0 %v1968
  %2071 = vmatprep.subr.mxu0 %v1971
  %2072 = vmatpush1.msra.mxu0 %v1970
  %2073 = vmatprep.subr.mxu0 %v1973
  %2074 = vmatpush1.msra.mxu0 %v1972
  %2075 = vmatprep.subr.mxu0 %v1975
  %2076 = vmatpush1.msra.mxu0 %v1974
  %2077 = vmatprep.subr.mxu0 %v1977
  %2078 = vmatpush1.msra.mxu0 %v1976
  %2079 = vmatprep.subr.mxu0 %v1979
  %2080 = vmatpush1.msra.mxu0 %v1978
  %2081 = vmatprep.subr.mxu0 %v1981
  %2082 = vmatpush1.msra.mxu0 %v1980
  %2083 = vmatprep.subr.mxu0 %v1983
  %2084 = vmatpush1.msra.mxu0 %v1982
  %2085 = vmatprep.subr.mxu0 %v1985
  %2086 = vmatpush1.msra.mxu0 %v1984
  %2087 = vmatprep.mubr.f32.mxu0 %v1919
  %2088 = vmatmul.mubr.f32.gmra.mrb[0].mxu0 %v1918
  %v2089 = vpop.f32.mrb[0].mxu0
  %v2090 = vadd.f32 0.0, %v2089
  %v2091 = vpop.f32.mrb[0].mxu0
  %v2092 = vadd.f32 0.0, %v2091
  %2093 = vdwg.mxu0
  %2094 = vmatprep.subr.mxu0 %v1987
  %2095 = vmatpush1.msra.mxu0 %v1986
  %2096 = vmatprep.subr.mxu0 %v1989
  %2097 = vmatpush1.msra.mxu0 %v1988
  %2098 = vmatprep.subr.mxu0 %v1991
  %2099 = vmatpush1.msra.mxu0 %v1990
  %2100 = vmatprep.subr.mxu0 %v1993
  %2101 = vmatpush1.msra.mxu0 %v1992
  %2102 = vmatprep.subr.mxu0 %v1995
  %2103 = vmatpush1.msra.mxu0 %v1994
  %2104 = vmatprep.subr.mxu0 %v1997
  %2105 = vmatpush1.msra.mxu0 %v1996
  %2106 = vmatprep.subr.mxu0 %v1999
  %2107 = vmatpush1.msra.mxu0 %v1998
  %2108 = vmatprep.subr.mxu0 %v2001
  %2109 = vmatpush1.msra.mxu0 %v2000
  %2110 = vmatprep.subr.mxu0 %v2003
  %2111 = vmatpush1.msra.mxu0 %v2002
  %2112 = vmatprep.subr.mxu0 %v2005
  %2113 = vmatpush1.msra.mxu0 %v2004
  %2114 = vmatprep.subr.mxu0 %v2007
  %2115 = vmatpush1.msra.mxu0 %v2006
  %2116 = vmatprep.subr.mxu0 %v2009
  %2117 = vmatpush1.msra.mxu0 %v2008
  %2118 = vmatprep.subr.mxu0 %v2011
  %2119 = vmatpush1.msra.mxu0 %v2010
  %2120 = vmatprep.subr.mxu0 %v2013
  %2121 = vmatpush1.msra.mxu0 %v2012
  %2122 = vmatprep.subr.mxu0 %v2015
  %2123 = vmatpush1.msra.mxu0 %v2014
  %2124 = vmatprep.subr.mxu0 %v2017
  %2125 = vmatpush1.msra.mxu0 %v2016
  %2126 = vmatprep.subr.mxu0 %v2019
  %2127 = vmatpush1.msra.mxu0 %v2018
  %2128 = vmatprep.subr.mxu0 0.0
  %2129 = vmatpush1.msra.mxu0 0.0
  %2130 = vmatprep.subr.mxu0 0.0
  %2131 = vmatpush1.msra.mxu0 0.0
  %2132 = vmatprep.subr.mxu0 0.0
  %2133 = vmatpush1.msra.mxu0 0.0
  %2134 = vmatprep.subr.mxu0 0.0
  %2135 = vmatpush1.msra.mxu0 0.0
  %2136 = vmatprep.subr.mxu0 0.0
  %2137 = vmatpush1.msra.mxu0 0.0
  %2138 = vmatprep.subr.mxu0 0.0
  %2139 = vmatpush1.msra.mxu0 0.0
  %2140 = vmatprep.subr.mxu0 0.0
  %2141 = vmatpush1.msra.mxu0 0.0
  %2142 = vmatprep.subr.mxu0 0.0
  %2143 = vmatpush1.msra.mxu0 0.0
  %2144 = vmatprep.subr.mxu0 0.0
  %2145 = vmatpush1.msra.mxu0 0.0
  %2146 = vmatprep.subr.mxu0 0.0
  %2147 = vmatpush1.msra.mxu0 0.0
  %2148 = vmatprep.subr.mxu0 0.0
  %2149 = vmatpush1.msra.mxu0 0.0
  %2150 = vmatprep.subr.mxu0 0.0
  %2151 = vmatpush1.msra.mxu0 0.0
  %2152 = vmatprep.subr.mxu0 0.0
  %2153 = vmatpush1.msra.mxu0 0.0
  %2154 = vmatprep.subr.mxu0 0.0
  %2155 = vmatpush1.msra.mxu0 0.0
  %2156 = vmatprep.subr.mxu0 0.0
  %2157 = vmatpush1.msra.mxu0 0.0
  %2158 = vmatprep.mubr.f32.mxu0 %v2021
  %2159 = vmatmul.mubr.f32.gmra.mrb[0].mxu0 %v1920
  %v2160 = vpop.f32.mrb[0].mxu0
  %v2161 = vadd.f32 %v2090, %v2160
  %v2162 = vpop.f32.mrb[0].mxu0
  %v2163 = vadd.f32 %v2092, %v2162
  %2164 = vdwg.mxu0
  %v2165 = vld [vmem:[%s7] sm:$0xff]
  %v2166 = vld [vmem:[%s7 + $0x8] sm:$0xff]
  %v2167 = vld [vmem:[%s7 + $0x10] sm:$0xff]
  %v2168 = vld [vmem:[%s7 + $0x18] sm:$0xff]
  %v2169 = vld [vmem:[%s7 + $0x20] sm:$0xff]
  %v2170 = vld [vmem:[%s7 + $0x28] sm:$0xff]
  %v2171 = vld [vmem:[%s7 + $0x30] sm:$0xff]
  %v2172 = vld [vmem:[%s7 + $0x38] sm:$0xff]
  %v2173 = vld [vmem:[%s7 + $0x40] sm:$0xff]
  %v2174 = vld [vmem:[%s7 + $0x48] sm:$0xff]
  %v2175 = vld [vmem:[%s7 + $0x50] sm:$0xff]
  %v2176 = vld [vmem:[%s7 + $0x58] sm:$0xff]
  %v2177 = vld [vmem:[%s7 + $0x60] sm:$0xff]
  %v2178 = vld [vmem:[%s7 + $0x68] sm:$0xff]
  %v2179 = vld [vmem:[%s7 + $0x70] sm:$0xff]
  %v2180 = vld [vmem:[%s7 + $0x78] sm:$0xff]
  %v2181 = vld [vmem:[%s7 + $0x80] sm:$0xff]
  %v2182 = vld [vmem:[%s7 + $0x88] sm:$0xff]
  %vm2183 = vcmask 130048
  %v2185 = vsel %vm2183, %v2163, 0
  %2187 = vmatprep.subr.mxu0 0.0
  %2188 = vmatpush1.msra.mxu0 %v2165
  %2189 = vmatprep.subr.mxu0 0.0
  %2190 = vmatpush1.msra.mxu0 %v2166
  %2191 = vmatprep.subr.mxu0 0.0
  %2192 = vmatpush1.msra.mxu0 %v2167
  %2193 = vmatprep.subr.mxu0 0.0
  %2194 = vmatpush1.msra.mxu0 %v2168
  %2195 = vmatprep.subr.mxu0 0.0
  %2196 = vmatpush1.msra.mxu0 %v2169
  %2197 = vmatprep.subr.mxu0 0.0
  %2198 = vmatpush1.msra.mxu0 %v2170
  %2199 = vmatprep.subr.mxu0 0.0
  %2200 = vmatpush1.msra.mxu0 %v2171
  %2201 = vmatprep.subr.mxu0 0.0
  %2202 = vmatpush1.msra.mxu0 %v2172
  %2203 = vmatprep.subr.mxu0 0.0
  %2204 = vmatpush1.msra.mxu0 %v2173
  %2205 = vmatprep.subr.mxu0 0.0
  %2206 = vmatpush1.msra.mxu0 %v2174
  %2207 = vmatprep.subr.mxu0 0.0
  %2208 = vmatpush1.msra.mxu0 %v2175
  %2209 = vmatprep.subr.mxu0 0.0
  %2210 = vmatpush1.msra.mxu0 %v2176
  %2211 = vmatprep.subr.mxu0 0.0
  %2212 = vmatpush1.msra.mxu0 %v2177
  %2213 = vmatprep.subr.mxu0 0.0
  %2214 = vmatpush1.msra.mxu0 %v2178
  %2215 = vmatprep.subr.mxu0 0.0
  %2216 = vmatpush1.msra.mxu0 %v2179
  %2217 = vmatprep.subr.mxu0 0.0
  %2218 = vmatpush1.msra.mxu0 %v2180
  %2219 = vmatprep.subr.mxu0 0.0
  %2220 = vmatpush1.msra.mxu0 %v2181
  %2221 = vmatprep.subr.mxu0 0.0
  %2222 = vmatpush1.msra.mxu0 %v2182
  %2223 = vmatprep.subr.mxu0 0.0
  %2224 = vmatpush1.msra.mxu0 0.0
  %2225 = vmatprep.subr.mxu0 0.0
  %2226 = vmatpush1.msra.mxu0 0.0
  %2227 = vmatprep.subr.mxu0 0.0
  %2228 = vmatpush1.msra.mxu0 0.0
  %2229 = vmatprep.subr.mxu0 0.0
  %2230 = vmatpush1.msra.mxu0 0.0
  %2231 = vmatprep.subr.mxu0 0.0
  %2232 = vmatpush1.msra.mxu0 0.0
  %2233 = vmatprep.subr.mxu0 0.0
  %2234 = vmatpush1.msra.mxu0 0.0
  %2235 = vmatprep.subr.mxu0 0.0
  %2236 = vmatpush1.msra.mxu0 0.0
  %2237 = vmatprep.subr.mxu0 0.0
  %2238 = vmatpush1.msra.mxu0 0.0
  %2239 = vmatprep.subr.mxu0 0.0
  %2240 = vmatpush1.msra.mxu0 0.0
  %2241 = vmatprep.subr.mxu0 0.0
  %2242 = vmatpush1.msra.mxu0 0.0
  %2243 = vmatprep.subr.mxu0 0.0
  %2244 = vmatpush1.msra.mxu0 0.0
  %2245 = vmatprep.subr.mxu0 0.0
  %2246 = vmatpush1.msra.mxu0 0.0
  %2247 = vmatprep.subr.mxu0 0.0
  %2248 = vmatpush1.msra.mxu0 0.0
  %2249 = vmatprep.subr.mxu0 0.0
  %2250 = vmatpush1.msra.mxu0 0.0
  %2251 = vmatprep.mubr.f32.mxu0 %v2185
  %2252 = vmatmul.mubr.f32.gmra.mrb[0].mxu0 %v2161
  %v2253 = vpop.f32.mrb[0].mxu0
  %v2254 = vadd.f32 0.0, %v2253
  %v2255 = vpop.f32.mrb[0].mxu0
  %2256 = vdwg.mxu0
  %vm2257 = vcmask 123904
  %v2258 = vsel %vm2257, %v2254, 0.0
  %v2259 = vrot.slane %v2258, 4
  %v2260 = vadd.f32 %v2258, %v2259
  %v2261 = vrot.slane %v2260, 2
  %v2262 = vadd.f32 %v2260, %v2261
  %v2263 = vrot.slane %v2262, 1
  %v2264 = vadd.f32 %v2262, %v2263
  %v2265 = vmul.f32 %v2264, 0.055555556
  %v2266 = vmul.f32 %v2161, %v2161
  %v2267 = vmul.f32 %v2163, %v2163
  %v2269 = vsel %vm2183, %v2267, 0
  %2271 = vmatprep.subr.mxu0 0.0
  %2272 = vmatpush1.msra.mxu0 %v2165
  %2273 = vmatprep.subr.mxu0 0.0
  %2274 = vmatpush1.msra.mxu0 %v2166
  %2275 = vmatprep.subr.mxu0 0.0
  %2276 = vmatpush1.msra.mxu0 %v2167
  %2277 = vmatprep.subr.mxu0 0.0
  %2278 = vmatpush1.msra.mxu0 %v2168
  %2279 = vmatprep.subr.mxu0 0.0
  %2280 = vmatpush1.msra.mxu0 %v2169
  %2281 = vmatprep.subr.mxu0 0.0
  %2282 = vmatpush1.msra.mxu0 %v2170
  %2283 = vmatprep.subr.mxu0 0.0
  %2284 = vmatpush1.msra.mxu0 %v2171
  %2285 = vmatprep.subr.mxu0 0.0
  %2286 = vmatpush1.msra.mxu0 %v2172
  %2287 = vmatprep.subr.mxu0 0.0
  %2288 = vmatpush1.msra.mxu0 %v2173
  %2289 = vmatprep.subr.mxu0 0.0
  %2290 = vmatpush1.msra.mxu0 %v2174
  %2291 = vmatprep.subr.mxu0 0.0
  %2292 = vmatpush1.msra.mxu0 %v2175
  %2293 = vmatprep.subr.mxu0 0.0
  %2294 = vmatpush1.msra.mxu0 %v2176
  %2295 = vmatprep.subr.mxu0 0.0
  %2296 = vmatpush1.msra.mxu0 %v2177
  %2297 = vmatprep.subr.mxu0 0.0
  %2298 = vmatpush1.msra.mxu0 %v2178
  %2299 = vmatprep.subr.mxu0 0.0
  %2300 = vmatpush1.msra.mxu0 %v2179
  %2301 = vmatprep.subr.mxu0 0.0
  %2302 = vmatpush1.msra.mxu0 %v2180
  %2303 = vmatprep.subr.mxu0 0.0
  %2304 = vmatpush1.msra.mxu0 %v2181
  %2305 = vmatprep.subr.mxu0 0.0
  %2306 = vmatpush1.msra.mxu0 %v2182
  %2307 = vmatprep.subr.mxu0 0.0
  %2308 = vmatpush1.msra.mxu0 0.0
  %2309 = vmatprep.subr.mxu0 0.0
  %2310 = vmatpush1.msra.mxu0 0.0
  %2311 = vmatprep.subr.mxu0 0.0
  %2312 = vmatpush1.msra.mxu0 0.0
  %2313 = vmatprep.subr.mxu0 0.0
  %2314 = vmatpush1.msra.mxu0 0.0
  %2315 = vmatprep.subr.mxu0 0.0
  %2316 = vmatpush1.msra.mxu0 0.0
  %2317 = vmatprep.subr.mxu0 0.0
  %2318 = vmatpush1.msra.mxu0 0.0
  %2319 = vmatprep.subr.mxu0 0.0
  %2320 = vmatpush1.msra.mxu0 0.0
  %2321 = vmatprep.subr.mxu0 0.0
  %2322 = vmatpush1.msra.mxu0 0.0
  %2323 = vmatprep.subr.mxu0 0.0
  %2324 = vmatpush1.msra.mxu0 0.0
  %2325 = vmatprep.subr.mxu0 0.0
  %2326 = vmatpush1.msra.mxu0 0.0
  %2327 = vmatprep.subr.mxu0 0.0
  %2328 = vmatpush1.msra.mxu0 0.0
  %2329 = vmatprep.subr.mxu0 0.0
  %2330 = vmatpush1.msra.mxu0 0.0
  %2331 = vmatprep.subr.mxu0 0.0
  %2332 = vmatpush1.msra.mxu0 0.0
  %2333 = vmatprep.subr.mxu0 0.0
  %2334 = vmatpush1.msra.mxu0 0.0
  %2335 = vmatprep.mubr.f32.mxu0 %v2269
  %2336 = vmatmul.mubr.f32.gmra.mrb[0].mxu0 %v2266
  %v2337 = vpop.f32.mrb[0].mxu0
  %v2338 = vadd.f32 0.0, %v2337
  %v2339 = vpop.f32.mrb[0].mxu0
  %2340 = vdwg.mxu0
  %v2341 = vsel %vm2257, %v2338, 0.0
  %v2342 = vrot.slane %v2341, 4
  %v2343 = vadd.f32 %v2341, %v2342
  %v2344 = vrot.slane %v2343, 2
  %v2345 = vadd.f32 %v2343, %v2344
  %v2346 = vrot.slane %v2345, 1
  %v2347 = vadd.f32 %v2345, %v2346
  %v2348 = vmul.f32 %v2347, 0.055555556
  %v2349 = vmul.f32 %v2265, %v2265
  %v2350 = vsub.f32 %v2348, %v2349
  %v2351 = vmax.f32 %v2350, 0.0
  %v2352 = vld [vmem:[%s9] sm:$0x1]
  %v2353 = vadd.f32 %v2351, 1e-05
  %v2354 = vrsqrt.pop %v2353
  %v2355 = vmul.f32 %v2352, %v2354
  %v2356 = vld [vmem:[%s10] sm:$0x1]
  %v2357 = vmul.f32 %v2265, %v2355
  %v2358 = vsub.f32 %v2356, %v2357
  %v2359 = vld [vmem:[%s8] sm:$0xff]
  %v2360 = vld [vmem:[%s8 + $0x8] sm:$0xff]
  %v2361 = vld [vmem:[%s8 + $0x10] sm:$0xff]
  %v2362 = vld [vmem:[%s8 + $0x18] sm:$0xff]
  %v2364 = vsel %vm2183, %v2355, 0
  %2366 = vmatprep.subr.mxu0 %v2360
  %2367 = vmatpush1.msra.mxu0 %v2359
  %2368 = vmatprep.subr.mxu0 %v2362
  %2369 = vmatpush1.msra.mxu0 %v2361
  %2370 = vmatprep.subr.mxu0 0.0
  %2371 = vmatpush1.msra.mxu0 0.0
  %2372 = vmatprep.subr.mxu0 0.0
  %2373 = vmatpush1.msra.mxu0 0.0
  %2374 = vmatprep.subr.mxu0 0.0
  %2375 = vmatpush1.msra.mxu0 0.0
  %2376 = vmatprep.subr.mxu0 0.0
  %2377 = vmatpush1.msra.mxu0 0.0
  %2378 = vmatprep.subr.mxu0 0.0
  %2379 = vmatpush1.msra.mxu0 0.0
  %2380 = vmatprep.subr.mxu0 0.0
  %2381 = vmatpush1.msra.mxu0 0.0
  %2382 = vmatprep.subr.mxu0 0.0
  %2383 = vmatpush1.msra.mxu0 0.0
  %2384 = vmatprep.subr.mxu0 0.0
  %2385 = vmatpush1.msra.mxu0 0.0
  %2386 = vmatprep.subr.mxu0 0.0
  %2387 = vmatpush1.msra.mxu0 0.0
  %2388 = vmatprep.subr.mxu0 0.0
  %2389 = vmatpush1.msra.mxu0 0.0
  %2390 = vmatprep.subr.mxu0 0.0
  %2391 = vmatpush1.msra.mxu0 0.0
  %2392 = vmatprep.subr.mxu0 0.0
  %2393 = vmatpush1.msra.mxu0 0.0
  %2394 = vmatprep.subr.mxu0 0.0
  %2395 = vmatpush1.msra.mxu0 0.0
  %2396 = vmatprep.subr.mxu0 0.0
  %2397 = vmatpush1.msra.mxu0 0.0
  %2398 = vmatprep.subr.mxu0 0.0
  %2399 = vmatpush1.msra.mxu0 0.0
  %2400 = vmatprep.subr.mxu0 0.0
  %2401 = vmatpush1.msra.mxu0 0.0
  %2402 = vmatprep.subr.mxu0 0.0
  %2403 = vmatpush1.msra.mxu0 0.0
  %2404 = vmatprep.subr.mxu0 0.0
  %2405 = vmatpush1.msra.mxu0 0.0
  %2406 = vmatprep.subr.mxu0 0.0
  %2407 = vmatpush1.msra.mxu0 0.0
  %2408 = vmatprep.subr.mxu0 0.0
  %2409 = vmatpush1.msra.mxu0 0.0
  %2410 = vmatprep.subr.mxu0 0.0
  %2411 = vmatpush1.msra.mxu0 0.0
  %2412 = vmatprep.subr.mxu0 0.0
  %2413 = vmatpush1.msra.mxu0 0.0
  %2414 = vmatprep.subr.mxu0 0.0
  %2415 = vmatpush1.msra.mxu0 0.0
  %2416 = vmatprep.subr.mxu0 0.0
  %2417 = vmatpush1.msra.mxu0 0.0
  %2418 = vmatprep.subr.mxu0 0.0
  %2419 = vmatpush1.msra.mxu0 0.0
  %2420 = vmatprep.subr.mxu0 0.0
  %2421 = vmatpush1.msra.mxu0 0.0
  %2422 = vmatprep.subr.mxu0 0.0
  %2423 = vmatpush1.msra.mxu0 0.0
  %2424 = vmatprep.subr.mxu0 0.0
  %2425 = vmatpush1.msra.mxu0 0.0
  %2426 = vmatprep.subr.mxu0 0.0
  %2427 = vmatpush1.msra.mxu0 0.0
  %2428 = vmatprep.subr.mxu0 0.0
  %2429 = vmatpush1.msra.mxu0 0.0
  %2430 = vmatprep.mubr.f32.mxu0 0.0
  %2431 = vmatmul.mubr.f32.gmra.mrb[0].mxu0 %v2364
  %v2432 = vpop.f32.mrb[0].mxu0
  %v2433 = vadd.f32 0.0, %v2432
  %v2434 = vpop.f32.mrb[0].mxu0
  %v2435 = vadd.f32 0.0, %v2434
  %2436 = vdwg.mxu0
  %v2438 = vsel %vm2183, %v2358, 0
  %2440 = vmatprep.subr.mxu0 %v2360
  %2441 = vmatpush1.msra.mxu0 %v2359
  %2442 = vmatprep.subr.mxu0 %v2362
  %2443 = vmatpush1.msra.mxu0 %v2361
  %2444 = vmatprep.subr.mxu0 0.0
  %2445 = vmatpush1.msra.mxu0 0.0
  %2446 = vmatprep.subr.mxu0 0.0
  %2447 = vmatpush1.msra.mxu0 0.0
  %2448 = vmatprep.subr.mxu0 0.0
  %2449 = vmatpush1.msra.mxu0 0.0
  %2450 = vmatprep.subr.mxu0 0.0
  %2451 = vmatpush1.msra.mxu0 0.0
  %2452 = vmatprep.subr.mxu0 0.0
  %2453 = vmatpush1.msra.mxu0 0.0
  %2454 = vmatprep.subr.mxu0 0.0
  %2455 = vmatpush1.msra.mxu0 0.0
  %2456 = vmatprep.subr.mxu0 0.0
  %2457 = vmatpush1.msra.mxu0 0.0
  %2458 = vmatprep.subr.mxu0 0.0
  %2459 = vmatpush1.msra.mxu0 0.0
  %2460 = vmatprep.subr.mxu0 0.0
  %2461 = vmatpush1.msra.mxu0 0.0
  %2462 = vmatprep.subr.mxu0 0.0
  %2463 = vmatpush1.msra.mxu0 0.0
  %2464 = vmatprep.subr.mxu0 0.0
  %2465 = vmatpush1.msra.mxu0 0.0
  %2466 = vmatprep.subr.mxu0 0.0
  %2467 = vmatpush1.msra.mxu0 0.0
  %2468 = vmatprep.subr.mxu0 0.0
  %2469 = vmatpush1.msra.mxu0 0.0
  %2470 = vmatprep.subr.mxu0 0.0
  %2471 = vmatpush1.msra.mxu0 0.0
  %2472 = vmatprep.subr.mxu0 0.0
  %2473 = vmatpush1.msra.mxu0 0.0
  %2474 = vmatprep.subr.mxu0 0.0
  %2475 = vmatpush1.msra.mxu0 0.0
  %2476 = vmatprep.subr.mxu0 0.0
  %2477 = vmatpush1.msra.mxu0 0.0
  %2478 = vmatprep.subr.mxu0 0.0
  %2479 = vmatpush1.msra.mxu0 0.0
  %2480 = vmatprep.subr.mxu0 0.0
  %2481 = vmatpush1.msra.mxu0 0.0
  %2482 = vmatprep.subr.mxu0 0.0
  %2483 = vmatpush1.msra.mxu0 0.0
  %2484 = vmatprep.subr.mxu0 0.0
  %2485 = vmatpush1.msra.mxu0 0.0
  %2486 = vmatprep.subr.mxu0 0.0
  %2487 = vmatpush1.msra.mxu0 0.0
  %2488 = vmatprep.subr.mxu0 0.0
  %2489 = vmatpush1.msra.mxu0 0.0
  %2490 = vmatprep.subr.mxu0 0.0
  %2491 = vmatpush1.msra.mxu0 0.0
  %2492 = vmatprep.subr.mxu0 0.0
  %2493 = vmatpush1.msra.mxu0 0.0
  %2494 = vmatprep.subr.mxu0 0.0
  %2495 = vmatpush1.msra.mxu0 0.0
  %2496 = vmatprep.subr.mxu0 0.0
  %2497 = vmatpush1.msra.mxu0 0.0
  %2498 = vmatprep.subr.mxu0 0.0
  %2499 = vmatpush1.msra.mxu0 0.0
  %2500 = vmatprep.subr.mxu0 0.0
  %2501 = vmatpush1.msra.mxu0 0.0
  %2502 = vmatprep.subr.mxu0 0.0
  %2503 = vmatpush1.msra.mxu0 0.0
  %2504 = vmatprep.mubr.f32.mxu0 0.0
  %2505 = vmatmul.mubr.f32.gmra.mrb[0].mxu0 %v2438
  %v2506 = vpop.f32.mrb[0].mxu0
  %v2507 = vadd.f32 0.0, %v2506
  %v2508 = vpop.f32.mrb[0].mxu0
  %v2509 = vadd.f32 0.0, %v2508
  %2510 = vdwg.mxu0
  %v2511 = vlaneseq
  %v2512 = vshrl.u32 %v2511, 7
  %v2513 = vsub.s32 0, %v2512
  %v2514 = vrot.slane %v2433, %v2513
  %v2515 = vlaneseq
  %v2516 = vshrl.u32 %v2515, 7
  %v2517 = vsub.s32 0, %v2516
  %v2518 = vrot.slane %v2435, %v2517
  %v2519 = vmul.f32 %v2161, %v2514
  %v2520 = vmul.f32 %v2163, %v2518
  %v2521 = vlaneseq
  %v2522 = vshrl.u32 %v2521, 7
  %v2523 = vsub.s32 0, %v2522
  %v2524 = vrot.slane %v2507, %v2523
  %v2525 = vlaneseq
  %v2526 = vshrl.u32 %v2525, 7
  %v2527 = vsub.s32 0, %v2526
  %v2528 = vrot.slane %v2509, %v2527
  %v2529 = vadd.f32 %v2519, %v2524
  %v2530 = vadd.f32 %v2520, %v2528
  %v2531 = vmul.f32 %v2529, 0.5
  %v2532 = vmul.f32 %v2530, 0.5
  %v2533 = vmul.f32 %v2529, 0.044715
  %v2534 = vmul.f32 %v2530, 0.044715
  %v2535 = vmul.f32 %v2533, %v2529
  %v2536 = vmul.f32 %v2534, %v2530
  %v2537 = vmul.f32 %v2535, %v2529
  %v2538 = vmul.f32 %v2536, %v2530
  %v2539 = vadd.f32 %v2529, %v2537
  %v2540 = vadd.f32 %v2530, %v2538
  %v2541 = vmul.f32 %v2539, 0.7978846
  %v2542 = vmul.f32 %v2540, 0.7978846
  %v2543 = vtanh.pop %v2541
  %v2544 = vtanh.pop %v2542
  %v2545 = vadd.f32 %v2543, 1.0
  %v2546 = vadd.f32 %v2544, 1.0
  %v2547 = vmul.f32 %v2531, %v2545
  %v2548 = vmul.f32 %v2532, %v2546
  %v2549 = vld [vmem:[%s11] sm:$0xff]
  %v2550 = vld [vmem:[%s11 + $0x8] sm:$0xff]
  %v2551 = vld [vmem:[%s11 + $0x10] sm:$0xff]
  %v2552 = vld [vmem:[%s11 + $0x18] sm:$0xff]
  %v2553 = vld [vmem:[%s11 + $0x20] sm:$0xff]
  %v2554 = vld [vmem:[%s11 + $0x28] sm:$0xff]
  %v2555 = vld [vmem:[%s11 + $0x30] sm:$0xff]
  %v2556 = vld [vmem:[%s11 + $0x38] sm:$0xff]
  %v2557 = vld [vmem:[%s11 + $0x40] sm:$0xff]
  %v2558 = vld [vmem:[%s11 + $0x48] sm:$0xff]
  %v2559 = vld [vmem:[%s11 + $0x50] sm:$0xff]
  %v2560 = vld [vmem:[%s11 + $0x58] sm:$0xff]
  %v2561 = vld [vmem:[%s11 + $0x60] sm:$0xff]
  %v2562 = vld [vmem:[%s11 + $0x68] sm:$0xff]
  %v2563 = vld [vmem:[%s11 + $0x70] sm:$0xff]
  %v2564 = vld [vmem:[%s11 + $0x78] sm:$0xff]
  %v2565 = vld [vmem:[%s11 + $0x80] sm:$0xff]
  %v2566 = vld [vmem:[%s11 + $0x88] sm:$0xff]
  %v2568 = vsel %vm2183, %v2548, 0
  %2570 = vmatprep.subr.mxu0 0.0
  %2571 = vmatpush1.msra.mxu0 %v2549
  %2572 = vmatprep.subr.mxu0 0.0
  %2573 = vmatpush1.msra.mxu0 %v2550
  %2574 = vmatprep.subr.mxu0 0.0
  %2575 = vmatpush1.msra.mxu0 %v2551
  %2576 = vmatprep.subr.mxu0 0.0
  %2577 = vmatpush1.msra.mxu0 %v2552
  %2578 = vmatprep.subr.mxu0 0.0
  %2579 = vmatpush1.msra.mxu0 %v2553
  %2580 = vmatprep.subr.mxu0 0.0
  %2581 = vmatpush1.msra.mxu0 %v2554
  %2582 = vmatprep.subr.mxu0 0.0
  %2583 = vmatpush1.msra.mxu0 %v2555
  %2584 = vmatprep.subr.mxu0 0.0
  %2585 = vmatpush1.msra.mxu0 %v2556
  %2586 = vmatprep.subr.mxu0 0.0
  %2587 = vmatpush1.msra.mxu0 %v2557
  %2588 = vmatprep.subr.mxu0 0.0
  %2589 = vmatpush1.msra.mxu0 %v2558
  %2590 = vmatprep.subr.mxu0 0.0
  %2591 = vmatpush1.msra.mxu0 %v2559
  %2592 = vmatprep.subr.mxu0 0.0
  %2593 = vmatpush1.msra.mxu0 %v2560
  %2594 = vmatprep.subr.mxu0 0.0
  %2595 = vmatpush1.msra.mxu0 %v2561
  %2596 = vmatprep.subr.mxu0 0.0
  %2597 = vmatpush1.msra.mxu0 %v2562
  %2598 = vmatprep.subr.mxu0 0.0
  %2599 = vmatpush1.msra.mxu0 %v2563
  %2600 = vmatprep.subr.mxu0 0.0
  %2601 = vmatpush1.msra.mxu0 %v2564
  %2602 = vmatprep.subr.mxu0 0.0
  %2603 = vmatpush1.msra.mxu0 %v2565
  %2604 = vmatprep.subr.mxu0 0.0
  %2605 = vmatpush1.msra.mxu0 %v2566
  %2606 = vmatprep.subr.mxu0 0.0
  %2607 = vmatpush1.msra.mxu0 0.0
  %2608 = vmatprep.subr.mxu0 0.0
  %2609 = vmatpush1.msra.mxu0 0.0
  %2610 = vmatprep.subr.mxu0 0.0
  %2611 = vmatpush1.msra.mxu0 0.0
  %2612 = vmatprep.subr.mxu0 0.0
  %2613 = vmatpush1.msra.mxu0 0.0
  %2614 = vmatprep.subr.mxu0 0.0
  %2615 = vmatpush1.msra.mxu0 0.0
  %2616 = vmatprep.subr.mxu0 0.0
  %2617 = vmatpush1.msra.mxu0 0.0
  %2618 = vmatprep.subr.mxu0 0.0
  %2619 = vmatpush1.msra.mxu0 0.0
  %2620 = vmatprep.subr.mxu0 0.0
  %2621 = vmatpush1.msra.mxu0 0.0
  %2622 = vmatprep.subr.mxu0 0.0
  %2623 = vmatpush1.msra.mxu0 0.0
  %2624 = vmatprep.subr.mxu0 0.0
  %2625 = vmatpush1.msra.mxu0 0.0
  %2626 = vmatprep.subr.mxu0 0.0
  %2627 = vmatpush1.msra.mxu0 0.0
  %2628 = vmatprep.subr.mxu0 0.0
  %2629 = vmatpush1.msra.mxu0 0.0
  %2630 = vmatprep.subr.mxu0 0.0
  %2631 = vmatpush1.msra.mxu0 0.0
  %2632 = vmatprep.subr.mxu0 0.0
  %2633 = vmatpush1.msra.mxu0 0.0
  %2634 = vmatprep.mubr.f32.mxu0 %v2568
  %2635 = vmatmul.mubr.f32.gmra.mrb[0].mxu0 %v2547
  %v2636 = vpop.f32.mrb[0].mxu0
  %v2637 = vadd.f32 0.0, %v2636
  %v2638 = vpop.f32.mrb[0].mxu0
  %2639 = vdwg.mxu0
  %v2640 = vld [vmem:[%s12] sm:$0xff]
  %v2641 = vld [vmem:[%s12 + $0x8] sm:$0xff]
  %v2642 = vld [vmem:[%s12 + $0x10] sm:$0xff]
  %v2643 = vld [vmem:[%s12 + $0x18] sm:$0xff]
  %vm2644 = vcmask 261120
  %v2646 = vsel %vm2644, %v2637, 0
  %2648 = vmatprep.subr.mxu0 0.0
  %2649 = vmatpush1.msra.mxu0 %v2640
  %2650 = vmatprep.subr.mxu0 0.0
  %2651 = vmatpush1.msra.mxu0 %v2641
  %2652 = vmatprep.subr.mxu0 0.0
  %2653 = vmatpush1.msra.mxu0 %v2642
  %2654 = vmatprep.subr.mxu0 0.0
  %2655 = vmatpush1.msra.mxu0 %v2643
  %2656 = vmatprep.subr.mxu0 0.0
  %2657 = vmatpush1.msra.mxu0 0.0
  %2658 = vmatprep.subr.mxu0 0.0
  %2659 = vmatpush1.msra.mxu0 0.0
  %2660 = vmatprep.subr.mxu0 0.0
  %2661 = vmatpush1.msra.mxu0 0.0
  %2662 = vmatprep.subr.mxu0 0.0
  %2663 = vmatpush1.msra.mxu0 0.0
  %2664 = vmatprep.subr.mxu0 0.0
  %2665 = vmatpush1.msra.mxu0 0.0
  %2666 = vmatprep.subr.mxu0 0.0
  %2667 = vmatpush1.msra.mxu0 0.0
  %2668 = vmatprep.subr.mxu0 0.0
  %2669 = vmatpush1.msra.mxu0 0.0
  %2670 = vmatprep.subr.mxu0 0.0
  %2671 = vmatpush1.msra.mxu0 0.0
  %2672 = vmatprep.subr.mxu0 0.0
  %2673 = vmatpush1.msra.mxu0 0.0
  %2674 = vmatprep.subr.mxu0 0.0
  %2675 = vmatpush1.msra.mxu0 0.0
  %2676 = vmatprep.subr.mxu0 0.0
  %2677 = vmatpush1.msra.mxu0 0.0
  %2678 = vmatprep.subr.mxu0 0.0
  %2679 = vmatpush1.msra.mxu0 0.0
  %2680 = vmatprep.subr.mxu0 0.0
  %2681 = vmatpush1.msra.mxu0 0.0
  %2682 = vmatprep.subr.mxu0 0.0
  %2683 = vmatpush1.msra.mxu0 0.0
  %2684 = vmatprep.subr.mxu0 0.0
  %2685 = vmatpush1.msra.mxu0 0.0
  %2686 = vmatprep.subr.mxu0 0.0
  %2687 = vmatpush1.msra.mxu0 0.0
  %2688 = vmatprep.subr.mxu0 0.0
  %2689 = vmatpush1.msra.mxu0 0.0
  %2690 = vmatprep.subr.mxu0 0.0
  %2691 = vmatpush1.msra.mxu0 0.0
  %2692 = vmatprep.subr.mxu0 0.0
  %2693 = vmatpush1.msra.mxu0 0.0
  %2694 = vmatprep.subr.mxu0 0.0
  %2695 = vmatpush1.msra.mxu0 0.0
  %2696 = vmatprep.subr.mxu0 0.0
  %2697 = vmatpush1.msra.mxu0 0.0
  %2698 = vmatprep.subr.mxu0 0.0
  %2699 = vmatpush1.msra.mxu0 0.0
  %2700 = vmatprep.subr.mxu0 0.0
  %2701 = vmatpush1.msra.mxu0 0.0
  %2702 = vmatprep.subr.mxu0 0.0
  %2703 = vmatpush1.msra.mxu0 0.0
  %2704 = vmatprep.subr.mxu0 0.0
  %2705 = vmatpush1.msra.mxu0 0.0
  %2706 = vmatprep.subr.mxu0 0.0
  %2707 = vmatpush1.msra.mxu0 0.0
  %2708 = vmatprep.subr.mxu0 0.0
  %2709 = vmatpush1.msra.mxu0 0.0
  %2710 = vmatprep.subr.mxu0 0.0
  %2711 = vmatpush1.msra.mxu0 0.0
  %2712 = vmatprep.mubr.f32.mxu0 0.0
  %2713 = vmatmul.mubr.f32.gmra.mrb[0].mxu0 %v2646
  %v2714 = vpop.f32.mrb[0].mxu0
  %v2715 = vadd.f32 0.0, %v2714
  %v2716 = vpop.f32.mrb[0].mxu0
  %2717 = vdwg.mxu0
  %vm2718 = vcmask 254976
  %v2719 = vsel %vm2718, %v2715, 0.0
  %v2720 = vrot.slane %v2719, 4
  %v2721 = vadd.f32 %v2719, %v2720
  %v2722 = vrot.slane %v2721, 2
  %v2723 = vadd.f32 %v2721, %v2722
  %v2724 = vrot.slane %v2723, 1
  %v2725 = vadd.f32 %v2723, %v2724
  %v2726 = vmul.f32 %v2725, 0.5
  %v2727 = vmul.f32 %v2637, %v2637
  %v2729 = vsel %vm2644, %v2727, 0
  %2731 = vmatprep.subr.mxu0 0.0
  %2732 = vmatpush1.msra.mxu0 %v2640
  %2733 = vmatprep.subr.mxu0 0.0
  %2734 = vmatpush1.msra.mxu0 %v2641
  %2735 = vmatprep.subr.mxu0 0.0
  %2736 = vmatpush1.msra.mxu0 %v2642
  %2737 = vmatprep.subr.mxu0 0.0
  %2738 = vmatpush1.msra.mxu0 %v2643
  %2739 = vmatprep.subr.mxu0 0.0
  %2740 = vmatpush1.msra.mxu0 0.0
  %2741 = vmatprep.subr.mxu0 0.0
  %2742 = vmatpush1.msra.mxu0 0.0
  %2743 = vmatprep.subr.mxu0 0.0
  %2744 = vmatpush1.msra.mxu0 0.0
  %2745 = vmatprep.subr.mxu0 0.0
  %2746 = vmatpush1.msra.mxu0 0.0
  %2747 = vmatprep.subr.mxu0 0.0
  %2748 = vmatpush1.msra.mxu0 0.0
  %2749 = vmatprep.subr.mxu0 0.0
  %2750 = vmatpush1.msra.mxu0 0.0
  %2751 = vmatprep.subr.mxu0 0.0
  %2752 = vmatpush1.msra.mxu0 0.0
  %2753 = vmatprep.subr.mxu0 0.0
  %2754 = vmatpush1.msra.mxu0 0.0
  %2755 = vmatprep.subr.mxu0 0.0
  %2756 = vmatpush1.msra.mxu0 0.0
  %2757 = vmatprep.subr.mxu0 0.0
  %2758 = vmatpush1.msra.mxu0 0.0
  %2759 = vmatprep.subr.mxu0 0.0
  %2760 = vmatpush1.msra.mxu0 0.0
  %2761 = vmatprep.subr.mxu0 0.0
  %2762 = vmatpush1.msra.mxu0 0.0
  %2763 = vmatprep.subr.mxu0 0.0
  %2764 = vmatpush1.msra.mxu0 0.0
  %2765 = vmatprep.subr.mxu0 0.0
  %2766 = vmatpush1.msra.mxu0 0.0
  %2767 = vmatprep.subr.mxu0 0.0
  %2768 = vmatpush1.msra.mxu0 0.0
  %2769 = vmatprep.subr.mxu0 0.0
  %2770 = vmatpush1.msra.mxu0 0.0
  %2771 = vmatprep.subr.mxu0 0.0
  %2772 = vmatpush1.msra.mxu0 0.0
  %2773 = vmatprep.subr.mxu0 0.0
  %2774 = vmatpush1.msra.mxu0 0.0
  %2775 = vmatprep.subr.mxu0 0.0
  %2776 = vmatpush1.msra.mxu0 0.0
  %2777 = vmatprep.subr.mxu0 0.0
  %2778 = vmatpush1.msra.mxu0 0.0
  %2779 = vmatprep.subr.mxu0 0.0
  %2780 = vmatpush1.msra.mxu0 0.0
  %2781 = vmatprep.subr.mxu0 0.0
  %2782 = vmatpush1.msra.mxu0 0.0
  %2783 = vmatprep.subr.mxu0 0.0
  %2784 = vmatpush1.msra.mxu0 0.0
  %2785 = vmatprep.subr.mxu0 0.0
  %2786 = vmatpush1.msra.mxu0 0.0
  %2787 = vmatprep.subr.mxu0 0.0
  %2788 = vmatpush1.msra.mxu0 0.0
  %2789 = vmatprep.subr.mxu0 0.0
  %2790 = vmatpush1.msra.mxu0 0.0
  %2791 = vmatprep.subr.mxu0 0.0
  %2792 = vmatpush1.msra.mxu0 0.0
  %2793 = vmatprep.subr.mxu0 0.0
  %2794 = vmatpush1.msra.mxu0 0.0
  %2795 = vmatprep.mubr.f32.mxu0 0.0
  %2796 = vmatmul.mubr.f32.gmra.mrb[0].mxu0 %v2729
  %v2797 = vpop.f32.mrb[0].mxu0
  %v2798 = vadd.f32 0.0, %v2797
  %v2799 = vpop.f32.mrb[0].mxu0
  %2800 = vdwg.mxu0
  %v2801 = vsel %vm2718, %v2798, 0.0
  %v2802 = vrot.slane %v2801, 4
  %v2803 = vadd.f32 %v2801, %v2802
  %v2804 = vrot.slane %v2803, 2
  %v2805 = vadd.f32 %v2803, %v2804
  %v2806 = vrot.slane %v2805, 1
  %v2807 = vadd.f32 %v2805, %v2806
  %v2808 = vmul.f32 %v2807, 0.5
  %v2809 = vmul.f32 %v2726, %v2726
  %v2810 = vsub.f32 %v2808, %v2809
  %v2811 = vmax.f32 %v2810, 0.0
  %v2812 = vld [vmem:[%s14] sm:$0x1]
  %v2813 = vadd.f32 %v2811, 1e-05
  %v2814 = vrsqrt.pop %v2813
  %v2815 = vmul.f32 %v2812, %v2814
  %v2816 = vld [vmem:[%s15] sm:$0x1]
  %v2817 = vmul.f32 %v2726, %v2815
  %v2818 = vsub.f32 %v2816, %v2817
  %v2819 = vld [vmem:[%s13] sm:$0xff]
  %v2820 = vld [vmem:[%s13 + $0x8] sm:$0xff]
  %v2821 = vld [vmem:[%s13 + $0x10] sm:$0xff]
  %v2822 = vld [vmem:[%s13 + $0x18] sm:$0xff]
  %v2824 = vsel %vm2644, %v2815, 0
  %2826 = vmatprep.subr.mxu0 0.0
  %2827 = vmatpush1.msra.mxu0 %v2819
  %2828 = vmatprep.subr.mxu0 0.0
  %2829 = vmatpush1.msra.mxu0 %v2820
  %2830 = vmatprep.subr.mxu0 0.0
  %2831 = vmatpush1.msra.mxu0 %v2821
  %2832 = vmatprep.subr.mxu0 0.0
  %2833 = vmatpush1.msra.mxu0 %v2822
  %2834 = vmatprep.subr.mxu0 0.0
  %2835 = vmatpush1.msra.mxu0 0.0
  %2836 = vmatprep.subr.mxu0 0.0
  %2837 = vmatpush1.msra.mxu0 0.0
  %2838 = vmatprep.subr.mxu0 0.0
  %2839 = vmatpush1.msra.mxu0 0.0
  %2840 = vmatprep.subr.mxu0 0.0
  %2841 = vmatpush1.msra.mxu0 0.0
  %2842 = vmatprep.subr.mxu0 0.0
  %2843 = vmatpush1.msra.mxu0 0.0
  %2844 = vmatprep.subr.mxu0 0.0
  %2845 = vmatpush1.msra.mxu0 0.0
  %2846 = vmatprep.subr.mxu0 0.0
  %2847 = vmatpush1.msra.mxu0 0.0
  %2848 = vmatprep.subr.mxu0 0.0
  %2849 = vmatpush1.msra.mxu0 0.0
  %2850 = vmatprep.subr.mxu0 0.0
  %2851 = vmatpush1.msra.mxu0 0.0
  %2852 = vmatprep.subr.mxu0 0.0
  %2853 = vmatpush1.msra.mxu0 0.0
  %2854 = vmatprep.subr.mxu0 0.0
  %2855 = vmatpush1.msra.mxu0 0.0
  %2856 = vmatprep.subr.mxu0 0.0
  %2857 = vmatpush1.msra.mxu0 0.0
  %2858 = vmatprep.subr.mxu0 0.0
  %2859 = vmatpush1.msra.mxu0 0.0
  %2860 = vmatprep.subr.mxu0 0.0
  %2861 = vmatpush1.msra.mxu0 0.0
  %2862 = vmatprep.subr.mxu0 0.0
  %2863 = vmatpush1.msra.mxu0 0.0
  %2864 = vmatprep.subr.mxu0 0.0
  %2865 = vmatpush1.msra.mxu0 0.0
  %2866 = vmatprep.subr.mxu0 0.0
  %2867 = vmatpush1.msra.mxu0 0.0
  %2868 = vmatprep.subr.mxu0 0.0
  %2869 = vmatpush1.msra.mxu0 0.0
  %2870 = vmatprep.subr.mxu0 0.0
  %2871 = vmatpush1.msra.mxu0 0.0
  %2872 = vmatprep.subr.mxu0 0.0
  %2873 = vmatpush1.msra.mxu0 0.0
  %2874 = vmatprep.subr.mxu0 0.0
  %2875 = vmatpush1.msra.mxu0 0.0
  %2876 = vmatprep.subr.mxu0 0.0
  %2877 = vmatpush1.msra.mxu0 0.0
  %2878 = vmatprep.subr.mxu0 0.0
  %2879 = vmatpush1.msra.mxu0 0.0
  %2880 = vmatprep.subr.mxu0 0.0
  %2881 = vmatpush1.msra.mxu0 0.0
  %2882 = vmatprep.subr.mxu0 0.0
  %2883 = vmatpush1.msra.mxu0 0.0
  %2884 = vmatprep.subr.mxu0 0.0
  %2885 = vmatpush1.msra.mxu0 0.0
  %2886 = vmatprep.subr.mxu0 0.0
  %2887 = vmatpush1.msra.mxu0 0.0
  %2888 = vmatprep.subr.mxu0 0.0
  %2889 = vmatpush1.msra.mxu0 0.0
  %2890 = vmatprep.mubr.f32.mxu0 0.0
  %2891 = vmatmul.mubr.f32.gmra.mrb[0].mxu0 %v2824
  %v2892 = vpop.f32.mrb[0].mxu0
  %v2893 = vadd.f32 0.0, %v2892
  %v2894 = vpop.f32.mrb[0].mxu0
  %2895 = vdwg.mxu0
  %v2897 = vsel %vm2644, %v2818, 0
  %2899 = vmatprep.subr.mxu0 0.0
  %2900 = vmatpush1.msra.mxu0 %v2819
  %2901 = vmatprep.subr.mxu0 0.0
  %2902 = vmatpush1.msra.mxu0 %v2820
  %2903 = vmatprep.subr.mxu0 0.0
  %2904 = vmatpush1.msra.mxu0 %v2821
  %2905 = vmatprep.subr.mxu0 0.0
  %2906 = vmatpush1.msra.mxu0 %v2822
  %2907 = vmatprep.subr.mxu0 0.0
  %2908 = vmatpush1.msra.mxu0 0.0
  %2909 = vmatprep.subr.mxu0 0.0
  %2910 = vmatpush1.msra.mxu0 0.0
  %2911 = vmatprep.subr.mxu0 0.0
  %2912 = vmatpush1.msra.mxu0 0.0
  %2913 = vmatprep.subr.mxu0 0.0
  %2914 = vmatpush1.msra.mxu0 0.0
  %2915 = vmatprep.subr.mxu0 0.0
  %2916 = vmatpush1.msra.mxu0 0.0
  %2917 = vmatprep.subr.mxu0 0.0
  %2918 = vmatpush1.msra.mxu0 0.0
  %2919 = vmatprep.subr.mxu0 0.0
  %2920 = vmatpush1.msra.mxu0 0.0
  %2921 = vmatprep.subr.mxu0 0.0
  %2922 = vmatpush1.msra.mxu0 0.0
  %2923 = vmatprep.subr.mxu0 0.0
  %2924 = vmatpush1.msra.mxu0 0.0
  %2925 = vmatprep.subr.mxu0 0.0
  %2926 = vmatpush1.msra.mxu0 0.0
  %2927 = vmatprep.subr.mxu0 0.0
  %2928 = vmatpush1.msra.mxu0 0.0
  %2929 = vmatprep.subr.mxu0 0.0
  %2930 = vmatpush1.msra.mxu0 0.0
  %2931 = vmatprep.subr.mxu0 0.0
  %2932 = vmatpush1.msra.mxu0 0.0
  %2933 = vmatprep.subr.mxu0 0.0
  %2934 = vmatpush1.msra.mxu0 0.0
  %2935 = vmatprep.subr.mxu0 0.0
  %2936 = vmatpush1.msra.mxu0 0.0
  %2937 = vmatprep.subr.mxu0 0.0
  %2938 = vmatpush1.msra.mxu0 0.0
  %2939 = vmatprep.subr.mxu0 0.0
  %2940 = vmatpush1.msra.mxu0 0.0
  %2941 = vmatprep.subr.mxu0 0.0
  %2942 = vmatpush1.msra.mxu0 0.0
  %2943 = vmatprep.subr.mxu0 0.0
  %2944 = vmatpush1.msra.mxu0 0.0
  %2945 = vmatprep.subr.mxu0 0.0
  %2946 = vmatpush1.msra.mxu0 0.0
  %2947 = vmatprep.subr.mxu0 0.0
  %2948 = vmatpush1.msra.mxu0 0.0
  %2949 = vmatprep.subr.mxu0 0.0
  %2950 = vmatpush1.msra.mxu0 0.0
  %2951 = vmatprep.subr.mxu0 0.0
  %2952 = vmatpush1.msra.mxu0 0.0
  %2953 = vmatprep.subr.mxu0 0.0
  %2954 = vmatpush1.msra.mxu0 0.0
  %2955 = vmatprep.subr.mxu0 0.0
  %2956 = vmatpush1.msra.mxu0 0.0
  %2957 = vmatprep.subr.mxu0 0.0
  %2958 = vmatpush1.msra.mxu0 0.0
  %2959 = vmatprep.subr.mxu0 0.0
  %2960 = vmatpush1.msra.mxu0 0.0
  %2961 = vmatprep.subr.mxu0 0.0
  %2962 = vmatpush1.msra.mxu0 0.0
  %2963 = vmatprep.mubr.f32.mxu0 0.0
  %2964 = vmatmul.mubr.f32.gmra.mrb[0].mxu0 %v2897
  %v2965 = vpop.f32.mrb[0].mxu0
  %v2966 = vadd.f32 0.0, %v2965
  %v2967 = vpop.f32.mrb[0].mxu0
  %2968 = vdwg.mxu0
  %v2969 = vlaneseq
  %v2970 = vshrl.u32 %v2969, 7
  %v2971 = vsub.s32 0, %v2970
  %v2972 = vrot.slane %v2893, %v2971
  %v2973 = vmul.f32 %v2637, %v2972
  %v2974 = vlaneseq
  %v2975 = vshrl.u32 %v2974, 7
  %v2976 = vsub.s32 0, %v2975
  %v2977 = vrot.slane %v2966, %v2976
  %v2978 = vadd.f32 %v2973, %v2977
  %v2979 = vmul.f32 %v2978, 0.5
  %v2980 = vmul.f32 %v2978, 0.044715
  %v2981 = vmul.f32 %v2980, %v2978
  %v2982 = vmul.f32 %v2981, %v2978
  %v2983 = vadd.f32 %v2978, %v2982
  %v2984 = vmul.f32 %v2983, 0.7978846
  %v2985 = vtanh.pop %v2984
  %v2986 = vadd.f32 %v2985, 1.0
  %v2987 = vmul.f32 %v2979, %v2986
  %v2988 = vld [vmem:[%s16] sm:$0xff]
  %v2989 = vld [vmem:[%s16 + $0x8] sm:$0xff]
  %v2990 = vld [vmem:[%s16 + $0x10] sm:$0xff]
  %v2991 = vld [vmem:[%s16 + $0x18] sm:$0xff]
  %v2992 = vld [vmem:[%s17] sm:$0x1]
  %v2994 = vlaneseq
  %v2995 = vshrl.u32 %v2994, 7
  %v2996 = vsub.s32 0, %v2995
  %v2997 = vrot.slane %v2992, %v2996
  %v3000 = vsel %vm2644, %v2987, 0
  %3002 = vmatprep.subr.mxu0 0.0
  %3003 = vmatpush1.msra.mxu0 %v2988
  %3004 = vmatprep.subr.mxu0 0.0
  %3005 = vmatpush1.msra.mxu0 %v2989
  %3006 = vmatprep.subr.mxu0 0.0
  %3007 = vmatpush1.msra.mxu0 %v2990
  %3008 = vmatprep.subr.mxu0 0.0
  %3009 = vmatpush1.msra.mxu0 %v2991
  %3010 = vmatprep.subr.mxu0 0.0
  %3011 = vmatpush1.msra.mxu0 0.0
  %3012 = vmatprep.subr.mxu0 0.0
  %3013 = vmatpush1.msra.mxu0 0.0
  %3014 = vmatprep.subr.mxu0 0.0
  %3015 = vmatpush1.msra.mxu0 0.0
  %3016 = vmatprep.subr.mxu0 0.0
  %3017 = vmatpush1.msra.mxu0 0.0
  %3018 = vmatprep.subr.mxu0 0.0
  %3019 = vmatpush1.msra.mxu0 0.0
  %3020 = vmatprep.subr.mxu0 0.0
  %3021 = vmatpush1.msra.mxu0 0.0
  %3022 = vmatprep.subr.mxu0 0.0
  %3023 = vmatpush1.msra.mxu0 0.0
  %3024 = vmatprep.subr.mxu0 0.0
  %3025 = vmatpush1.msra.mxu0 0.0
  %3026 = vmatprep.subr.mxu0 0.0
  %3027 = vmatpush1.msra.mxu0 0.0
  %3028 = vmatprep.subr.mxu0 0.0
  %3029 = vmatpush1.msra.mxu0 0.0
  %3030 = vmatprep.subr.mxu0 0.0
  %3031 = vmatpush1.msra.mxu0 0.0
  %3032 = vmatprep.subr.mxu0 0.0
  %3033 = vmatpush1.msra.mxu0 0.0
  %3034 = vmatprep.subr.mxu0 0.0
  %3035 = vmatpush1.msra.mxu0 0.0
  %3036 = vmatprep.subr.mxu0 0.0
  %3037 = vmatpush1.msra.mxu0 0.0
  %3038 = vmatprep.subr.mxu0 0.0
  %3039 = vmatpush1.msra.mxu0 0.0
  %3040 = vmatprep.subr.mxu0 0.0
  %3041 = vmatpush1.msra.mxu0 0.0
  %3042 = vmatprep.subr.mxu0 0.0
  %3043 = vmatpush1.msra.mxu0 0.0
  %3044 = vmatprep.subr.mxu0 0.0
  %3045 = vmatpush1.msra.mxu0 0.0
  %3046 = vmatprep.subr.mxu0 0.0
  %3047 = vmatpush1.msra.mxu0 0.0
  %3048 = vmatprep.subr.mxu0 0.0
  %3049 = vmatpush1.msra.mxu0 0.0
  %3050 = vmatprep.subr.mxu0 0.0
  %3051 = vmatpush1.msra.mxu0 0.0
  %3052 = vmatprep.subr.mxu0 0.0
  %3053 = vmatpush1.msra.mxu0 0.0
  %3054 = vmatprep.subr.mxu0 0.0
  %3055 = vmatpush1.msra.mxu0 0.0
  %3056 = vmatprep.subr.mxu0 0.0
  %3057 = vmatpush1.msra.mxu0 0.0
  %3058 = vmatprep.subr.mxu0 0.0
  %3059 = vmatpush1.msra.mxu0 0.0
  %3060 = vmatprep.subr.mxu0 0.0
  %3061 = vmatpush1.msra.mxu0 0.0
  %3062 = vmatprep.subr.mxu0 0.0
  %3063 = vmatpush1.msra.mxu0 0.0
  %3064 = vmatprep.subr.mxu0 0.0
  %3065 = vmatpush1.msra.mxu0 0.0
  %3066 = vmatprep.mubr.f32.mxu0 0.0
  %3067 = vmatmul.mubr.f32.gmra.mrb[0].mxu0 %v3000
  %v3068 = vpop.f32.mrb[0].mxu0
  %v3069 = vadd.f32 %v2997, %v3068
  %v3070 = vpop.f32.mrb[0].mxu0
  %3071 = vdwg.mxu0
  %v3072 = vmul.f32 %v3069, 0.5
  %v3073 = vmul.f32 %v3069, 0.044715
  %v3074 = vmul.f32 %v3073, %v3069
  %v3075 = vmul.f32 %v3074, %v3069
  %v3076 = vadd.f32 %v3069, %v3075
  %v3077 = vmul.f32 %v3076, 0.7978846
  %v3078 = vtanh.pop %v3077
  %v3079 = vadd.f32 %v3078, 1.0
  %v3080 = vmul.f32 %v3072, %v3079
  %3081 = vst.msk [vmem:[%s18] sm:$0x3] %vm2257, %v3080
  // Predicated region
  $region74: #{forward.1} parent=0 // pred_check
    _
  $region75: #{forward.1} parent=0 // pred_check_branch
    %3083 = sbr.rel (0) target = $region77
  $region76: #{forward.1} parent=0 // pred_region
    _
  $region77: #{forward.1} parent=0 // pred_fallthru
    _
  // Predicated region
  $region78: #{forward.1} parent=0 // pred_check
    _
  $region79: #{forward.1} parent=0 // pred_check_branch
    %3085 = sbr.rel (0) target = $region81
  $region80: #{forward.1} parent=0 // pred_region
    _
  $region81: #{forward.1} parent=0 // pred_fallthru
    _

</llo_original>
